<compile_context>
chip_gen: v7x
topology: tpu7x:2x2x1
jax: 0.10.0
libtpu: 0.0.40
codegen_flags: <defaults>
</compile_context>

<pallas_src>
import functools

import jax
import jax.numpy as jnp
from jax.experimental import pallas as pl
from jax.experimental.pallas import tpu as pltpu


def _round_up(n, m):
    return ((n + m - 1) // m) * m


def _loss_kernel(x_ref, wd_ref, bd_ref, y_ref, o_ref, *, tile_b, batch, mask_last):
    # x_ref : (tile_b, 128)          features (native dtype)
    # wd_ref: (128, 1)               (W[1,:] - W[0,:]) / r  (in x dtype)
    # bd_ref: (1, 1) f32  [SMEM]     (b[1] - b[0]) / r
    # y_ref : (tile_b//128, 128)     labels, lane-dense row-major over the tile
    # o_ref : (1, 1, 128) f32        per-tile, per-lane partial sums
    rows_per = tile_b // 128

    # Logit difference on the MXU: softmax(z, -1)[:, 1] == sigmoid(d)
    d = jnp.dot(x_ref[...], wd_ref[...], preferred_element_type=jnp.float32)  # (tile_b, 1)
    d = d + bd_ref[0, 0]

    # Lane-densify: (tile_b, 1) -> (tile_b//128, 128), row-major, so element
    # (sub, lane) corresponds to row sub*128 + lane of this tile.
    d = d.reshape(rows_per, 128)

    y = y_ref[...].astype(jnp.float32)         # values in {0, 1}
    sgn = 1.0 - 2.0 * y                        # +1 when y=0, -1 when y=1

    # BCE in logit form with PyTorch's clamp(log p, min=-100):
    #   y=1: -log(p1)   = softplus(-d);  y=0: -log(1-p1) = softplus(d)
    t = jnp.log1p(jnp.exp(-jnp.abs(d)))
    per_ex = jnp.minimum(jnp.maximum(sgn * d, 0.0) + t, 100.0)

    if mask_last:
        i = pl.program_id(0)
        last = pl.num_programs(0) - 1

        @pl.when(i == last)
        def _():
            sub = jax.lax.broadcasted_iota(jnp.int32, (rows_per, 128), 0)
            lane = jax.lax.broadcasted_iota(jnp.int32, (rows_per, 128), 1)
            rows = i * tile_b + sub * 128 + lane
            masked = jnp.where(rows < batch, per_ex, 0.0)
            o_ref[...] = jnp.sum(masked, axis=0).reshape(1, 1, 128)

        @pl.when(i != last)
        def _():
            o_ref[...] = jnp.sum(per_ex, axis=0).reshape(1, 1, 128)
    else:
        o_ref[...] = jnp.sum(per_ex, axis=0).reshape(1, 1, 128)


def loss_forward(x, labels, weight, bias, r=1.0, tile_b=16384):
    """Forward pass of `lossF`.

    x:      (B, 1, 128) features (any float dtype; not upcast in the wrapper)
    labels: (B,)        {0,1} targets
    weight: (2, 128)    PyTorch nn.Linear(128, 2) weight
    bias:   (2,)        PyTorch bias
    r:      temperature (folded into weight/bias; zero in-kernel cost)
    """
    xs = jnp.squeeze(x, axis=1)                                      # (B, 128)
    B, H = xs.shape

    w = weight.astype(jnp.float32)
    b = bias.astype(jnp.float32)
    r = jnp.asarray(r, jnp.float32)
    w_diff = ((w[1, :] - w[0, :]) / r).reshape(H, 1).astype(xs.dtype)  # (128, 1)
    b_diff = ((b[1] - b[0]) / r).reshape(1, 1)                         # (1, 1) f32 -> SMEM

    # Tile is a multiple of 128 (dense reshape); for multi-tile grids it is a
    # multiple of 1024 so the (tile//128, 128) label block is sublane-aligned.
    tile_b = max(1024, _round_up(int(tile_b), 1024))
    tile = _round_up(B, 128) if B <= tile_b else tile_b
    num_tiles = pl.cdiv(B, tile)
    mask_last = (B % tile) != 0

    # Lane-dense labels: pad to num_tiles*tile rows, reshape row-major so label
    # (sub, lane) matches feature row sub*128 + lane within its tile.
    y = labels.reshape(B)
    if not jnp.issubdtype(y.dtype, jnp.floating):
        y = y.astype(jnp.float32)
    pad = num_tiles * tile - B
    if pad:
        y = jnp.pad(y, (0, pad))
    y_dense = y.reshape(num_tiles * (tile // 128), 128)

    kernel = functools.partial(_loss_kernel, tile_b=tile, batch=B,
                               mask_last=mask_last)

    # Double-buffered x tile dominates VMEM; add headroom for labels, the
    # reshape round-trip and small operands. Stays well under v7x's 64 MiB.
    vmem_limit = (2 * tile * H * xs.dtype.itemsize
                  + 2 * tile * y_dense.dtype.itemsize + (2 << 20))
    vmem_limit = int(max(vmem_limit, 8 << 20))

    partials = pl.pallas_call(
        kernel,
        out_shape=jax.ShapeDtypeStruct((num_tiles, 1, 128), jnp.float32),
        grid=(num_tiles,),
        in_specs=[
            pl.BlockSpec((tile, H), lambda i: (i, 0)),               # x tile
            pl.BlockSpec((H, 1), lambda i: (0, 0)),                  # w_diff (resident)
            pl.BlockSpec(memory_space=pltpu.MemorySpace.SMEM),       # b_diff scalar
            pl.BlockSpec((tile // 128, 128), lambda i: (i, 0)),      # labels (dense)
        ],
        out_specs=pl.BlockSpec((1, 1, 128), lambda i: (i, 0, 0)),    # per-tile partials
        compiler_params=pltpu.CompilerParams(
            dimension_semantics=("parallel",),                       # 2-TC sharding on v7x
            vmem_limit_bytes=vmem_limit,
        ),
    )(xs, w_diff, b_diff, y_dense)

    return jnp.sum(partials) / jnp.float32(B)


def _reference(x, labels, weight, bias, r=1.0):
    xs = jnp.squeeze(x, axis=1).astype(jnp.float32)
    z = (xs @ weight.astype(jnp.float32).T + bias.astype(jnp.float32)) / r
    p1 = jax.nn.softmax(z, axis=-1)[:, 1]
    y = labels.astype(jnp.float32)
    lp = jnp.maximum(jnp.log(p1), -100.0)
    l1p = jnp.maximum(jnp.log(1.0 - p1), -100.0)
    return jnp.mean(-(y * lp + (1.0 - y) * l1p))


if __name__ == "__main__":
    key = jax.random.PRNGKey(0)
    k_x, k_w, k_b, k_y, k_x2, k_y2 = jax.random.split(key, 6)

    B, H, C = 8, 128, 2  # H=128 fixed by nn.Linear(128, 2)

    # nn.Linear(128, 2)-style init: uniform(-1/sqrt(in), 1/sqrt(in))
    bound = 1.0 / jnp.sqrt(jnp.float32(H))
    weight = jax.random.uniform(k_w, (C, H), jnp.float32, -bound, bound)  # (out, in)
    bias = jax.random.uniform(k_b, (C,), jnp.float32, -bound, bound)

    x = jax.random.normal(k_x, (B, 1, H), jnp.float32)                # (B, 1, 128)
    labels = jax.random.bernoulli(k_y, 0.5, (B,)).astype(jnp.float32)

    # r = 1 (module default), single (padded) tile
    loss = loss_forward(x, labels, weight, bias, r=1.0)
    jax.block_until_ready(loss)
    ref = _reference(x, labels, weight, bias, r=1.0)
    assert jnp.allclose(loss, ref, rtol=1e-5, atol=1e-5), (loss, ref)

    # non-trivial temperature exercises the folded 1/r path
    loss_r = loss_forward(x, labels, weight, bias, r=2.5)
    jax.block_until_ready(loss_r)
    ref_r = _reference(x, labels, weight, bias, r=2.5)
    assert jnp.allclose(loss_r, ref_r, rtol=1e-5, atol=1e-5), (loss_r, ref_r)

    # multi-tile grid with a masked partial last tile (B % tile != 0)
    B2 = 2500
    x2 = jax.random.normal(k_x2, (B2, 1, H), jnp.float32)
    labels2 = jax.random.bernoulli(k_y2, 0.5, (B2,)).astype(jnp.float32)
    loss2 = loss_forward(x2, labels2, weight, bias, r=1.0, tile_b=1024)
    jax.block_until_ready(loss2)
    ref2 = _reference(x2, labels2, weight, bias, r=1.0)
    assert jnp.allclose(loss2, ref2, rtol=1e-4, atol=1e-5), (loss2, ref2)

    print("KERNEL_OK")
</pallas_src>

<mosaic_0001>
module attributes {stable_mosaic.version = 11 : i64} {
  func.func @_loss_kernel(%arg0: i32, %arg1: memref<128x128xf32, #tpu.memory_space<vmem>>, %arg2: memref<128x1xf32, #tpu.memory_space<vmem>>, %arg3: memref<1x1xf32, #tpu.memory_space<smem>>, %arg4: memref<1x128xf32, #tpu.memory_space<vmem>>, %arg5: memref<1x1x128xf32, #tpu.memory_space<vmem>>) attributes {dimension_semantics = [#tpu.dimension_semantics<parallel>], iteration_bounds = array<i64: 1>, scalar_prefetch = 0 : i64, scratch_operands = 0 : i64, tpu.core_type = #tpu.core_type<tc>, window_params = [{transform_indices = @transform_0, window_bounds = array<i64: 128, 128>}, {pipeline_mode = #tpu.pipeline_mode<synchronous>, transform_indices = @transform_1, window_bounds = array<i64: 128, 1>}, {transform_indices = @transform_2, window_bounds = array<i64: 1, 1>}, {transform_indices = @transform_3, window_bounds = array<i64: 1, 128>}, {transform_indices = @transform_4, window_bounds = array<i64: 1, 1, 128>}]} {
    %c0 = arith.constant 0 : index
    %c0_0 = arith.constant 0 : index
    %0 = vector.load %arg1[%c0, %c0_0] : memref<128x128xf32, #tpu.memory_space<vmem>>, vector<128x128xf32>
    %c0_1 = arith.constant 0 : index
    %c0_2 = arith.constant 0 : index
    %1 = vector.load %arg2[%c0_1, %c0_2] : memref<128x1xf32, #tpu.memory_space<vmem>>, vector<128x1xf32>
    %cst = arith.constant dense<0.000000e+00> : vector<128x1xf32>
    %2 = tpu.matmul %0, %1, %cst {dimension_numbers = #tpu.dot_dimension_numbers<[1], [0], [0], [1], [0, 0, 1, 1], [], []>} : vector<128x128xf32>, vector<128x1xf32>, vector<128x1xf32> -> vector<128x1xf32>
    %c0_3 = arith.constant 0 : index
    %c0_4 = arith.constant 0 : index
    %3 = memref.load %arg3[%c0_3, %c0_4] : memref<1x1xf32, #tpu.memory_space<smem>>
    %4 = vector.broadcast %3 : f32 to vector<128x1xf32>
    %5 = arith.addf %2, %4 : vector<128x1xf32>
    %6 = vector.shape_cast %5 : vector<128x1xf32> to vector<1x128xf32>
    %c0_5 = arith.constant 0 : index
    %c0_6 = arith.constant 0 : index
    %7 = vector.load %arg4[%c0_5, %c0_6] : memref<1x128xf32, #tpu.memory_space<vmem>>, vector<1x128xf32>
    %cst_7 = arith.constant 2.000000e+00 : f32
    %8 = vector.broadcast %cst_7 : f32 to vector<1x128xf32>
    %9 = arith.mulf %8, %7 : vector<1x128xf32>
    %cst_8 = arith.constant 1.000000e+00 : f32
    %10 = vector.broadcast %cst_8 : f32 to vector<1x128xf32>
    %11 = arith.subf %10, %9 : vector<1x128xf32>
    %12 = math.absf %6 : vector<1x128xf32>
    %cst_9 = arith.constant 0.000000e+00 : f32
    %13 = vector.broadcast %cst_9 : f32 to vector<1x128xf32>
    %14 = arith.subf %13, %12 : vector<1x128xf32>
    %15 = math.exp %14 : vector<1x128xf32>
    %16 = math.log1p %15 : vector<1x128xf32>
    %17 = arith.mulf %11, %6 : vector<1x128xf32>
    %cst_10 = arith.constant 0.000000e+00 : f32
    %18 = vector.broadcast %cst_10 : f32 to vector<1x128xf32>
    %19 = arith.maximumf %17, %18 : vector<1x128xf32>
    %20 = arith.addf %19, %16 : vector<1x128xf32>
    %cst_11 = arith.constant 1.000000e+02 : f32
    %21 = vector.broadcast %cst_11 : f32 to vector<1x128xf32>
    %22 = arith.minimumf %20, %21 : vector<1x128xf32>
    %c0_i32 = arith.constant 0 : i32
    %23 = arith.cmpi eq, %arg0, %c0_i32 : i32
    %24 = arith.extui %23 : i1 to i32
    %c0_i32_12 = arith.constant 0 : i32
    %25 = arith.cmpi ne, %24, %c0_i32_12 : i32
    scf.if %25 {
      %29 = tpu.iota {dimensions = array<i32: 0>} : vector<1x128xi32>
      %30 = tpu.iota {dimensions = array<i32: 1>} : vector<1x128xi32>
      %c128_i32 = arith.constant 128 : i32
      %31 = arith.muli %arg0, %c128_i32 : i32
      %c128_i32_15 = arith.constant 128 : i32
      %32 = vector.broadcast %c128_i32_15 : i32 to vector<1x128xi32>
      %33 = arith.muli %29, %32 : vector<1x128xi32>
      %34 = vector.broadcast %31 : i32 to vector<1x128xi32>
      %35 = arith.addi %34, %33 : vector<1x128xi32>
      %36 = arith.addi %35, %30 : vector<1x128xi32>
      %c8_i32 = arith.constant 8 : i32
      %37 = vector.broadcast %c8_i32 : i32 to vector<1x128xi32>
      %38 = arith.cmpi slt, %36, %37 : vector<1x128xi32>
      %cst_16 = arith.constant 0.000000e+00 : f32
      %39 = vector.broadcast %cst_16 : f32 to vector<1x128xf32>
      %40 = arith.select %38, %22, %39 : vector<1x128xi1>, vector<1x128xf32>
      %cst_17 = arith.constant dense<0.000000e+00> : vector<128xf32>
      %41 = vector.multi_reduction <add>, %40, %cst_17 [0] : vector<1x128xf32> to vector<128xf32>
      %42 = vector.shape_cast %41 : vector<128xf32> to vector<1x1x128xf32>
      %c0_18 = arith.constant 0 : index
      %c0_19 = arith.constant 0 : index
      %c0_20 = arith.constant 0 : index
      %43 = vector.load %arg5[%c0_18, %c0_19, %c0_20] : memref<1x1x128xf32, #tpu.memory_space<vmem>>, vector<1x1x128xf32>
      tpu.vector_store %arg5[%c0_18, %c0_19, %c0_20], %42 {strides = array<i32>} : memref<1x1x128xf32, #tpu.memory_space<vmem>>, vector<1x1x128xf32>,
    } else {
    }
    %c0_i32_13 = arith.constant 0 : i32
    %26 = arith.cmpi ne, %arg0, %c0_i32_13 : i32
    %27 = arith.extui %26 : i1 to i32
    %c0_i32_14 = arith.constant 0 : i32
    %28 = arith.cmpi ne, %27, %c0_i32_14 : i32
    scf.if %28 {
      %cst_15 = arith.constant dense<0.000000e+00> : vector<128xf32>
      %29 = vector.multi_reduction <add>, %22, %cst_15 [0] : vector<1x128xf32> to vector<128xf32>
      %30 = vector.shape_cast %29 : vector<128xf32> to vector<1x1x128xf32>
      %c0_16 = arith.constant 0 : index
      %c0_17 = arith.constant 0 : index
      %c0_18 = arith.constant 0 : index
      %31 = vector.load %arg5[%c0_16, %c0_17, %c0_18] : memref<1x1x128xf32, #tpu.memory_space<vmem>>, vector<1x1x128xf32>
      tpu.vector_store %arg5[%c0_16, %c0_17, %c0_18], %30 {strides = array<i32>} : memref<1x1x128xf32, #tpu.memory_space<vmem>>, vector<1x1x128xf32>,
    } else {
    }
    return
  }
  func.func @transform_0(%arg0: i32) -> (i32, i32) {
    %c0_i32 = arith.constant 0 : i32
    %c0_i32_0 = arith.constant 0 : i32
    return %arg0, %c0_i32 : i32, i32
  }
  func.func @transform_1(%arg0: i32) -> (i32, i32) {
    %c0_i32 = arith.constant 0 : i32
    %c0_i32_0 = arith.constant 0 : i32
    %c0_i32_1 = arith.constant 0 : i32
    return %c0_i32, %c0_i32_0 : i32, i32
  }
  func.func @transform_2(%arg0: i32) -> (i32, i32) {
    %c0_i32 = arith.constant 0 : i32
    %c0_i32_0 = arith.constant 0 : i32
    %c0_i32_1 = arith.constant 0 : i32
    return %c0_i32, %c0_i32_0 : i32, i32
  }
  func.func @transform_3(%arg0: i32) -> (i32, i32) {
    %c0_i32 = arith.constant 0 : i32
    %c0_i32_0 = arith.constant 0 : i32
    return %arg0, %c0_i32 : i32, i32
  }
  func.func @transform_4(%arg0: i32) -> (i32, i32, i32) {
    %c0_i32 = arith.constant 0 : i32
    %c0_i32_0 = arith.constant 0 : i32
    %c0_i32_1 = arith.constant 0 : i32
    return %arg0, %c0_i32, %c0_i32_0 : i32, i32, i32
  }
}

</mosaic_0001>

<llo_original>
// kernel: tpu_custom_call.1
$region0: #{tpu_custom_call.1}
  #allocation0 [shape = 'u32[]', space=smem, size = 0x4, offset = 0x4, fixed_abs, tag = 'smem constant byte address 0x4 - core index']
  #allocation1 [shape = 'u32[144,128]{1,0:T(1,128)}', space=vmem, size = 0x12000, scoped, tag = 'internal scratch']
  #allocation2 [shape = 'f32[1,1]{1,0:T(1,128)S(6)}', space=smem, size = 0x200, scoped, tag = 'scoped memory for tpu_custom_call.1']
  %s0 = inlined_call_operand.vmem [shape: f32[8,128], index: 0, kind: input, shape index: {}]
  %s1 = inlined_call_operand.vmem [shape: f32[128,1], index: 1, kind: input, shape index: {}]
  %s2 = inlined_call_operand.<no memory space> [shape: f32[1,1], index: 2, kind: input, shape index: {}]
  %s3 = inlined_call_operand.vmem [shape: f32[1,128], index: 3, kind: input, shape index: {}]
  %s4 = inlined_call_operand.hbm [shape: f32[1,1,128], index: 4, kind: output, shape index: {}]
  %s5 = sld [smem:[#allocation0]]
  $region34: #{tpu_custom_call.1} parent=0
    _
  %s7 = ssub.s32 1, %s5
  %s8 = scalar_select 0, %s7, %s5
  %9 = sst [smem:[#allocation2]] %s2
  $region1: #{tpu_custom_call.1} parent=0
    #allocation3 [shape = 'u8[512]{0}', space=vmem, size = 0x400, scoped, tag = 'output window, operand 0, single buffered']
    #allocation4 [shape = 's32[1]{0}', space=sflag, size = 0x4, scoped, tag = 'scoped memory for tpu_custom_call.1']
    %10 = vsyncpa [#allocation4], 0
    // Predicated region
    $region2: #{tpu_custom_call.1} parent=1 // pred_check
      _
    $region3: #{tpu_custom_call.1} parent=1 // pred_check_branch
      %12 = sbr.rel (0) target = $region5
    $region4: #{tpu_custom_call.1} parent=1 // pred_region
      _
    $region5: #{tpu_custom_call.1} parent=1 // pred_fallthru
      _
    // Predicated region
    $region6: #{tpu_custom_call.1} parent=1 // pred_check
      _
    $region7: #{tpu_custom_call.1} parent=1 // pred_check_branch
      %14 = sbr.rel (0) target = $region9
    $region8: #{tpu_custom_call.1} parent=1 // pred_region
      _
    $region9: #{tpu_custom_call.1} parent=1 // pred_fallthru
      _
    // Predicated region
    $region10: #{tpu_custom_call.1} parent=1 // pred_check
      _
    $region11: #{tpu_custom_call.1} parent=1 // pred_check_branch
      %16 = sbr.rel (0) target = $region13
    $region12: #{tpu_custom_call.1} parent=1 // pred_region
      _
    $region13: #{tpu_custom_call.1} parent=1 // pred_fallthru
      _
    // Predicated region
    $region14: #{tpu_custom_call.1} parent=1 // pred_check
      _
    $region15: #{tpu_custom_call.1} parent=1 // pred_check_branch
      %18 = sbr.rel (0) target = $region17
    $region16: #{tpu_custom_call.1} parent=1 // pred_region
      _
    $region17: #{tpu_custom_call.1} parent=1 // pred_fallthru
      _
    %v19 = vld [vmem:[%s0] sm:$0xff]
    %v20 = vld [vmem:[%s0 + $0x8] sm:$0xff]
    %v21 = vld [vmem:[%s0 + $0x10] sm:$0xff]
    %v22 = vld [vmem:[%s0 + $0x18] sm:$0xff]
    %v23 = vld [vmem:[%s0 + $0x20] sm:$0xff]
    %v24 = vld [vmem:[%s0 + $0x28] sm:$0xff]
    %v25 = vld [vmem:[%s0 + $0x30] sm:$0xff]
    %v26 = vld [vmem:[%s0 + $0x38] sm:$0xff]
    %v27 = vld [vmem:[%s0 + $0x40] sm:$0xff]
    %v28 = vld [vmem:[%s0 + $0x48] sm:$0xff]
    %v29 = vld [vmem:[%s0 + $0x50] sm:$0xff]
    %v30 = vld [vmem:[%s0 + $0x58] sm:$0xff]
    %v31 = vld [vmem:[%s0 + $0x60] sm:$0xff]
    %v32 = vld [vmem:[%s0 + $0x68] sm:$0xff]
    %v33 = vld [vmem:[%s0 + $0x70] sm:$0xff]
    %v34 = vld [vmem:[%s0 + $0x78] sm:$0xff]
    %v35 = vld [vmem:[%s1] sm:$0xff]
    %v36 = vld [vmem:[%s1 + $0x8] sm:$0xff]
    %v37 = vld [vmem:[%s1 + $0x10] sm:$0xff]
    %v38 = vld [vmem:[%s1 + $0x18] sm:$0xff]
    %v39 = vld [vmem:[%s1 + $0x20] sm:$0xff]
    %v40 = vld [vmem:[%s1 + $0x28] sm:$0xff]
    %v41 = vld [vmem:[%s1 + $0x30] sm:$0xff]
    %v42 = vld [vmem:[%s1 + $0x38] sm:$0xff]
    %v43 = vld [vmem:[%s1 + $0x40] sm:$0xff]
    %v44 = vld [vmem:[%s1 + $0x48] sm:$0xff]
    %v45 = vld [vmem:[%s1 + $0x50] sm:$0xff]
    %v46 = vld [vmem:[%s1 + $0x58] sm:$0xff]
    %v47 = vld [vmem:[%s1 + $0x60] sm:$0xff]
    %v48 = vld [vmem:[%s1 + $0x68] sm:$0xff]
    %v49 = vld [vmem:[%s1 + $0x70] sm:$0xff]
    %v50 = vld [vmem:[%s1 + $0x78] sm:$0xff]
    %s51 = sld [smem:[#allocation2]]
    %v52 = vstv %s51
    %53 = vmatprep.subr.mxu0 0.0
    %54 = vmatpush1.msra.mxu0 %v35
    %55 = vmatprep.subr.mxu0 0.0
    %56 = vmatpush1.msra.mxu0 %v36
    %57 = vmatprep.subr.mxu0 0.0
    %58 = vmatpush1.msra.mxu0 %v37
    %59 = vmatprep.subr.mxu0 0.0
    %60 = vmatpush1.msra.mxu0 %v38
    %61 = vmatprep.subr.mxu0 0.0
    %62 = vmatpush1.msra.mxu0 %v39
    %63 = vmatprep.subr.mxu0 0.0
    %64 = vmatpush1.msra.mxu0 %v40
    %65 = vmatprep.subr.mxu0 0.0
    %66 = vmatpush1.msra.mxu0 %v41
    %67 = vmatprep.subr.mxu0 0.0
    %68 = vmatpush1.msra.mxu0 %v42
    %69 = vmatprep.subr.mxu0 0.0
    %70 = vmatpush1.msra.mxu0 %v43
    %71 = vmatprep.subr.mxu0 0.0
    %72 = vmatpush1.msra.mxu0 %v44
    %73 = vmatprep.subr.mxu0 0.0
    %74 = vmatpush1.msra.mxu0 %v45
    %75 = vmatprep.subr.mxu0 0.0
    %76 = vmatpush1.msra.mxu0 %v46
    %77 = vmatprep.subr.mxu0 0.0
    %78 = vmatpush1.msra.mxu0 %v47
    %79 = vmatprep.subr.mxu0 0.0
    %80 = vmatpush1.msra.mxu0 %v48
    %81 = vmatprep.subr.mxu0 0.0
    %82 = vmatpush1.msra.mxu0 %v49
    %83 = vmatprep.subr.mxu0 0.0
    %84 = vmatpush1.msra.mxu0 %v50
    %85 = vmatprep.subr.mxu0 0.0
    %86 = vmatpush1.msra.mxu0 0.0
    %87 = vmatprep.subr.mxu0 0.0
    %88 = vmatpush1.msra.mxu0 0.0
    %89 = vmatprep.subr.mxu0 0.0
    %90 = vmatpush1.msra.mxu0 0.0
    %91 = vmatprep.subr.mxu0 0.0
    %92 = vmatpush1.msra.mxu0 0.0
    %93 = vmatprep.subr.mxu0 0.0
    %94 = vmatpush1.msra.mxu0 0.0
    %95 = vmatprep.subr.mxu0 0.0
    %96 = vmatpush1.msra.mxu0 0.0
    %97 = vmatprep.subr.mxu0 0.0
    %98 = vmatpush1.msra.mxu0 0.0
    %99 = vmatprep.subr.mxu0 0.0
    %100 = vmatpush1.msra.mxu0 0.0
    %101 = vmatprep.subr.mxu0 0.0
    %102 = vmatpush1.msra.mxu0 0.0
    %103 = vmatprep.subr.mxu0 0.0
    %104 = vmatpush1.msra.mxu0 0.0
    %105 = vmatprep.subr.mxu0 0.0
    %106 = vmatpush1.msra.mxu0 0.0
    %107 = vmatprep.subr.mxu0 0.0
    %108 = vmatpush1.msra.mxu0 0.0
    %109 = vmatprep.subr.mxu0 0.0
    %110 = vmatpush1.msra.mxu0 0.0
    %111 = vmatprep.subr.mxu0 0.0
    %112 = vmatpush1.msra.mxu0 0.0
    %113 = vmatprep.subr.mxu0 0.0
    %114 = vmatpush1.msra.mxu0 0.0
    %115 = vmatprep.subr.mxu0 0.0
    %116 = vmatpush1.msra.mxu0 0.0
    %117 = vmatprep.mubr.f32.mxu0 0.0
    %118 = vmatmul.mubr.f32.gmra.mrb[0].mxu0 %v19
    %v119 = vpop.f32.mrb[0].mxu0
    %v120 = vadd.f32 %v52, %v119
    %v121 = vpop.f32.mrb[0].mxu0
    %122 = vmatprep.mubr.f32.mxu0 0.0
    %123 = vmatmul.mubr.f32.gmra.mrb[0].mxu0 %v20
    %v124 = vpop.f32.mrb[0].mxu0
    %v125 = vadd.f32 %v52, %v124
    %v126 = vpop.f32.mrb[0].mxu0
    %127 = vmatprep.mubr.f32.mxu0 0.0
    %128 = vmatmul.mubr.f32.gmra.mrb[0].mxu0 %v21
    %v129 = vpop.f32.mrb[0].mxu0
    %v130 = vadd.f32 %v52, %v129
    %v131 = vpop.f32.mrb[0].mxu0
    %132 = vmatprep.mubr.f32.mxu0 0.0
    %133 = vmatmul.mubr.f32.gmra.mrb[0].mxu0 %v22
    %v134 = vpop.f32.mrb[0].mxu0
    %v135 = vadd.f32 %v52, %v134
    %v136 = vpop.f32.mrb[0].mxu0
    %137 = vmatprep.mubr.f32.mxu0 0.0
    %138 = vmatmul.mubr.f32.gmra.mrb[0].mxu0 %v23
    %v139 = vpop.f32.mrb[0].mxu0
    %v140 = vadd.f32 %v52, %v139
    %v141 = vpop.f32.mrb[0].mxu0
    %142 = vmatprep.mubr.f32.mxu0 0.0
    %143 = vmatmul.mubr.f32.gmra.mrb[0].mxu0 %v24
    %v144 = vpop.f32.mrb[0].mxu0
    %v145 = vadd.f32 %v52, %v144
    %v146 = vpop.f32.mrb[0].mxu0
    %147 = vmatprep.mubr.f32.mxu0 0.0
    %148 = vmatmul.mubr.f32.gmra.mrb[0].mxu0 %v25
    %v149 = vpop.f32.mrb[0].mxu0
    %v150 = vadd.f32 %v52, %v149
    %v151 = vpop.f32.mrb[0].mxu0
    %152 = vmatprep.mubr.f32.mxu0 0.0
    %153 = vmatmul.mubr.f32.gmra.mrb[0].mxu0 %v26
    %v154 = vpop.f32.mrb[0].mxu0
    %v155 = vadd.f32 %v52, %v154
    %v156 = vpop.f32.mrb[0].mxu0
    %157 = vmatprep.mubr.f32.mxu0 0.0
    %158 = vmatmul.mubr.f32.gmra.mrb[0].mxu0 %v27
    %v159 = vpop.f32.mrb[0].mxu0
    %v160 = vadd.f32 %v52, %v159
    %v161 = vpop.f32.mrb[0].mxu0
    %162 = vmatprep.mubr.f32.mxu0 0.0
    %163 = vmatmul.mubr.f32.gmra.mrb[0].mxu0 %v28
    %v164 = vpop.f32.mrb[0].mxu0
    %v165 = vadd.f32 %v52, %v164
    %v166 = vpop.f32.mrb[0].mxu0
    %167 = vmatprep.mubr.f32.mxu0 0.0
    %168 = vmatmul.mubr.f32.gmra.mrb[0].mxu0 %v29
    %v169 = vpop.f32.mrb[0].mxu0
    %v170 = vadd.f32 %v52, %v169
    %v171 = vpop.f32.mrb[0].mxu0
    %172 = vmatprep.mubr.f32.mxu0 0.0
    %173 = vmatmul.mubr.f32.gmra.mrb[0].mxu0 %v30
    %v174 = vpop.f32.mrb[0].mxu0
    %v175 = vadd.f32 %v52, %v174
    %v176 = vpop.f32.mrb[0].mxu0
    %177 = vmatprep.mubr.f32.mxu0 0.0
    %178 = vmatmul.mubr.f32.gmra.mrb[0].mxu0 %v31
    %v179 = vpop.f32.mrb[0].mxu0
    %v180 = vadd.f32 %v52, %v179
    %v181 = vpop.f32.mrb[0].mxu0
    %182 = vmatprep.mubr.f32.mxu0 0.0
    %183 = vmatmul.mubr.f32.gmra.mrb[0].mxu0 %v32
    %v184 = vpop.f32.mrb[0].mxu0
    %v185 = vadd.f32 %v52, %v184
    %v186 = vpop.f32.mrb[0].mxu0
    %187 = vmatprep.mubr.f32.mxu0 0.0
    %188 = vmatmul.mubr.f32.gmra.mrb[0].mxu0 %v33
    %v189 = vpop.f32.mrb[0].mxu0
    %v190 = vadd.f32 %v52, %v189
    %v191 = vpop.f32.mrb[0].mxu0
    %192 = vmatprep.mubr.f32.mxu0 0.0
    %193 = vmatmul.mubr.f32.gmra.mrb[0].mxu0 %v34
    %v194 = vpop.f32.mrb[0].mxu0
    %v195 = vadd.f32 %v52, %v194
    %v196 = vpop.f32.mrb[0].mxu0
    %197 = vdwg.mxu0
    %v198 = vld [vmem:[%s3] sm:$0x1]
    %v199 = vmul.f32 %v198, 2.0
    %v200 = vsub.f32 1.0, %v199
    %v201 = vand.u32 2147483647, %v120
    %v202 = vand.u32 2147483647, %v125
    %v203 = vand.u32 2147483647, %v130
    %v204 = vand.u32 2147483647, %v135
    %v205 = vand.u32 2147483647, %v140
    %v206 = vand.u32 2147483647, %v145
    %v207 = vand.u32 2147483647, %v150
    %v208 = vand.u32 2147483647, %v155
    %v209 = vand.u32 2147483647, %v160
    %v210 = vand.u32 2147483647, %v165
    %v211 = vand.u32 2147483647, %v170
    %v212 = vand.u32 2147483647, %v175
    %v213 = vand.u32 2147483647, %v180
    %v214 = vand.u32 2147483647, %v185
    %v215 = vand.u32 2147483647, %v190
    %v216 = vand.u32 2147483647, %v195
    %v217 = vsub.f32 0.0, %v201
    %v218 = vsub.f32 0.0, %v202
    %v219 = vsub.f32 0.0, %v203
    %v220 = vsub.f32 0.0, %v204
    %v221 = vsub.f32 0.0, %v205
    %v222 = vsub.f32 0.0, %v206
    %v223 = vsub.f32 0.0, %v207
    %v224 = vsub.f32 0.0, %v208
    %v225 = vsub.f32 0.0, %v209
    %v226 = vsub.f32 0.0, %v210
    %v227 = vsub.f32 0.0, %v211
    %v228 = vsub.f32 0.0, %v212
    %v229 = vsub.f32 0.0, %v213
    %v230 = vsub.f32 0.0, %v214
    %v231 = vsub.f32 0.0, %v215
    %v232 = vsub.f32 0.0, %v216
    %v233 = vmul.f32 %v217, 1.442695
    %v234 = vpow.pop %v233
    %v235 = vmul.f32 %v218, 1.442695
    %v236 = vpow.pop %v235
    %v237 = vmul.f32 %v219, 1.442695
    %v238 = vpow.pop %v237
    %v239 = vmul.f32 %v220, 1.442695
    %v240 = vpow.pop %v239
    %v241 = vmul.f32 %v221, 1.442695
    %v242 = vpow.pop %v241
    %v243 = vmul.f32 %v222, 1.442695
    %v244 = vpow.pop %v243
    %v245 = vmul.f32 %v223, 1.442695
    %v246 = vpow.pop %v245
    %v247 = vmul.f32 %v224, 1.442695
    %v248 = vpow.pop %v247
    %v249 = vmul.f32 %v225, 1.442695
    %v250 = vpow.pop %v249
    %v251 = vmul.f32 %v226, 1.442695
    %v252 = vpow.pop %v251
    %v253 = vmul.f32 %v227, 1.442695
    %v254 = vpow.pop %v253
    %v255 = vmul.f32 %v228, 1.442695
    %v256 = vpow.pop %v255
    %v257 = vmul.f32 %v229, 1.442695
    %v258 = vpow.pop %v257
    %v259 = vmul.f32 %v230, 1.442695
    %v260 = vpow.pop %v259
    %v261 = vmul.f32 %v231, 1.442695
    %v262 = vpow.pop %v261
    %v263 = vmul.f32 %v232, 1.442695
    %v264 = vpow.pop %v263
    %v265 = vadd.f32 %v234, 1.0
    %v266 = vlog2.pop %v265
    %v267 = vmul.f32 %v266, 0.6931472
    %v268 = vmul.f32 -0.5, %v234
    %v269 = vadd.f32 %v268, 1.0
    %v270 = vmul.f32 %v269, %v234
    %v271 = vand.u32 2147483647, %v234
    %vm272 = vcmp.lt.f32.partialorder %v271, 0.0004427343
    %v273 = vsel %vm272, %v270, %v267
    %v274 = vadd.f32 %v236, 1.0
    %v275 = vlog2.pop %v274
    %v276 = vmul.f32 %v275, 0.6931472
    %v277 = vmul.f32 -0.5, %v236
    %v278 = vadd.f32 %v277, 1.0
    %v279 = vmul.f32 %v278, %v236
    %v280 = vand.u32 2147483647, %v236
    %vm281 = vcmp.lt.f32.partialorder %v280, 0.0004427343
    %v282 = vsel %vm281, %v279, %v276
    %v283 = vadd.f32 %v238, 1.0
    %v284 = vlog2.pop %v283
    %v285 = vmul.f32 %v284, 0.6931472
    %v286 = vmul.f32 -0.5, %v238
    %v287 = vadd.f32 %v286, 1.0
    %v288 = vmul.f32 %v287, %v238
    %v289 = vand.u32 2147483647, %v238
    %vm290 = vcmp.lt.f32.partialorder %v289, 0.0004427343
    %v291 = vsel %vm290, %v288, %v285
    %v292 = vadd.f32 %v240, 1.0
    %v293 = vlog2.pop %v292
    %v294 = vmul.f32 %v293, 0.6931472
    %v295 = vmul.f32 -0.5, %v240
    %v296 = vadd.f32 %v295, 1.0
    %v297 = vmul.f32 %v296, %v240
    %v298 = vand.u32 2147483647, %v240
    %vm299 = vcmp.lt.f32.partialorder %v298, 0.0004427343
    %v300 = vsel %vm299, %v297, %v294
    %v301 = vadd.f32 %v242, 1.0
    %v302 = vlog2.pop %v301
    %v303 = vmul.f32 %v302, 0.6931472
    %v304 = vmul.f32 -0.5, %v242
    %v305 = vadd.f32 %v304, 1.0
    %v306 = vmul.f32 %v305, %v242
    %v307 = vand.u32 2147483647, %v242
    %vm308 = vcmp.lt.f32.partialorder %v307, 0.0004427343
    %v309 = vsel %vm308, %v306, %v303
    %v310 = vadd.f32 %v244, 1.0
    %v311 = vlog2.pop %v310
    %v312 = vmul.f32 %v311, 0.6931472
    %v313 = vmul.f32 -0.5, %v244
    %v314 = vadd.f32 %v313, 1.0
    %v315 = vmul.f32 %v314, %v244
    %v316 = vand.u32 2147483647, %v244
    %vm317 = vcmp.lt.f32.partialorder %v316, 0.0004427343
    %v318 = vsel %vm317, %v315, %v312
    %v319 = vadd.f32 %v246, 1.0
    %v320 = vlog2.pop %v319
    %v321 = vmul.f32 %v320, 0.6931472
    %v322 = vmul.f32 -0.5, %v246
    %v323 = vadd.f32 %v322, 1.0
    %v324 = vmul.f32 %v323, %v246
    %v325 = vand.u32 2147483647, %v246
    %vm326 = vcmp.lt.f32.partialorder %v325, 0.0004427343
    %v327 = vsel %vm326, %v324, %v321
    %v328 = vadd.f32 %v248, 1.0
    %v329 = vlog2.pop %v328
    %v330 = vmul.f32 %v329, 0.6931472
    %v331 = vmul.f32 -0.5, %v248
    %v332 = vadd.f32 %v331, 1.0
    %v333 = vmul.f32 %v332, %v248
    %v334 = vand.u32 2147483647, %v248
    %vm335 = vcmp.lt.f32.partialorder %v334, 0.0004427343
    %v336 = vsel %vm335, %v333, %v330
    %v337 = vadd.f32 %v250, 1.0
    %v338 = vlog2.pop %v337
    %v339 = vmul.f32 %v338, 0.6931472
    %v340 = vmul.f32 -0.5, %v250
    %v341 = vadd.f32 %v340, 1.0
    %v342 = vmul.f32 %v341, %v250
    %v343 = vand.u32 2147483647, %v250
    %vm344 = vcmp.lt.f32.partialorder %v343, 0.0004427343
    %v345 = vsel %vm344, %v342, %v339
    %v346 = vadd.f32 %v252, 1.0
    %v347 = vlog2.pop %v346
    %v348 = vmul.f32 %v347, 0.6931472
    %v349 = vmul.f32 -0.5, %v252
    %v350 = vadd.f32 %v349, 1.0
    %v351 = vmul.f32 %v350, %v252
    %v352 = vand.u32 2147483647, %v252
    %vm353 = vcmp.lt.f32.partialorder %v352, 0.0004427343
    %v354 = vsel %vm353, %v351, %v348
    %v355 = vadd.f32 %v254, 1.0
    %v356 = vlog2.pop %v355
    %v357 = vmul.f32 %v356, 0.6931472
    %v358 = vmul.f32 -0.5, %v254
    %v359 = vadd.f32 %v358, 1.0
    %v360 = vmul.f32 %v359, %v254
    %v361 = vand.u32 2147483647, %v254
    %vm362 = vcmp.lt.f32.partialorder %v361, 0.0004427343
    %v363 = vsel %vm362, %v360, %v357
    %v364 = vadd.f32 %v256, 1.0
    %v365 = vlog2.pop %v364
    %v366 = vmul.f32 %v365, 0.6931472
    %v367 = vmul.f32 -0.5, %v256
    %v368 = vadd.f32 %v367, 1.0
    %v369 = vmul.f32 %v368, %v256
    %v370 = vand.u32 2147483647, %v256
    %vm371 = vcmp.lt.f32.partialorder %v370, 0.0004427343
    %v372 = vsel %vm371, %v369, %v366
    %v373 = vadd.f32 %v258, 1.0
    %v374 = vlog2.pop %v373
    %v375 = vmul.f32 %v374, 0.6931472
    %v376 = vmul.f32 -0.5, %v258
    %v377 = vadd.f32 %v376, 1.0
    %v378 = vmul.f32 %v377, %v258
    %v379 = vand.u32 2147483647, %v258
    %vm380 = vcmp.lt.f32.partialorder %v379, 0.0004427343
    %v381 = vsel %vm380, %v378, %v375
    %v382 = vadd.f32 %v260, 1.0
    %v383 = vlog2.pop %v382
    %v384 = vmul.f32 %v383, 0.6931472
    %v385 = vmul.f32 -0.5, %v260
    %v386 = vadd.f32 %v385, 1.0
    %v387 = vmul.f32 %v386, %v260
    %v388 = vand.u32 2147483647, %v260
    %vm389 = vcmp.lt.f32.partialorder %v388, 0.0004427343
    %v390 = vsel %vm389, %v387, %v384
    %v391 = vadd.f32 %v262, 1.0
    %v392 = vlog2.pop %v391
    %v393 = vmul.f32 %v392, 0.6931472
    %v394 = vmul.f32 -0.5, %v262
    %v395 = vadd.f32 %v394, 1.0
    %v396 = vmul.f32 %v395, %v262
    %v397 = vand.u32 2147483647, %v262
    %vm398 = vcmp.lt.f32.partialorder %v397, 0.0004427343
    %v399 = vsel %vm398, %v396, %v393
    %v400 = vadd.f32 %v264, 1.0
    %v401 = vlog2.pop %v400
    %v402 = vmul.f32 %v401, 0.6931472
    %v403 = vmul.f32 -0.5, %v264
    %v404 = vadd.f32 %v403, 1.0
    %v405 = vmul.f32 %v404, %v264
    %v406 = vand.u32 2147483647, %v264
    %vm407 = vcmp.lt.f32.partialorder %v406, 0.0004427343
    %v408 = vsel %vm407, %v405, %v402
    %v425 = vcombine.high %v120, %v120
    %v427 = vunpack.c.l.s4 1966171168
    %v428 = vunpack.c.0.s8 %v427
    %v429 = vlaneseq
    %v430 = vshrl.u32 %v429, 7
    %v431 = vsub.s32 %v428, %v430
    %v432 = vrot.slane %v120, %v431
    %v434 = vunpack.c.l.s4 1966171168
    %v435 = vunpack.c.0.s8 %v434
    %v436 = vlaneseq
    %v437 = vshrl.u32 %v436, 7
    %v438 = vsub.s32 %v435, %v437
    %v439 = vrot.slane %v425, %v438
    %v440 = vcombine.high %v432, %v432
    %v441 = vcombine.high %v439, %v439
    %v443 = vunpack.c.l.s4 1966171168
    %v444 = vunpack.c.0.s8 %v443
    %v445 = vlaneseq
    %v446 = vshrl.u32 %v445, 7
    %v447 = vsub.s32 %v444, %v446
    %v448 = vrot.slane %v432, %v447
    %v450 = vunpack.c.l.s4 1966171168
    %v451 = vunpack.c.0.s8 %v450
    %v452 = vlaneseq
    %v453 = vshrl.u32 %v452, 7
    %v454 = vsub.s32 %v451, %v453
    %v455 = vrot.slane %v439, %v454
    %v457 = vunpack.c.l.s4 1966171168
    %v458 = vunpack.c.0.s8 %v457
    %v459 = vlaneseq
    %v460 = vshrl.u32 %v459, 7
    %v461 = vsub.s32 %v458, %v460
    %v462 = vrot.slane %v440, %v461
    %v464 = vunpack.c.l.s4 1966171168
    %v465 = vunpack.c.0.s8 %v464
    %v466 = vlaneseq
    %v467 = vshrl.u32 %v466, 7
    %v468 = vsub.s32 %v465, %v467
    %v469 = vrot.slane %v441, %v468
    %v470 = vcombine.high %v448, %v448
    %v471 = vcombine.high %v455, %v455
    %v472 = vcombine.high %v462, %v462
    %v473 = vcombine.high %v469, %v469
    %v474 = vcombine.high %v125, %v125
    %v476 = vunpack.c.l.s4 1966171168
    %v477 = vunpack.c.0.s8 %v476
    %v478 = vlaneseq
    %v479 = vshrl.u32 %v478, 7
    %v480 = vsub.s32 %v477, %v479
    %v481 = vrot.slane %v125, %v480
    %v483 = vunpack.c.l.s4 1966171168
    %v484 = vunpack.c.0.s8 %v483
    %v485 = vlaneseq
    %v486 = vshrl.u32 %v485, 7
    %v487 = vsub.s32 %v484, %v486
    %v488 = vrot.slane %v474, %v487
    %v489 = vcombine.high %v481, %v481
    %v490 = vcombine.high %v488, %v488
    %v492 = vunpack.c.l.s4 1966171168
    %v493 = vunpack.c.0.s8 %v492
    %v494 = vlaneseq
    %v495 = vshrl.u32 %v494, 7
    %v496 = vsub.s32 %v493, %v495
    %v497 = vrot.slane %v481, %v496
    %v499 = vunpack.c.l.s4 1966171168
    %v500 = vunpack.c.0.s8 %v499
    %v501 = vlaneseq
    %v502 = vshrl.u32 %v501, 7
    %v503 = vsub.s32 %v500, %v502
    %v504 = vrot.slane %v488, %v503
    %v506 = vunpack.c.l.s4 1966171168
    %v507 = vunpack.c.0.s8 %v506
    %v508 = vlaneseq
    %v509 = vshrl.u32 %v508, 7
    %v510 = vsub.s32 %v507, %v509
    %v511 = vrot.slane %v489, %v510
    %v513 = vunpack.c.l.s4 1966171168
    %v514 = vunpack.c.0.s8 %v513
    %v515 = vlaneseq
    %v516 = vshrl.u32 %v515, 7
    %v517 = vsub.s32 %v514, %v516
    %v518 = vrot.slane %v490, %v517
    %v519 = vcombine.high %v497, %v497
    %v520 = vcombine.high %v504, %v504
    %v521 = vcombine.high %v511, %v511
    %v522 = vcombine.high %v518, %v518
    %v523 = vcombine.high %v130, %v130
    %v525 = vunpack.c.l.s4 1966171168
    %v526 = vunpack.c.0.s8 %v525
    %v527 = vlaneseq
    %v528 = vshrl.u32 %v527, 7
    %v529 = vsub.s32 %v526, %v528
    %v530 = vrot.slane %v130, %v529
    %v532 = vunpack.c.l.s4 1966171168
    %v533 = vunpack.c.0.s8 %v532
    %v534 = vlaneseq
    %v535 = vshrl.u32 %v534, 7
    %v536 = vsub.s32 %v533, %v535
    %v537 = vrot.slane %v523, %v536
    %v538 = vcombine.high %v530, %v530
    %v539 = vcombine.high %v537, %v537
    %v541 = vunpack.c.l.s4 1966171168
    %v542 = vunpack.c.0.s8 %v541
    %v543 = vlaneseq
    %v544 = vshrl.u32 %v543, 7
    %v545 = vsub.s32 %v542, %v544
    %v546 = vrot.slane %v530, %v545
    %v548 = vunpack.c.l.s4 1966171168
    %v549 = vunpack.c.0.s8 %v548
    %v550 = vlaneseq
    %v551 = vshrl.u32 %v550, 7
    %v552 = vsub.s32 %v549, %v551
    %v553 = vrot.slane %v537, %v552
    %v555 = vunpack.c.l.s4 1966171168
    %v556 = vunpack.c.0.s8 %v555
    %v557 = vlaneseq
    %v558 = vshrl.u32 %v557, 7
    %v559 = vsub.s32 %v556, %v558
    %v560 = vrot.slane %v538, %v559
    %v562 = vunpack.c.l.s4 1966171168
    %v563 = vunpack.c.0.s8 %v562
    %v564 = vlaneseq
    %v565 = vshrl.u32 %v564, 7
    %v566 = vsub.s32 %v563, %v565
    %v567 = vrot.slane %v539, %v566
    %v568 = vcombine.high %v546, %v546
    %v569 = vcombine.high %v553, %v553
    %v570 = vcombine.high %v560, %v560
    %v571 = vcombine.high %v567, %v567
    %v572 = vcombine.high %v135, %v135
    %v574 = vunpack.c.l.s4 1966171168
    %v575 = vunpack.c.0.s8 %v574
    %v576 = vlaneseq
    %v577 = vshrl.u32 %v576, 7
    %v578 = vsub.s32 %v575, %v577
    %v579 = vrot.slane %v135, %v578
    %v581 = vunpack.c.l.s4 1966171168
    %v582 = vunpack.c.0.s8 %v581
    %v583 = vlaneseq
    %v584 = vshrl.u32 %v583, 7
    %v585 = vsub.s32 %v582, %v584
    %v586 = vrot.slane %v572, %v585
    %v587 = vcombine.high %v579, %v579
    %v588 = vcombine.high %v586, %v586
    %v590 = vunpack.c.l.s4 1966171168
    %v591 = vunpack.c.0.s8 %v590
    %v592 = vlaneseq
    %v593 = vshrl.u32 %v592, 7
    %v594 = vsub.s32 %v591, %v593
    %v595 = vrot.slane %v579, %v594
    %v597 = vunpack.c.l.s4 1966171168
    %v598 = vunpack.c.0.s8 %v597
    %v599 = vlaneseq
    %v600 = vshrl.u32 %v599, 7
    %v601 = vsub.s32 %v598, %v600
    %v602 = vrot.slane %v586, %v601
    %v604 = vunpack.c.l.s4 1966171168
    %v605 = vunpack.c.0.s8 %v604
    %v606 = vlaneseq
    %v607 = vshrl.u32 %v606, 7
    %v608 = vsub.s32 %v605, %v607
    %v609 = vrot.slane %v587, %v608
    %v611 = vunpack.c.l.s4 1966171168
    %v612 = vunpack.c.0.s8 %v611
    %v613 = vlaneseq
    %v614 = vshrl.u32 %v613, 7
    %v615 = vsub.s32 %v612, %v614
    %v616 = vrot.slane %v588, %v615
    %v617 = vcombine.high %v595, %v595
    %v618 = vcombine.high %v602, %v602
    %v619 = vcombine.high %v609, %v609
    %v620 = vcombine.high %v616, %v616
    %v621 = vcombine.high %v140, %v140
    %v623 = vunpack.c.l.s4 1966171168
    %v624 = vunpack.c.0.s8 %v623
    %v625 = vlaneseq
    %v626 = vshrl.u32 %v625, 7
    %v627 = vsub.s32 %v624, %v626
    %v628 = vrot.slane %v140, %v627
    %v630 = vunpack.c.l.s4 1966171168
    %v631 = vunpack.c.0.s8 %v630
    %v632 = vlaneseq
    %v633 = vshrl.u32 %v632, 7
    %v634 = vsub.s32 %v631, %v633
    %v635 = vrot.slane %v621, %v634
    %v636 = vcombine.high %v628, %v628
    %v637 = vcombine.high %v635, %v635
    %v639 = vunpack.c.l.s4 1966171168
    %v640 = vunpack.c.0.s8 %v639
    %v641 = vlaneseq
    %v642 = vshrl.u32 %v641, 7
    %v643 = vsub.s32 %v640, %v642
    %v644 = vrot.slane %v628, %v643
    %v646 = vunpack.c.l.s4 1966171168
    %v647 = vunpack.c.0.s8 %v646
    %v648 = vlaneseq
    %v649 = vshrl.u32 %v648, 7
    %v650 = vsub.s32 %v647, %v649
    %v651 = vrot.slane %v635, %v650
    %v653 = vunpack.c.l.s4 1966171168
    %v654 = vunpack.c.0.s8 %v653
    %v655 = vlaneseq
    %v656 = vshrl.u32 %v655, 7
    %v657 = vsub.s32 %v654, %v656
    %v658 = vrot.slane %v636, %v657
    %v660 = vunpack.c.l.s4 1966171168
    %v661 = vunpack.c.0.s8 %v660
    %v662 = vlaneseq
    %v663 = vshrl.u32 %v662, 7
    %v664 = vsub.s32 %v661, %v663
    %v665 = vrot.slane %v637, %v664
    %v666 = vcombine.high %v644, %v644
    %v667 = vcombine.high %v651, %v651
    %v668 = vcombine.high %v658, %v658
    %v669 = vcombine.high %v665, %v665
    %v670 = vcombine.high %v145, %v145
    %v672 = vunpack.c.l.s4 1966171168
    %v673 = vunpack.c.0.s8 %v672
    %v674 = vlaneseq
    %v675 = vshrl.u32 %v674, 7
    %v676 = vsub.s32 %v673, %v675
    %v677 = vrot.slane %v145, %v676
    %v679 = vunpack.c.l.s4 1966171168
    %v680 = vunpack.c.0.s8 %v679
    %v681 = vlaneseq
    %v682 = vshrl.u32 %v681, 7
    %v683 = vsub.s32 %v680, %v682
    %v684 = vrot.slane %v670, %v683
    %v685 = vcombine.high %v677, %v677
    %v686 = vcombine.high %v684, %v684
    %v688 = vunpack.c.l.s4 1966171168
    %v689 = vunpack.c.0.s8 %v688
    %v690 = vlaneseq
    %v691 = vshrl.u32 %v690, 7
    %v692 = vsub.s32 %v689, %v691
    %v693 = vrot.slane %v677, %v692
    %v695 = vunpack.c.l.s4 1966171168
    %v696 = vunpack.c.0.s8 %v695
    %v697 = vlaneseq
    %v698 = vshrl.u32 %v697, 7
    %v699 = vsub.s32 %v696, %v698
    %v700 = vrot.slane %v684, %v699
    %v702 = vunpack.c.l.s4 1966171168
    %v703 = vunpack.c.0.s8 %v702
    %v704 = vlaneseq
    %v705 = vshrl.u32 %v704, 7
    %v706 = vsub.s32 %v703, %v705
    %v707 = vrot.slane %v685, %v706
    %v709 = vunpack.c.l.s4 1966171168
    %v710 = vunpack.c.0.s8 %v709
    %v711 = vlaneseq
    %v712 = vshrl.u32 %v711, 7
    %v713 = vsub.s32 %v710, %v712
    %v714 = vrot.slane %v686, %v713
    %v715 = vcombine.high %v693, %v693
    %v716 = vcombine.high %v700, %v700
    %v717 = vcombine.high %v707, %v707
    %v718 = vcombine.high %v714, %v714
    %v719 = vcombine.high %v150, %v150
    %v721 = vunpack.c.l.s4 1966171168
    %v722 = vunpack.c.0.s8 %v721
    %v723 = vlaneseq
    %v724 = vshrl.u32 %v723, 7
    %v725 = vsub.s32 %v722, %v724
    %v726 = vrot.slane %v150, %v725
    %v728 = vunpack.c.l.s4 1966171168
    %v729 = vunpack.c.0.s8 %v728
    %v730 = vlaneseq
    %v731 = vshrl.u32 %v730, 7
    %v732 = vsub.s32 %v729, %v731
    %v733 = vrot.slane %v719, %v732
    %v734 = vcombine.high %v726, %v726
    %v735 = vcombine.high %v733, %v733
    %v737 = vunpack.c.l.s4 1966171168
    %v738 = vunpack.c.0.s8 %v737
    %v739 = vlaneseq
    %v740 = vshrl.u32 %v739, 7
    %v741 = vsub.s32 %v738, %v740
    %v742 = vrot.slane %v726, %v741
    %v744 = vunpack.c.l.s4 1966171168
    %v745 = vunpack.c.0.s8 %v744
    %v746 = vlaneseq
    %v747 = vshrl.u32 %v746, 7
    %v748 = vsub.s32 %v745, %v747
    %v749 = vrot.slane %v733, %v748
    %v751 = vunpack.c.l.s4 1966171168
    %v752 = vunpack.c.0.s8 %v751
    %v753 = vlaneseq
    %v754 = vshrl.u32 %v753, 7
    %v755 = vsub.s32 %v752, %v754
    %v756 = vrot.slane %v734, %v755
    %v758 = vunpack.c.l.s4 1966171168
    %v759 = vunpack.c.0.s8 %v758
    %v760 = vlaneseq
    %v761 = vshrl.u32 %v760, 7
    %v762 = vsub.s32 %v759, %v761
    %v763 = vrot.slane %v735, %v762
    %v764 = vcombine.high %v742, %v742
    %v765 = vcombine.high %v749, %v749
    %v766 = vcombine.high %v756, %v756
    %v767 = vcombine.high %v763, %v763
    %v768 = vcombine.high %v155, %v155
    %v770 = vunpack.c.l.s4 1966171168
    %v771 = vunpack.c.0.s8 %v770
    %v772 = vlaneseq
    %v773 = vshrl.u32 %v772, 7
    %v774 = vsub.s32 %v771, %v773
    %v775 = vrot.slane %v155, %v774
    %v777 = vunpack.c.l.s4 1966171168
    %v778 = vunpack.c.0.s8 %v777
    %v779 = vlaneseq
    %v780 = vshrl.u32 %v779, 7
    %v781 = vsub.s32 %v778, %v780
    %v782 = vrot.slane %v768, %v781
    %v783 = vcombine.high %v775, %v775
    %v784 = vcombine.high %v782, %v782
    %v786 = vunpack.c.l.s4 1966171168
    %v787 = vunpack.c.0.s8 %v786
    %v788 = vlaneseq
    %v789 = vshrl.u32 %v788, 7
    %v790 = vsub.s32 %v787, %v789
    %v791 = vrot.slane %v775, %v790
    %v793 = vunpack.c.l.s4 1966171168
    %v794 = vunpack.c.0.s8 %v793
    %v795 = vlaneseq
    %v796 = vshrl.u32 %v795, 7
    %v797 = vsub.s32 %v794, %v796
    %v798 = vrot.slane %v782, %v797
    %v800 = vunpack.c.l.s4 1966171168
    %v801 = vunpack.c.0.s8 %v800
    %v802 = vlaneseq
    %v803 = vshrl.u32 %v802, 7
    %v804 = vsub.s32 %v801, %v803
    %v805 = vrot.slane %v783, %v804
    %v807 = vunpack.c.l.s4 1966171168
    %v808 = vunpack.c.0.s8 %v807
    %v809 = vlaneseq
    %v810 = vshrl.u32 %v809, 7
    %v811 = vsub.s32 %v808, %v810
    %v812 = vrot.slane %v784, %v811
    %v813 = vcombine.high %v791, %v791
    %v814 = vcombine.high %v798, %v798
    %v815 = vcombine.high %v805, %v805
    %v816 = vcombine.high %v812, %v812
    %v817 = vcombine.high %v160, %v160
    %v819 = vunpack.c.l.s4 1966171168
    %v820 = vunpack.c.0.s8 %v819
    %v821 = vlaneseq
    %v822 = vshrl.u32 %v821, 7
    %v823 = vsub.s32 %v820, %v822
    %v824 = vrot.slane %v160, %v823
    %v826 = vunpack.c.l.s4 1966171168
    %v827 = vunpack.c.0.s8 %v826
    %v828 = vlaneseq
    %v829 = vshrl.u32 %v828, 7
    %v830 = vsub.s32 %v827, %v829
    %v831 = vrot.slane %v817, %v830
    %v832 = vcombine.high %v824, %v824
    %v833 = vcombine.high %v831, %v831
    %v835 = vunpack.c.l.s4 1966171168
    %v836 = vunpack.c.0.s8 %v835
    %v837 = vlaneseq
    %v838 = vshrl.u32 %v837, 7
    %v839 = vsub.s32 %v836, %v838
    %v840 = vrot.slane %v824, %v839
    %v842 = vunpack.c.l.s4 1966171168
    %v843 = vunpack.c.0.s8 %v842
    %v844 = vlaneseq
    %v845 = vshrl.u32 %v844, 7
    %v846 = vsub.s32 %v843, %v845
    %v847 = vrot.slane %v831, %v846
    %v849 = vunpack.c.l.s4 1966171168
    %v850 = vunpack.c.0.s8 %v849
    %v851 = vlaneseq
    %v852 = vshrl.u32 %v851, 7
    %v853 = vsub.s32 %v850, %v852
    %v854 = vrot.slane %v832, %v853
    %v856 = vunpack.c.l.s4 1966171168
    %v857 = vunpack.c.0.s8 %v856
    %v858 = vlaneseq
    %v859 = vshrl.u32 %v858, 7
    %v860 = vsub.s32 %v857, %v859
    %v861 = vrot.slane %v833, %v860
    %v862 = vcombine.high %v840, %v840
    %v863 = vcombine.high %v847, %v847
    %v864 = vcombine.high %v854, %v854
    %v865 = vcombine.high %v861, %v861
    %v866 = vcombine.high %v165, %v165
    %v868 = vunpack.c.l.s4 1966171168
    %v869 = vunpack.c.0.s8 %v868
    %v870 = vlaneseq
    %v871 = vshrl.u32 %v870, 7
    %v872 = vsub.s32 %v869, %v871
    %v873 = vrot.slane %v165, %v872
    %v875 = vunpack.c.l.s4 1966171168
    %v876 = vunpack.c.0.s8 %v875
    %v877 = vlaneseq
    %v878 = vshrl.u32 %v877, 7
    %v879 = vsub.s32 %v876, %v878
    %v880 = vrot.slane %v866, %v879
    %v881 = vcombine.high %v873, %v873
    %v882 = vcombine.high %v880, %v880
    %v884 = vunpack.c.l.s4 1966171168
    %v885 = vunpack.c.0.s8 %v884
    %v886 = vlaneseq
    %v887 = vshrl.u32 %v886, 7
    %v888 = vsub.s32 %v885, %v887
    %v889 = vrot.slane %v873, %v888
    %v891 = vunpack.c.l.s4 1966171168
    %v892 = vunpack.c.0.s8 %v891
    %v893 = vlaneseq
    %v894 = vshrl.u32 %v893, 7
    %v895 = vsub.s32 %v892, %v894
    %v896 = vrot.slane %v880, %v895
    %v898 = vunpack.c.l.s4 1966171168
    %v899 = vunpack.c.0.s8 %v898
    %v900 = vlaneseq
    %v901 = vshrl.u32 %v900, 7
    %v902 = vsub.s32 %v899, %v901
    %v903 = vrot.slane %v881, %v902
    %v905 = vunpack.c.l.s4 1966171168
    %v906 = vunpack.c.0.s8 %v905
    %v907 = vlaneseq
    %v908 = vshrl.u32 %v907, 7
    %v909 = vsub.s32 %v906, %v908
    %v910 = vrot.slane %v882, %v909
    %v911 = vcombine.high %v889, %v889
    %v912 = vcombine.high %v896, %v896
    %v913 = vcombine.high %v903, %v903
    %v914 = vcombine.high %v910, %v910
    %v915 = vcombine.high %v170, %v170
    %v917 = vunpack.c.l.s4 1966171168
    %v918 = vunpack.c.0.s8 %v917
    %v919 = vlaneseq
    %v920 = vshrl.u32 %v919, 7
    %v921 = vsub.s32 %v918, %v920
    %v922 = vrot.slane %v170, %v921
    %v924 = vunpack.c.l.s4 1966171168
    %v925 = vunpack.c.0.s8 %v924
    %v926 = vlaneseq
    %v927 = vshrl.u32 %v926, 7
    %v928 = vsub.s32 %v925, %v927
    %v929 = vrot.slane %v915, %v928
    %v930 = vcombine.high %v922, %v922
    %v931 = vcombine.high %v929, %v929
    %v933 = vunpack.c.l.s4 1966171168
    %v934 = vunpack.c.0.s8 %v933
    %v935 = vlaneseq
    %v936 = vshrl.u32 %v935, 7
    %v937 = vsub.s32 %v934, %v936
    %v938 = vrot.slane %v922, %v937
    %v940 = vunpack.c.l.s4 1966171168
    %v941 = vunpack.c.0.s8 %v940
    %v942 = vlaneseq
    %v943 = vshrl.u32 %v942, 7
    %v944 = vsub.s32 %v941, %v943
    %v945 = vrot.slane %v929, %v944
    %v947 = vunpack.c.l.s4 1966171168
    %v948 = vunpack.c.0.s8 %v947
    %v949 = vlaneseq
    %v950 = vshrl.u32 %v949, 7
    %v951 = vsub.s32 %v948, %v950
    %v952 = vrot.slane %v930, %v951
    %v954 = vunpack.c.l.s4 1966171168
    %v955 = vunpack.c.0.s8 %v954
    %v956 = vlaneseq
    %v957 = vshrl.u32 %v956, 7
    %v958 = vsub.s32 %v955, %v957
    %v959 = vrot.slane %v931, %v958
    %v960 = vcombine.high %v938, %v938
    %v961 = vcombine.high %v945, %v945
    %v962 = vcombine.high %v952, %v952
    %v963 = vcombine.high %v959, %v959
    %v964 = vcombine.high %v175, %v175
    %v966 = vunpack.c.l.s4 1966171168
    %v967 = vunpack.c.0.s8 %v966
    %v968 = vlaneseq
    %v969 = vshrl.u32 %v968, 7
    %v970 = vsub.s32 %v967, %v969
    %v971 = vrot.slane %v175, %v970
    %v973 = vunpack.c.l.s4 1966171168
    %v974 = vunpack.c.0.s8 %v973
    %v975 = vlaneseq
    %v976 = vshrl.u32 %v975, 7
    %v977 = vsub.s32 %v974, %v976
    %v978 = vrot.slane %v964, %v977
    %v979 = vcombine.high %v971, %v971
    %v980 = vcombine.high %v978, %v978
    %v982 = vunpack.c.l.s4 1966171168
    %v983 = vunpack.c.0.s8 %v982
    %v984 = vlaneseq
    %v985 = vshrl.u32 %v984, 7
    %v986 = vsub.s32 %v983, %v985
    %v987 = vrot.slane %v971, %v986
    %v989 = vunpack.c.l.s4 1966171168
    %v990 = vunpack.c.0.s8 %v989
    %v991 = vlaneseq
    %v992 = vshrl.u32 %v991, 7
    %v993 = vsub.s32 %v990, %v992
    %v994 = vrot.slane %v978, %v993
    %v996 = vunpack.c.l.s4 1966171168
    %v997 = vunpack.c.0.s8 %v996
    %v998 = vlaneseq
    %v999 = vshrl.u32 %v998, 7
    %v1000 = vsub.s32 %v997, %v999
    %v1001 = vrot.slane %v979, %v1000
    %v1003 = vunpack.c.l.s4 1966171168
    %v1004 = vunpack.c.0.s8 %v1003
    %v1005 = vlaneseq
    %v1006 = vshrl.u32 %v1005, 7
    %v1007 = vsub.s32 %v1004, %v1006
    %v1008 = vrot.slane %v980, %v1007
    %v1009 = vcombine.high %v987, %v987
    %v1010 = vcombine.high %v994, %v994
    %v1011 = vcombine.high %v1001, %v1001
    %v1012 = vcombine.high %v1008, %v1008
    %v1013 = vcombine.high %v180, %v180
    %v1015 = vunpack.c.l.s4 1966171168
    %v1016 = vunpack.c.0.s8 %v1015
    %v1017 = vlaneseq
    %v1018 = vshrl.u32 %v1017, 7
    %v1019 = vsub.s32 %v1016, %v1018
    %v1020 = vrot.slane %v180, %v1019
    %v1022 = vunpack.c.l.s4 1966171168
    %v1023 = vunpack.c.0.s8 %v1022
    %v1024 = vlaneseq
    %v1025 = vshrl.u32 %v1024, 7
    %v1026 = vsub.s32 %v1023, %v1025
    %v1027 = vrot.slane %v1013, %v1026
    %v1028 = vcombine.high %v1020, %v1020
    %v1029 = vcombine.high %v1027, %v1027
    %v1031 = vunpack.c.l.s4 1966171168
    %v1032 = vunpack.c.0.s8 %v1031
    %v1033 = vlaneseq
    %v1034 = vshrl.u32 %v1033, 7
    %v1035 = vsub.s32 %v1032, %v1034
    %v1036 = vrot.slane %v1020, %v1035
    %v1038 = vunpack.c.l.s4 1966171168
    %v1039 = vunpack.c.0.s8 %v1038
    %v1040 = vlaneseq
    %v1041 = vshrl.u32 %v1040, 7
    %v1042 = vsub.s32 %v1039, %v1041
    %v1043 = vrot.slane %v1027, %v1042
    %v1045 = vunpack.c.l.s4 1966171168
    %v1046 = vunpack.c.0.s8 %v1045
    %v1047 = vlaneseq
    %v1048 = vshrl.u32 %v1047, 7
    %v1049 = vsub.s32 %v1046, %v1048
    %v1050 = vrot.slane %v1028, %v1049
    %v1052 = vunpack.c.l.s4 1966171168
    %v1053 = vunpack.c.0.s8 %v1052
    %v1054 = vlaneseq
    %v1055 = vshrl.u32 %v1054, 7
    %v1056 = vsub.s32 %v1053, %v1055
    %v1057 = vrot.slane %v1029, %v1056
    %v1058 = vcombine.high %v1036, %v1036
    %v1059 = vcombine.high %v1043, %v1043
    %v1060 = vcombine.high %v1050, %v1050
    %v1061 = vcombine.high %v1057, %v1057
    %v1062 = vcombine.high %v185, %v185
    %v1064 = vunpack.c.l.s4 1966171168
    %v1065 = vunpack.c.0.s8 %v1064
    %v1066 = vlaneseq
    %v1067 = vshrl.u32 %v1066, 7
    %v1068 = vsub.s32 %v1065, %v1067
    %v1069 = vrot.slane %v185, %v1068
    %v1071 = vunpack.c.l.s4 1966171168
    %v1072 = vunpack.c.0.s8 %v1071
    %v1073 = vlaneseq
    %v1074 = vshrl.u32 %v1073, 7
    %v1075 = vsub.s32 %v1072, %v1074
    %v1076 = vrot.slane %v1062, %v1075
    %v1077 = vcombine.high %v1069, %v1069
    %v1078 = vcombine.high %v1076, %v1076
    %v1080 = vunpack.c.l.s4 1966171168
    %v1081 = vunpack.c.0.s8 %v1080
    %v1082 = vlaneseq
    %v1083 = vshrl.u32 %v1082, 7
    %v1084 = vsub.s32 %v1081, %v1083
    %v1085 = vrot.slane %v1069, %v1084
    %v1087 = vunpack.c.l.s4 1966171168
    %v1088 = vunpack.c.0.s8 %v1087
    %v1089 = vlaneseq
    %v1090 = vshrl.u32 %v1089, 7
    %v1091 = vsub.s32 %v1088, %v1090
    %v1092 = vrot.slane %v1076, %v1091
    %v1094 = vunpack.c.l.s4 1966171168
    %v1095 = vunpack.c.0.s8 %v1094
    %v1096 = vlaneseq
    %v1097 = vshrl.u32 %v1096, 7
    %v1098 = vsub.s32 %v1095, %v1097
    %v1099 = vrot.slane %v1077, %v1098
    %v1101 = vunpack.c.l.s4 1966171168
    %v1102 = vunpack.c.0.s8 %v1101
    %v1103 = vlaneseq
    %v1104 = vshrl.u32 %v1103, 7
    %v1105 = vsub.s32 %v1102, %v1104
    %v1106 = vrot.slane %v1078, %v1105
    %v1107 = vcombine.high %v1085, %v1085
    %v1108 = vcombine.high %v1092, %v1092
    %v1109 = vcombine.high %v1099, %v1099
    %v1110 = vcombine.high %v1106, %v1106
    %v1111 = vcombine.high %v190, %v190
    %v1113 = vunpack.c.l.s4 1966171168
    %v1114 = vunpack.c.0.s8 %v1113
    %v1115 = vlaneseq
    %v1116 = vshrl.u32 %v1115, 7
    %v1117 = vsub.s32 %v1114, %v1116
    %v1118 = vrot.slane %v190, %v1117
    %v1120 = vunpack.c.l.s4 1966171168
    %v1121 = vunpack.c.0.s8 %v1120
    %v1122 = vlaneseq
    %v1123 = vshrl.u32 %v1122, 7
    %v1124 = vsub.s32 %v1121, %v1123
    %v1125 = vrot.slane %v1111, %v1124
    %v1126 = vcombine.high %v1118, %v1118
    %v1127 = vcombine.high %v1125, %v1125
    %v1129 = vunpack.c.l.s4 1966171168
    %v1130 = vunpack.c.0.s8 %v1129
    %v1131 = vlaneseq
    %v1132 = vshrl.u32 %v1131, 7
    %v1133 = vsub.s32 %v1130, %v1132
    %v1134 = vrot.slane %v1118, %v1133
    %v1136 = vunpack.c.l.s4 1966171168
    %v1137 = vunpack.c.0.s8 %v1136
    %v1138 = vlaneseq
    %v1139 = vshrl.u32 %v1138, 7
    %v1140 = vsub.s32 %v1137, %v1139
    %v1141 = vrot.slane %v1125, %v1140
    %v1143 = vunpack.c.l.s4 1966171168
    %v1144 = vunpack.c.0.s8 %v1143
    %v1145 = vlaneseq
    %v1146 = vshrl.u32 %v1145, 7
    %v1147 = vsub.s32 %v1144, %v1146
    %v1148 = vrot.slane %v1126, %v1147
    %v1150 = vunpack.c.l.s4 1966171168
    %v1151 = vunpack.c.0.s8 %v1150
    %v1152 = vlaneseq
    %v1153 = vshrl.u32 %v1152, 7
    %v1154 = vsub.s32 %v1151, %v1153
    %v1155 = vrot.slane %v1127, %v1154
    %v1156 = vcombine.high %v1134, %v1134
    %v1157 = vcombine.high %v1141, %v1141
    %v1158 = vcombine.high %v1148, %v1148
    %v1159 = vcombine.high %v1155, %v1155
    %v1160 = vcombine.high %v195, %v195
    %v1162 = vunpack.c.l.s4 1966171168
    %v1163 = vunpack.c.0.s8 %v1162
    %v1164 = vlaneseq
    %v1165 = vshrl.u32 %v1164, 7
    %v1166 = vsub.s32 %v1163, %v1165
    %v1167 = vrot.slane %v195, %v1166
    %v1169 = vunpack.c.l.s4 1966171168
    %v1170 = vunpack.c.0.s8 %v1169
    %v1171 = vlaneseq
    %v1172 = vshrl.u32 %v1171, 7
    %v1173 = vsub.s32 %v1170, %v1172
    %v1174 = vrot.slane %v1160, %v1173
    %v1175 = vcombine.high %v1167, %v1167
    %v1176 = vcombine.high %v1174, %v1174
    %v1178 = vunpack.c.l.s4 1966171168
    %v1179 = vunpack.c.0.s8 %v1178
    %v1180 = vlaneseq
    %v1181 = vshrl.u32 %v1180, 7
    %v1182 = vsub.s32 %v1179, %v1181
    %v1183 = vrot.slane %v1167, %v1182
    %v1185 = vunpack.c.l.s4 1966171168
    %v1186 = vunpack.c.0.s8 %v1185
    %v1187 = vlaneseq
    %v1188 = vshrl.u32 %v1187, 7
    %v1189 = vsub.s32 %v1186, %v1188
    %v1190 = vrot.slane %v1174, %v1189
    %v1192 = vunpack.c.l.s4 1966171168
    %v1193 = vunpack.c.0.s8 %v1192
    %v1194 = vlaneseq
    %v1195 = vshrl.u32 %v1194, 7
    %v1196 = vsub.s32 %v1193, %v1195
    %v1197 = vrot.slane %v1175, %v1196
    %v1199 = vunpack.c.l.s4 1966171168
    %v1200 = vunpack.c.0.s8 %v1199
    %v1201 = vlaneseq
    %v1202 = vshrl.u32 %v1201, 7
    %v1203 = vsub.s32 %v1200, %v1202
    %v1204 = vrot.slane %v1176, %v1203
    %v1205 = vcombine.high %v1183, %v1183
    %v1206 = vcombine.high %v1190, %v1190
    %v1207 = vcombine.high %v1197, %v1197
    %v1208 = vcombine.high %v1204, %v1204
    %v1209 = vcombine.low %v448, %v462
    %v1210 = vcombine.low %v470, %v472
    %v1211 = vcombine.low %v455, %v469
    %v1212 = vcombine.low %v471, %v473
    %v1214 = vunpack.c.l.s4 1966171168
    %v1215 = vunpack.c.0.s8 %v1214
    %v1216 = vlaneseq
    %v1217 = vshrl.u32 %v1216, 7
    %v1218 = vsub.s32 %v1215, %v1217
    %v1219 = vrot.slane %v1209, %v1218
    %v1221 = vunpack.c.l.s4 1966171168
    %v1222 = vunpack.c.0.s8 %v1221
    %v1223 = vlaneseq
    %v1224 = vshrl.u32 %v1223, 7
    %v1225 = vsub.s32 %v1222, %v1224
    %v1226 = vrot.slane %v1210, %v1225
    %v1228 = vunpack.c.l.s4 1966171168
    %v1229 = vunpack.c.0.s8 %v1228
    %v1230 = vlaneseq
    %v1231 = vshrl.u32 %v1230, 7
    %v1232 = vsub.s32 %v1229, %v1231
    %v1233 = vrot.slane %v1211, %v1232
    %v1235 = vunpack.c.l.s4 1966171168
    %v1236 = vunpack.c.0.s8 %v1235
    %v1237 = vlaneseq
    %v1238 = vshrl.u32 %v1237, 7
    %v1239 = vsub.s32 %v1236, %v1238
    %v1240 = vrot.slane %v1212, %v1239
    %v1241 = vcombine.low %v1219, %v1226
    %v1242 = vcombine.low %v1233, %v1240
    %v1244 = vunpack.c.l.s4 1966171168
    %v1245 = vunpack.c.0.s8 %v1244
    %v1246 = vlaneseq
    %v1247 = vshrl.u32 %v1246, 7
    %v1248 = vsub.s32 %v1245, %v1247
    %v1249 = vrot.slane %v1241, %v1248
    %v1251 = vunpack.c.l.s4 1966171168
    %v1252 = vunpack.c.0.s8 %v1251
    %v1253 = vlaneseq
    %v1254 = vshrl.u32 %v1253, 7
    %v1255 = vsub.s32 %v1252, %v1254
    %v1256 = vrot.slane %v1242, %v1255
    %v1257 = vcombine.low %v1249, %v1256
    %v1258 = vcombine.low %v497, %v511
    %v1259 = vcombine.low %v519, %v521
    %v1260 = vcombine.low %v504, %v518
    %v1261 = vcombine.low %v520, %v522
    %v1263 = vunpack.c.l.s4 1966171168
    %v1264 = vunpack.c.0.s8 %v1263
    %v1265 = vlaneseq
    %v1266 = vshrl.u32 %v1265, 7
    %v1267 = vsub.s32 %v1264, %v1266
    %v1268 = vrot.slane %v1258, %v1267
    %v1270 = vunpack.c.l.s4 1966171168
    %v1271 = vunpack.c.0.s8 %v1270
    %v1272 = vlaneseq
    %v1273 = vshrl.u32 %v1272, 7
    %v1274 = vsub.s32 %v1271, %v1273
    %v1275 = vrot.slane %v1259, %v1274
    %v1277 = vunpack.c.l.s4 1966171168
    %v1278 = vunpack.c.0.s8 %v1277
    %v1279 = vlaneseq
    %v1280 = vshrl.u32 %v1279, 7
    %v1281 = vsub.s32 %v1278, %v1280
    %v1282 = vrot.slane %v1260, %v1281
    %v1284 = vunpack.c.l.s4 1966171168
    %v1285 = vunpack.c.0.s8 %v1284
    %v1286 = vlaneseq
    %v1287 = vshrl.u32 %v1286, 7
    %v1288 = vsub.s32 %v1285, %v1287
    %v1289 = vrot.slane %v1261, %v1288
    %v1290 = vcombine.low %v1268, %v1275
    %v1291 = vcombine.low %v1282, %v1289
    %v1293 = vunpack.c.l.s4 1966171168
    %v1294 = vunpack.c.0.s8 %v1293
    %v1295 = vlaneseq
    %v1296 = vshrl.u32 %v1295, 7
    %v1297 = vsub.s32 %v1294, %v1296
    %v1298 = vrot.slane %v1290, %v1297
    %v1300 = vunpack.c.l.s4 1966171168
    %v1301 = vunpack.c.0.s8 %v1300
    %v1302 = vlaneseq
    %v1303 = vshrl.u32 %v1302, 7
    %v1304 = vsub.s32 %v1301, %v1303
    %v1305 = vrot.slane %v1291, %v1304
    %v1306 = vcombine.low %v1298, %v1305
    %v1307 = vcombine.low %v546, %v560
    %v1308 = vcombine.low %v568, %v570
    %v1309 = vcombine.low %v553, %v567
    %v1310 = vcombine.low %v569, %v571
    %v1312 = vunpack.c.l.s4 1966171168
    %v1313 = vunpack.c.0.s8 %v1312
    %v1314 = vlaneseq
    %v1315 = vshrl.u32 %v1314, 7
    %v1316 = vsub.s32 %v1313, %v1315
    %v1317 = vrot.slane %v1307, %v1316
    %v1319 = vunpack.c.l.s4 1966171168
    %v1320 = vunpack.c.0.s8 %v1319
    %v1321 = vlaneseq
    %v1322 = vshrl.u32 %v1321, 7
    %v1323 = vsub.s32 %v1320, %v1322
    %v1324 = vrot.slane %v1308, %v1323
    %v1326 = vunpack.c.l.s4 1966171168
    %v1327 = vunpack.c.0.s8 %v1326
    %v1328 = vlaneseq
    %v1329 = vshrl.u32 %v1328, 7
    %v1330 = vsub.s32 %v1327, %v1329
    %v1331 = vrot.slane %v1309, %v1330
    %v1333 = vunpack.c.l.s4 1966171168
    %v1334 = vunpack.c.0.s8 %v1333
    %v1335 = vlaneseq
    %v1336 = vshrl.u32 %v1335, 7
    %v1337 = vsub.s32 %v1334, %v1336
    %v1338 = vrot.slane %v1310, %v1337
    %v1339 = vcombine.low %v1317, %v1324
    %v1340 = vcombine.low %v1331, %v1338
    %v1342 = vunpack.c.l.s4 1966171168
    %v1343 = vunpack.c.0.s8 %v1342
    %v1344 = vlaneseq
    %v1345 = vshrl.u32 %v1344, 7
    %v1346 = vsub.s32 %v1343, %v1345
    %v1347 = vrot.slane %v1339, %v1346
    %v1349 = vunpack.c.l.s4 1966171168
    %v1350 = vunpack.c.0.s8 %v1349
    %v1351 = vlaneseq
    %v1352 = vshrl.u32 %v1351, 7
    %v1353 = vsub.s32 %v1350, %v1352
    %v1354 = vrot.slane %v1340, %v1353
    %v1355 = vcombine.low %v1347, %v1354
    %v1356 = vcombine.low %v595, %v609
    %v1357 = vcombine.low %v617, %v619
    %v1358 = vcombine.low %v602, %v616
    %v1359 = vcombine.low %v618, %v620
    %v1361 = vunpack.c.l.s4 1966171168
    %v1362 = vunpack.c.0.s8 %v1361
    %v1363 = vlaneseq
    %v1364 = vshrl.u32 %v1363, 7
    %v1365 = vsub.s32 %v1362, %v1364
    %v1366 = vrot.slane %v1356, %v1365
    %v1368 = vunpack.c.l.s4 1966171168
    %v1369 = vunpack.c.0.s8 %v1368
    %v1370 = vlaneseq
    %v1371 = vshrl.u32 %v1370, 7
    %v1372 = vsub.s32 %v1369, %v1371
    %v1373 = vrot.slane %v1357, %v1372
    %v1375 = vunpack.c.l.s4 1966171168
    %v1376 = vunpack.c.0.s8 %v1375
    %v1377 = vlaneseq
    %v1378 = vshrl.u32 %v1377, 7
    %v1379 = vsub.s32 %v1376, %v1378
    %v1380 = vrot.slane %v1358, %v1379
    %v1382 = vunpack.c.l.s4 1966171168
    %v1383 = vunpack.c.0.s8 %v1382
    %v1384 = vlaneseq
    %v1385 = vshrl.u32 %v1384, 7
    %v1386 = vsub.s32 %v1383, %v1385
    %v1387 = vrot.slane %v1359, %v1386
    %v1388 = vcombine.low %v1366, %v1373
    %v1389 = vcombine.low %v1380, %v1387
    %v1391 = vunpack.c.l.s4 1966171168
    %v1392 = vunpack.c.0.s8 %v1391
    %v1393 = vlaneseq
    %v1394 = vshrl.u32 %v1393, 7
    %v1395 = vsub.s32 %v1392, %v1394
    %v1396 = vrot.slane %v1388, %v1395
    %v1398 = vunpack.c.l.s4 1966171168
    %v1399 = vunpack.c.0.s8 %v1398
    %v1400 = vlaneseq
    %v1401 = vshrl.u32 %v1400, 7
    %v1402 = vsub.s32 %v1399, %v1401
    %v1403 = vrot.slane %v1389, %v1402
    %v1404 = vcombine.low %v1396, %v1403
    %v1405 = vcombine.low %v644, %v658
    %v1406 = vcombine.low %v666, %v668
    %v1407 = vcombine.low %v651, %v665
    %v1408 = vcombine.low %v667, %v669
    %v1410 = vunpack.c.l.s4 1966171168
    %v1411 = vunpack.c.0.s8 %v1410
    %v1412 = vlaneseq
    %v1413 = vshrl.u32 %v1412, 7
    %v1414 = vsub.s32 %v1411, %v1413
    %v1415 = vrot.slane %v1405, %v1414
    %v1417 = vunpack.c.l.s4 1966171168
    %v1418 = vunpack.c.0.s8 %v1417
    %v1419 = vlaneseq
    %v1420 = vshrl.u32 %v1419, 7
    %v1421 = vsub.s32 %v1418, %v1420
    %v1422 = vrot.slane %v1406, %v1421
    %v1424 = vunpack.c.l.s4 1966171168
    %v1425 = vunpack.c.0.s8 %v1424
    %v1426 = vlaneseq
    %v1427 = vshrl.u32 %v1426, 7
    %v1428 = vsub.s32 %v1425, %v1427
    %v1429 = vrot.slane %v1407, %v1428
    %v1431 = vunpack.c.l.s4 1966171168
    %v1432 = vunpack.c.0.s8 %v1431
    %v1433 = vlaneseq
    %v1434 = vshrl.u32 %v1433, 7
    %v1435 = vsub.s32 %v1432, %v1434
    %v1436 = vrot.slane %v1408, %v1435
    %v1437 = vcombine.low %v1415, %v1422
    %v1438 = vcombine.low %v1429, %v1436
    %v1440 = vunpack.c.l.s4 1966171168
    %v1441 = vunpack.c.0.s8 %v1440
    %v1442 = vlaneseq
    %v1443 = vshrl.u32 %v1442, 7
    %v1444 = vsub.s32 %v1441, %v1443
    %v1445 = vrot.slane %v1437, %v1444
    %v1447 = vunpack.c.l.s4 1966171168
    %v1448 = vunpack.c.0.s8 %v1447
    %v1449 = vlaneseq
    %v1450 = vshrl.u32 %v1449, 7
    %v1451 = vsub.s32 %v1448, %v1450
    %v1452 = vrot.slane %v1438, %v1451
    %v1453 = vcombine.low %v1445, %v1452
    %v1454 = vcombine.low %v693, %v707
    %v1455 = vcombine.low %v715, %v717
    %v1456 = vcombine.low %v700, %v714
    %v1457 = vcombine.low %v716, %v718
    %v1459 = vunpack.c.l.s4 1966171168
    %v1460 = vunpack.c.0.s8 %v1459
    %v1461 = vlaneseq
    %v1462 = vshrl.u32 %v1461, 7
    %v1463 = vsub.s32 %v1460, %v1462
    %v1464 = vrot.slane %v1454, %v1463
    %v1466 = vunpack.c.l.s4 1966171168
    %v1467 = vunpack.c.0.s8 %v1466
    %v1468 = vlaneseq
    %v1469 = vshrl.u32 %v1468, 7
    %v1470 = vsub.s32 %v1467, %v1469
    %v1471 = vrot.slane %v1455, %v1470
    %v1473 = vunpack.c.l.s4 1966171168
    %v1474 = vunpack.c.0.s8 %v1473
    %v1475 = vlaneseq
    %v1476 = vshrl.u32 %v1475, 7
    %v1477 = vsub.s32 %v1474, %v1476
    %v1478 = vrot.slane %v1456, %v1477
    %v1480 = vunpack.c.l.s4 1966171168
    %v1481 = vunpack.c.0.s8 %v1480
    %v1482 = vlaneseq
    %v1483 = vshrl.u32 %v1482, 7
    %v1484 = vsub.s32 %v1481, %v1483
    %v1485 = vrot.slane %v1457, %v1484
    %v1486 = vcombine.low %v1464, %v1471
    %v1487 = vcombine.low %v1478, %v1485
    %v1489 = vunpack.c.l.s4 1966171168
    %v1490 = vunpack.c.0.s8 %v1489
    %v1491 = vlaneseq
    %v1492 = vshrl.u32 %v1491, 7
    %v1493 = vsub.s32 %v1490, %v1492
    %v1494 = vrot.slane %v1486, %v1493
    %v1496 = vunpack.c.l.s4 1966171168
    %v1497 = vunpack.c.0.s8 %v1496
    %v1498 = vlaneseq
    %v1499 = vshrl.u32 %v1498, 7
    %v1500 = vsub.s32 %v1497, %v1499
    %v1501 = vrot.slane %v1487, %v1500
    %v1502 = vcombine.low %v1494, %v1501
    %v1503 = vcombine.low %v742, %v756
    %v1504 = vcombine.low %v764, %v766
    %v1505 = vcombine.low %v749, %v763
    %v1506 = vcombine.low %v765, %v767
    %v1508 = vunpack.c.l.s4 1966171168
    %v1509 = vunpack.c.0.s8 %v1508
    %v1510 = vlaneseq
    %v1511 = vshrl.u32 %v1510, 7
    %v1512 = vsub.s32 %v1509, %v1511
    %v1513 = vrot.slane %v1503, %v1512
    %v1515 = vunpack.c.l.s4 1966171168
    %v1516 = vunpack.c.0.s8 %v1515
    %v1517 = vlaneseq
    %v1518 = vshrl.u32 %v1517, 7
    %v1519 = vsub.s32 %v1516, %v1518
    %v1520 = vrot.slane %v1504, %v1519
    %v1522 = vunpack.c.l.s4 1966171168
    %v1523 = vunpack.c.0.s8 %v1522
    %v1524 = vlaneseq
    %v1525 = vshrl.u32 %v1524, 7
    %v1526 = vsub.s32 %v1523, %v1525
    %v1527 = vrot.slane %v1505, %v1526
    %v1529 = vunpack.c.l.s4 1966171168
    %v1530 = vunpack.c.0.s8 %v1529
    %v1531 = vlaneseq
    %v1532 = vshrl.u32 %v1531, 7
    %v1533 = vsub.s32 %v1530, %v1532
    %v1534 = vrot.slane %v1506, %v1533
    %v1535 = vcombine.low %v1513, %v1520
    %v1536 = vcombine.low %v1527, %v1534
    %v1538 = vunpack.c.l.s4 1966171168
    %v1539 = vunpack.c.0.s8 %v1538
    %v1540 = vlaneseq
    %v1541 = vshrl.u32 %v1540, 7
    %v1542 = vsub.s32 %v1539, %v1541
    %v1543 = vrot.slane %v1535, %v1542
    %v1545 = vunpack.c.l.s4 1966171168
    %v1546 = vunpack.c.0.s8 %v1545
    %v1547 = vlaneseq
    %v1548 = vshrl.u32 %v1547, 7
    %v1549 = vsub.s32 %v1546, %v1548
    %v1550 = vrot.slane %v1536, %v1549
    %v1551 = vcombine.low %v1543, %v1550
    %v1552 = vcombine.low %v791, %v805
    %v1553 = vcombine.low %v813, %v815
    %v1554 = vcombine.low %v798, %v812
    %v1555 = vcombine.low %v814, %v816
    %v1557 = vunpack.c.l.s4 1966171168
    %v1558 = vunpack.c.0.s8 %v1557
    %v1559 = vlaneseq
    %v1560 = vshrl.u32 %v1559, 7
    %v1561 = vsub.s32 %v1558, %v1560
    %v1562 = vrot.slane %v1552, %v1561
    %v1564 = vunpack.c.l.s4 1966171168
    %v1565 = vunpack.c.0.s8 %v1564
    %v1566 = vlaneseq
    %v1567 = vshrl.u32 %v1566, 7
    %v1568 = vsub.s32 %v1565, %v1567
    %v1569 = vrot.slane %v1553, %v1568
    %v1571 = vunpack.c.l.s4 1966171168
    %v1572 = vunpack.c.0.s8 %v1571
    %v1573 = vlaneseq
    %v1574 = vshrl.u32 %v1573, 7
    %v1575 = vsub.s32 %v1572, %v1574
    %v1576 = vrot.slane %v1554, %v1575
    %v1578 = vunpack.c.l.s4 1966171168
    %v1579 = vunpack.c.0.s8 %v1578
    %v1580 = vlaneseq
    %v1581 = vshrl.u32 %v1580, 7
    %v1582 = vsub.s32 %v1579, %v1581
    %v1583 = vrot.slane %v1555, %v1582
    %v1584 = vcombine.low %v1562, %v1569
    %v1585 = vcombine.low %v1576, %v1583
    %v1587 = vunpack.c.l.s4 1966171168
    %v1588 = vunpack.c.0.s8 %v1587
    %v1589 = vlaneseq
    %v1590 = vshrl.u32 %v1589, 7
    %v1591 = vsub.s32 %v1588, %v1590
    %v1592 = vrot.slane %v1584, %v1591
    %v1594 = vunpack.c.l.s4 1966171168
    %v1595 = vunpack.c.0.s8 %v1594
    %v1596 = vlaneseq
    %v1597 = vshrl.u32 %v1596, 7
    %v1598 = vsub.s32 %v1595, %v1597
    %v1599 = vrot.slane %v1585, %v1598
    %v1600 = vcombine.low %v1592, %v1599
    %v1601 = vcombine.low %v840, %v854
    %v1602 = vcombine.low %v862, %v864
    %v1603 = vcombine.low %v847, %v861
    %v1604 = vcombine.low %v863, %v865
    %v1606 = vunpack.c.l.s4 1966171168
    %v1607 = vunpack.c.0.s8 %v1606
    %v1608 = vlaneseq
    %v1609 = vshrl.u32 %v1608, 7
    %v1610 = vsub.s32 %v1607, %v1609
    %v1611 = vrot.slane %v1601, %v1610
    %v1613 = vunpack.c.l.s4 1966171168
    %v1614 = vunpack.c.0.s8 %v1613
    %v1615 = vlaneseq
    %v1616 = vshrl.u32 %v1615, 7
    %v1617 = vsub.s32 %v1614, %v1616
    %v1618 = vrot.slane %v1602, %v1617
    %v1620 = vunpack.c.l.s4 1966171168
    %v1621 = vunpack.c.0.s8 %v1620
    %v1622 = vlaneseq
    %v1623 = vshrl.u32 %v1622, 7
    %v1624 = vsub.s32 %v1621, %v1623
    %v1625 = vrot.slane %v1603, %v1624
    %v1627 = vunpack.c.l.s4 1966171168
    %v1628 = vunpack.c.0.s8 %v1627
    %v1629 = vlaneseq
    %v1630 = vshrl.u32 %v1629, 7
    %v1631 = vsub.s32 %v1628, %v1630
    %v1632 = vrot.slane %v1604, %v1631
    %v1633 = vcombine.low %v1611, %v1618
    %v1634 = vcombine.low %v1625, %v1632
    %v1636 = vunpack.c.l.s4 1966171168
    %v1637 = vunpack.c.0.s8 %v1636
    %v1638 = vlaneseq
    %v1639 = vshrl.u32 %v1638, 7
    %v1640 = vsub.s32 %v1637, %v1639
    %v1641 = vrot.slane %v1633, %v1640
    %v1643 = vunpack.c.l.s4 1966171168
    %v1644 = vunpack.c.0.s8 %v1643
    %v1645 = vlaneseq
    %v1646 = vshrl.u32 %v1645, 7
    %v1647 = vsub.s32 %v1644, %v1646
    %v1648 = vrot.slane %v1634, %v1647
    %v1649 = vcombine.low %v1641, %v1648
    %v1650 = vcombine.low %v889, %v903
    %v1651 = vcombine.low %v911, %v913
    %v1652 = vcombine.low %v896, %v910
    %v1653 = vcombine.low %v912, %v914
    %v1655 = vunpack.c.l.s4 1966171168
    %v1656 = vunpack.c.0.s8 %v1655
    %v1657 = vlaneseq
    %v1658 = vshrl.u32 %v1657, 7
    %v1659 = vsub.s32 %v1656, %v1658
    %v1660 = vrot.slane %v1650, %v1659
    %v1662 = vunpack.c.l.s4 1966171168
    %v1663 = vunpack.c.0.s8 %v1662
    %v1664 = vlaneseq
    %v1665 = vshrl.u32 %v1664, 7
    %v1666 = vsub.s32 %v1663, %v1665
    %v1667 = vrot.slane %v1651, %v1666
    %v1669 = vunpack.c.l.s4 1966171168
    %v1670 = vunpack.c.0.s8 %v1669
    %v1671 = vlaneseq
    %v1672 = vshrl.u32 %v1671, 7
    %v1673 = vsub.s32 %v1670, %v1672
    %v1674 = vrot.slane %v1652, %v1673
    %v1676 = vunpack.c.l.s4 1966171168
    %v1677 = vunpack.c.0.s8 %v1676
    %v1678 = vlaneseq
    %v1679 = vshrl.u32 %v1678, 7
    %v1680 = vsub.s32 %v1677, %v1679
    %v1681 = vrot.slane %v1653, %v1680
    %v1682 = vcombine.low %v1660, %v1667
    %v1683 = vcombine.low %v1674, %v1681
    %v1685 = vunpack.c.l.s4 1966171168
    %v1686 = vunpack.c.0.s8 %v1685
    %v1687 = vlaneseq
    %v1688 = vshrl.u32 %v1687, 7
    %v1689 = vsub.s32 %v1686, %v1688
    %v1690 = vrot.slane %v1682, %v1689
    %v1692 = vunpack.c.l.s4 1966171168
    %v1693 = vunpack.c.0.s8 %v1692
    %v1694 = vlaneseq
    %v1695 = vshrl.u32 %v1694, 7
    %v1696 = vsub.s32 %v1693, %v1695
    %v1697 = vrot.slane %v1683, %v1696
    %v1698 = vcombine.low %v1690, %v1697
    %v1699 = vcombine.low %v938, %v952
    %v1700 = vcombine.low %v960, %v962
    %v1701 = vcombine.low %v945, %v959
    %v1702 = vcombine.low %v961, %v963
    %v1704 = vunpack.c.l.s4 1966171168
    %v1705 = vunpack.c.0.s8 %v1704
    %v1706 = vlaneseq
    %v1707 = vshrl.u32 %v1706, 7
    %v1708 = vsub.s32 %v1705, %v1707
    %v1709 = vrot.slane %v1699, %v1708
    %v1711 = vunpack.c.l.s4 1966171168
    %v1712 = vunpack.c.0.s8 %v1711
    %v1713 = vlaneseq
    %v1714 = vshrl.u32 %v1713, 7
    %v1715 = vsub.s32 %v1712, %v1714
    %v1716 = vrot.slane %v1700, %v1715
    %v1718 = vunpack.c.l.s4 1966171168
    %v1719 = vunpack.c.0.s8 %v1718
    %v1720 = vlaneseq
    %v1721 = vshrl.u32 %v1720, 7
    %v1722 = vsub.s32 %v1719, %v1721
    %v1723 = vrot.slane %v1701, %v1722
    %v1725 = vunpack.c.l.s4 1966171168
    %v1726 = vunpack.c.0.s8 %v1725
    %v1727 = vlaneseq
    %v1728 = vshrl.u32 %v1727, 7
    %v1729 = vsub.s32 %v1726, %v1728
    %v1730 = vrot.slane %v1702, %v1729
    %v1731 = vcombine.low %v1709, %v1716
    %v1732 = vcombine.low %v1723, %v1730
    %v1734 = vunpack.c.l.s4 1966171168
    %v1735 = vunpack.c.0.s8 %v1734
    %v1736 = vlaneseq
    %v1737 = vshrl.u32 %v1736, 7
    %v1738 = vsub.s32 %v1735, %v1737
    %v1739 = vrot.slane %v1731, %v1738
    %v1741 = vunpack.c.l.s4 1966171168
    %v1742 = vunpack.c.0.s8 %v1741
    %v1743 = vlaneseq
    %v1744 = vshrl.u32 %v1743, 7
    %v1745 = vsub.s32 %v1742, %v1744
    %v1746 = vrot.slane %v1732, %v1745
    %v1747 = vcombine.low %v1739, %v1746
    %v1748 = vcombine.low %v987, %v1001
    %v1749 = vcombine.low %v1009, %v1011
    %v1750 = vcombine.low %v994, %v1008
    %v1751 = vcombine.low %v1010, %v1012
    %v1753 = vunpack.c.l.s4 1966171168
    %v1754 = vunpack.c.0.s8 %v1753
    %v1755 = vlaneseq
    %v1756 = vshrl.u32 %v1755, 7
    %v1757 = vsub.s32 %v1754, %v1756
    %v1758 = vrot.slane %v1748, %v1757
    %v1760 = vunpack.c.l.s4 1966171168
    %v1761 = vunpack.c.0.s8 %v1760
    %v1762 = vlaneseq
    %v1763 = vshrl.u32 %v1762, 7
    %v1764 = vsub.s32 %v1761, %v1763
    %v1765 = vrot.slane %v1749, %v1764
    %v1767 = vunpack.c.l.s4 1966171168
    %v1768 = vunpack.c.0.s8 %v1767
    %v1769 = vlaneseq
    %v1770 = vshrl.u32 %v1769, 7
    %v1771 = vsub.s32 %v1768, %v1770
    %v1772 = vrot.slane %v1750, %v1771
    %v1774 = vunpack.c.l.s4 1966171168
    %v1775 = vunpack.c.0.s8 %v1774
    %v1776 = vlaneseq
    %v1777 = vshrl.u32 %v1776, 7
    %v1778 = vsub.s32 %v1775, %v1777
    %v1779 = vrot.slane %v1751, %v1778
    %v1780 = vcombine.low %v1758, %v1765
    %v1781 = vcombine.low %v1772, %v1779
    %v1783 = vunpack.c.l.s4 1966171168
    %v1784 = vunpack.c.0.s8 %v1783
    %v1785 = vlaneseq
    %v1786 = vshrl.u32 %v1785, 7
    %v1787 = vsub.s32 %v1784, %v1786
    %v1788 = vrot.slane %v1780, %v1787
    %v1790 = vunpack.c.l.s4 1966171168
    %v1791 = vunpack.c.0.s8 %v1790
    %v1792 = vlaneseq
    %v1793 = vshrl.u32 %v1792, 7
    %v1794 = vsub.s32 %v1791, %v1793
    %v1795 = vrot.slane %v1781, %v1794
    %v1796 = vcombine.low %v1788, %v1795
    %v1797 = vcombine.low %v1036, %v1050
    %v1798 = vcombine.low %v1058, %v1060
    %v1799 = vcombine.low %v1043, %v1057
    %v1800 = vcombine.low %v1059, %v1061
    %v1802 = vunpack.c.l.s4 1966171168
    %v1803 = vunpack.c.0.s8 %v1802
    %v1804 = vlaneseq
    %v1805 = vshrl.u32 %v1804, 7
    %v1806 = vsub.s32 %v1803, %v1805
    %v1807 = vrot.slane %v1797, %v1806
    %v1809 = vunpack.c.l.s4 1966171168
    %v1810 = vunpack.c.0.s8 %v1809
    %v1811 = vlaneseq
    %v1812 = vshrl.u32 %v1811, 7
    %v1813 = vsub.s32 %v1810, %v1812
    %v1814 = vrot.slane %v1798, %v1813
    %v1816 = vunpack.c.l.s4 1966171168
    %v1817 = vunpack.c.0.s8 %v1816
    %v1818 = vlaneseq
    %v1819 = vshrl.u32 %v1818, 7
    %v1820 = vsub.s32 %v1817, %v1819
    %v1821 = vrot.slane %v1799, %v1820
    %v1823 = vunpack.c.l.s4 1966171168
    %v1824 = vunpack.c.0.s8 %v1823
    %v1825 = vlaneseq
    %v1826 = vshrl.u32 %v1825, 7
    %v1827 = vsub.s32 %v1824, %v1826
    %v1828 = vrot.slane %v1800, %v1827
    %v1829 = vcombine.low %v1807, %v1814
    %v1830 = vcombine.low %v1821, %v1828
    %v1832 = vunpack.c.l.s4 1966171168
    %v1833 = vunpack.c.0.s8 %v1832
    %v1834 = vlaneseq
    %v1835 = vshrl.u32 %v1834, 7
    %v1836 = vsub.s32 %v1833, %v1835
    %v1837 = vrot.slane %v1829, %v1836
    %v1839 = vunpack.c.l.s4 1966171168
    %v1840 = vunpack.c.0.s8 %v1839
    %v1841 = vlaneseq
    %v1842 = vshrl.u32 %v1841, 7
    %v1843 = vsub.s32 %v1840, %v1842
    %v1844 = vrot.slane %v1830, %v1843
    %v1845 = vcombine.low %v1837, %v1844
    %v1846 = vcombine.low %v1085, %v1099
    %v1847 = vcombine.low %v1107, %v1109
    %v1848 = vcombine.low %v1092, %v1106
    %v1849 = vcombine.low %v1108, %v1110
    %v1851 = vunpack.c.l.s4 1966171168
    %v1852 = vunpack.c.0.s8 %v1851
    %v1853 = vlaneseq
    %v1854 = vshrl.u32 %v1853, 7
    %v1855 = vsub.s32 %v1852, %v1854
    %v1856 = vrot.slane %v1846, %v1855
    %v1858 = vunpack.c.l.s4 1966171168
    %v1859 = vunpack.c.0.s8 %v1858
    %v1860 = vlaneseq
    %v1861 = vshrl.u32 %v1860, 7
    %v1862 = vsub.s32 %v1859, %v1861
    %v1863 = vrot.slane %v1847, %v1862
    %v1865 = vunpack.c.l.s4 1966171168
    %v1866 = vunpack.c.0.s8 %v1865
    %v1867 = vlaneseq
    %v1868 = vshrl.u32 %v1867, 7
    %v1869 = vsub.s32 %v1866, %v1868
    %v1870 = vrot.slane %v1848, %v1869
    %v1872 = vunpack.c.l.s4 1966171168
    %v1873 = vunpack.c.0.s8 %v1872
    %v1874 = vlaneseq
    %v1875 = vshrl.u32 %v1874, 7
    %v1876 = vsub.s32 %v1873, %v1875
    %v1877 = vrot.slane %v1849, %v1876
    %v1878 = vcombine.low %v1856, %v1863
    %v1879 = vcombine.low %v1870, %v1877
    %v1881 = vunpack.c.l.s4 1966171168
    %v1882 = vunpack.c.0.s8 %v1881
    %v1883 = vlaneseq
    %v1884 = vshrl.u32 %v1883, 7
    %v1885 = vsub.s32 %v1882, %v1884
    %v1886 = vrot.slane %v1878, %v1885
    %v1888 = vunpack.c.l.s4 1966171168
    %v1889 = vunpack.c.0.s8 %v1888
    %v1890 = vlaneseq
    %v1891 = vshrl.u32 %v1890, 7
    %v1892 = vsub.s32 %v1889, %v1891
    %v1893 = vrot.slane %v1879, %v1892
    %v1894 = vcombine.low %v1886, %v1893
    %v1895 = vcombine.low %v1134, %v1148
    %v1896 = vcombine.low %v1156, %v1158
    %v1897 = vcombine.low %v1141, %v1155
    %v1898 = vcombine.low %v1157, %v1159
    %v1900 = vunpack.c.l.s4 1966171168
    %v1901 = vunpack.c.0.s8 %v1900
    %v1902 = vlaneseq
    %v1903 = vshrl.u32 %v1902, 7
    %v1904 = vsub.s32 %v1901, %v1903
    %v1905 = vrot.slane %v1895, %v1904
    %v1907 = vunpack.c.l.s4 1966171168
    %v1908 = vunpack.c.0.s8 %v1907
    %v1909 = vlaneseq
    %v1910 = vshrl.u32 %v1909, 7
    %v1911 = vsub.s32 %v1908, %v1910
    %v1912 = vrot.slane %v1896, %v1911
    %v1914 = vunpack.c.l.s4 1966171168
    %v1915 = vunpack.c.0.s8 %v1914
    %v1916 = vlaneseq
    %v1917 = vshrl.u32 %v1916, 7
    %v1918 = vsub.s32 %v1915, %v1917
    %v1919 = vrot.slane %v1897, %v1918
    %v1921 = vunpack.c.l.s4 1966171168
    %v1922 = vunpack.c.0.s8 %v1921
    %v1923 = vlaneseq
    %v1924 = vshrl.u32 %v1923, 7
    %v1925 = vsub.s32 %v1922, %v1924
    %v1926 = vrot.slane %v1898, %v1925
    %v1927 = vcombine.low %v1905, %v1912
    %v1928 = vcombine.low %v1919, %v1926
    %v1930 = vunpack.c.l.s4 1966171168
    %v1931 = vunpack.c.0.s8 %v1930
    %v1932 = vlaneseq
    %v1933 = vshrl.u32 %v1932, 7
    %v1934 = vsub.s32 %v1931, %v1933
    %v1935 = vrot.slane %v1927, %v1934
    %v1937 = vunpack.c.l.s4 1966171168
    %v1938 = vunpack.c.0.s8 %v1937
    %v1939 = vlaneseq
    %v1940 = vshrl.u32 %v1939, 7
    %v1941 = vsub.s32 %v1938, %v1940
    %v1942 = vrot.slane %v1928, %v1941
    %v1943 = vcombine.low %v1935, %v1942
    %v1944 = vcombine.low %v1183, %v1197
    %v1945 = vcombine.low %v1205, %v1207
    %v1946 = vcombine.low %v1190, %v1204
    %v1947 = vcombine.low %v1206, %v1208
    %v1949 = vunpack.c.l.s4 1966171168
    %v1950 = vunpack.c.0.s8 %v1949
    %v1951 = vlaneseq
    %v1952 = vshrl.u32 %v1951, 7
    %v1953 = vsub.s32 %v1950, %v1952
    %v1954 = vrot.slane %v1944, %v1953
    %v1956 = vunpack.c.l.s4 1966171168
    %v1957 = vunpack.c.0.s8 %v1956
    %v1958 = vlaneseq
    %v1959 = vshrl.u32 %v1958, 7
    %v1960 = vsub.s32 %v1957, %v1959
    %v1961 = vrot.slane %v1945, %v1960
    %v1963 = vunpack.c.l.s4 1966171168
    %v1964 = vunpack.c.0.s8 %v1963
    %v1965 = vlaneseq
    %v1966 = vshrl.u32 %v1965, 7
    %v1967 = vsub.s32 %v1964, %v1966
    %v1968 = vrot.slane %v1946, %v1967
    %v1970 = vunpack.c.l.s4 1966171168
    %v1971 = vunpack.c.0.s8 %v1970
    %v1972 = vlaneseq
    %v1973 = vshrl.u32 %v1972, 7
    %v1974 = vsub.s32 %v1971, %v1973
    %v1975 = vrot.slane %v1947, %v1974
    %v1976 = vcombine.low %v1954, %v1961
    %v1977 = vcombine.low %v1968, %v1975
    %v1979 = vunpack.c.l.s4 1966171168
    %v1980 = vunpack.c.0.s8 %v1979
    %v1981 = vlaneseq
    %v1982 = vshrl.u32 %v1981, 7
    %v1983 = vsub.s32 %v1980, %v1982
    %v1984 = vrot.slane %v1976, %v1983
    %v1986 = vunpack.c.l.s4 1966171168
    %v1987 = vunpack.c.0.s8 %v1986
    %v1988 = vlaneseq
    %v1989 = vshrl.u32 %v1988, 7
    %v1990 = vsub.s32 %v1987, %v1989
    %v1991 = vrot.slane %v1977, %v1990
    %v1992 = vcombine.low %v1984, %v1991
    %1993 = vset.pattern.permute.xlu0 0
    %1994 = vperm.xlu0 %1993, %v1257
    %v1995 = vpop.permute.xlu0 %1994
    %1996 = vset.pattern.permute.xlu0 0
    %1997 = vperm.xlu0 %1996, %v1306
    %v1998 = vpop.permute.xlu0 %1997
    %1999 = vset.pattern.permute.xlu0 0
    %2000 = vperm.xlu0 %1999, %v1355
    %v2001 = vpop.permute.xlu0 %2000
    %2002 = vset.pattern.permute.xlu0 0
    %2003 = vperm.xlu0 %2002, %v1404
    %v2004 = vpop.permute.xlu0 %2003
    %2005 = vset.pattern.permute.xlu0 0
    %2006 = vperm.xlu0 %2005, %v1453
    %v2007 = vpop.permute.xlu0 %2006
    %2008 = vset.pattern.permute.xlu0 0
    %2009 = vperm.xlu0 %2008, %v1502
    %v2010 = vpop.permute.xlu0 %2009
    %2011 = vset.pattern.permute.xlu0 0
    %2012 = vperm.xlu0 %2011, %v1551
    %v2013 = vpop.permute.xlu0 %2012
    %2014 = vset.pattern.permute.xlu0 0
    %2015 = vperm.xlu0 %2014, %v1600
    %v2016 = vpop.permute.xlu0 %2015
    %2017 = vset.pattern.permute.xlu0 0
    %2018 = vperm.xlu0 %2017, %v1649
    %v2019 = vpop.permute.xlu0 %2018
    %2020 = vset.pattern.permute.xlu0 0
    %2021 = vperm.xlu0 %2020, %v1698
    %v2022 = vpop.permute.xlu0 %2021
    %2023 = vset.pattern.permute.xlu0 0
    %2024 = vperm.xlu0 %2023, %v1747
    %v2025 = vpop.permute.xlu0 %2024
    %2026 = vset.pattern.permute.xlu0 0
    %2027 = vperm.xlu0 %2026, %v1796
    %v2028 = vpop.permute.xlu0 %2027
    %2029 = vset.pattern.permute.xlu0 0
    %2030 = vperm.xlu0 %2029, %v1845
    %v2031 = vpop.permute.xlu0 %2030
    %2032 = vset.pattern.permute.xlu0 0
    %2033 = vperm.xlu0 %2032, %v1894
    %v2034 = vpop.permute.xlu0 %2033
    %2035 = vset.pattern.permute.xlu0 0
    %2036 = vperm.xlu0 %2035, %v1943
    %v2037 = vpop.permute.xlu0 %2036
    %2038 = vset.pattern.permute.xlu0 0
    %2039 = vperm.xlu0 %2038, %v1992
    %v2040 = vpop.permute.xlu0 %2039
    %v2041 = vlaneseq
    %v2042 = vand.u32 %v2041, 127
    %v2043 = vlaneseq
    %v2044 = vshrl.u32 %v2043, 7
    %v2045 = vsub.s32 %v2042, %v2044
    %v2046 = vrot.slane %v1995, %v2045
    %v2047 = vadd.s32 %v2042, 4294967288
    %v2048 = vlaneseq
    %v2049 = vshrl.u32 %v2048, 7
    %v2050 = vsub.s32 %v2047, %v2049
    %v2051 = vrot.slane %v1998, %v2050
    %vm2052 = vcmask 130112
    %v2053 = vsel %vm2052, %v2051, %v2046
    %v2054 = vadd.s32 %v2042, 4294967280
    %v2055 = vlaneseq
    %v2056 = vshrl.u32 %v2055, 7
    %v2057 = vsub.s32 %v2054, %v2056
    %v2058 = vrot.slane %v2001, %v2057
    %vm2059 = vcmask 195712
    %v2060 = vsel %vm2059, %v2058, %v2053
    %v2061 = vadd.s32 %v2042, 4294967272
    %v2062 = vlaneseq
    %v2063 = vshrl.u32 %v2062, 7
    %v2064 = vsub.s32 %v2061, %v2063
    %v2065 = vrot.slane %v2004, %v2064
    %vm2066 = vcmask 261312
    %v2067 = vsel %vm2066, %v2065, %v2060
    %v2068 = vadd.s32 %v2042, 4294967264
    %v2069 = vlaneseq
    %v2070 = vshrl.u32 %v2069, 7
    %v2071 = vsub.s32 %v2068, %v2070
    %v2072 = vrot.slane %v2007, %v2071
    %vm2073 = vcmask 326912
    %v2074 = vsel %vm2073, %v2072, %v2067
    %v2075 = vadd.s32 %v2042, 4294967256
    %v2076 = vlaneseq
    %v2077 = vshrl.u32 %v2076, 7
    %v2078 = vsub.s32 %v2075, %v2077
    %v2079 = vrot.slane %v2010, %v2078
    %vm2080 = vcmask 392512
    %v2081 = vsel %vm2080, %v2079, %v2074
    %v2082 = vadd.s32 %v2042, 4294967248
    %v2083 = vlaneseq
    %v2084 = vshrl.u32 %v2083, 7
    %v2085 = vsub.s32 %v2082, %v2084
    %v2086 = vrot.slane %v2013, %v2085
    %vm2087 = vcmask 458112
    %v2088 = vsel %vm2087, %v2086, %v2081
    %v2089 = vadd.s32 %v2042, 4294967240
    %v2090 = vlaneseq
    %v2091 = vshrl.u32 %v2090, 7
    %v2092 = vsub.s32 %v2089, %v2091
    %v2093 = vrot.slane %v2016, %v2092
    %vm2094 = vcmask 523712
    %v2095 = vsel %vm2094, %v2093, %v2088
    %v2096 = vadd.s32 %v2042, 4294967232
    %v2097 = vlaneseq
    %v2098 = vshrl.u32 %v2097, 7
    %v2099 = vsub.s32 %v2096, %v2098
    %v2100 = vrot.slane %v2019, %v2099
    %vm2101 = vcmask 589312
    %v2102 = vsel %vm2101, %v2100, %v2095
    %v2103 = vadd.s32 %v2042, 4294967224
    %v2104 = vlaneseq
    %v2105 = vshrl.u32 %v2104, 7
    %v2106 = vsub.s32 %v2103, %v2105
    %v2107 = vrot.slane %v2022, %v2106
    %vm2108 = vcmask 654912
    %v2109 = vsel %vm2108, %v2107, %v2102
    %v2110 = vadd.s32 %v2042, 4294967216
    %v2111 = vlaneseq
    %v2112 = vshrl.u32 %v2111, 7
    %v2113 = vsub.s32 %v2110, %v2112
    %v2114 = vrot.slane %v2025, %v2113
    %vm2115 = vcmask 720512
    %v2116 = vsel %vm2115, %v2114, %v2109
    %v2117 = vadd.s32 %v2042, 4294967208
    %v2118 = vlaneseq
    %v2119 = vshrl.u32 %v2118, 7
    %v2120 = vsub.s32 %v2117, %v2119
    %v2121 = vrot.slane %v2028, %v2120
    %vm2122 = vcmask 786112
    %v2123 = vsel %vm2122, %v2121, %v2116
    %v2124 = vadd.s32 %v2042, 4294967200
    %v2125 = vlaneseq
    %v2126 = vshrl.u32 %v2125, 7
    %v2127 = vsub.s32 %v2124, %v2126
    %v2128 = vrot.slane %v2031, %v2127
    %vm2129 = vcmask 851712
    %v2130 = vsel %vm2129, %v2128, %v2123
    %v2131 = vadd.s32 %v2042, 4294967192
    %v2132 = vlaneseq
    %v2133 = vshrl.u32 %v2132, 7
    %v2134 = vsub.s32 %v2131, %v2133
    %v2135 = vrot.slane %v2034, %v2134
    %vm2136 = vcmask 917312
    %v2137 = vsel %vm2136, %v2135, %v2130
    %v2138 = vadd.s32 %v2042, 4294967184
    %v2139 = vlaneseq
    %v2140 = vshrl.u32 %v2139, 7
    %v2141 = vsub.s32 %v2138, %v2140
    %v2142 = vrot.slane %v2037, %v2141
    %vm2143 = vcmask 982912
    %v2144 = vsel %vm2143, %v2142, %v2137
    %v2145 = vadd.s32 %v2042, 4294967176
    %v2146 = vlaneseq
    %v2147 = vshrl.u32 %v2146, 7
    %v2148 = vsub.s32 %v2145, %v2147
    %v2149 = vrot.slane %v2040, %v2148
    %vm2150 = vcmask 1048512
    %v2151 = vsel %vm2150, %v2149, %v2144
    %v2153 = vunpack.c.l.s4 1966171168
    %v2154 = vunpack.c.0.s8 %v2153
    %v2155 = vlaneseq
    %v2156 = vshrl.u32 %v2155, 7
    %v2157 = vsub.s32 %v2154, %v2156
    %v2158 = vrot.slane %v2151, %v2157
    %v2160 = vunpack.c.l.s4 1966171168
    %v2161 = vunpack.c.0.s8 %v2160
    %v2162 = vlaneseq
    %v2163 = vshrl.u32 %v2162, 7
    %v2164 = vsub.s32 %v2161, %v2163
    %v2165 = vrot.slane %v2158, %v2164
    %v2167 = vmul.f32 %v200, %v2165
    %v2168 = vmax.f32 %v2167, 0.0
    %v2185 = vcombine.high %v273, %v273
    %v2187 = vunpack.c.l.s4 1966171168
    %v2188 = vunpack.c.0.s8 %v2187
    %v2189 = vlaneseq
    %v2190 = vshrl.u32 %v2189, 7
    %v2191 = vsub.s32 %v2188, %v2190
    %v2192 = vrot.slane %v273, %v2191
    %v2194 = vunpack.c.l.s4 1966171168
    %v2195 = vunpack.c.0.s8 %v2194
    %v2196 = vlaneseq
    %v2197 = vshrl.u32 %v2196, 7
    %v2198 = vsub.s32 %v2195, %v2197
    %v2199 = vrot.slane %v2185, %v2198
    %v2200 = vcombine.high %v2192, %v2192
    %v2201 = vcombine.high %v2199, %v2199
    %v2203 = vunpack.c.l.s4 1966171168
    %v2204 = vunpack.c.0.s8 %v2203
    %v2205 = vlaneseq
    %v2206 = vshrl.u32 %v2205, 7
    %v2207 = vsub.s32 %v2204, %v2206
    %v2208 = vrot.slane %v2192, %v2207
    %v2210 = vunpack.c.l.s4 1966171168
    %v2211 = vunpack.c.0.s8 %v2210
    %v2212 = vlaneseq
    %v2213 = vshrl.u32 %v2212, 7
    %v2214 = vsub.s32 %v2211, %v2213
    %v2215 = vrot.slane %v2199, %v2214
    %v2217 = vunpack.c.l.s4 1966171168
    %v2218 = vunpack.c.0.s8 %v2217
    %v2219 = vlaneseq
    %v2220 = vshrl.u32 %v2219, 7
    %v2221 = vsub.s32 %v2218, %v2220
    %v2222 = vrot.slane %v2200, %v2221
    %v2224 = vunpack.c.l.s4 1966171168
    %v2225 = vunpack.c.0.s8 %v2224
    %v2226 = vlaneseq
    %v2227 = vshrl.u32 %v2226, 7
    %v2228 = vsub.s32 %v2225, %v2227
    %v2229 = vrot.slane %v2201, %v2228
    %v2230 = vcombine.high %v2208, %v2208
    %v2231 = vcombine.high %v2215, %v2215
    %v2232 = vcombine.high %v2222, %v2222
    %v2233 = vcombine.high %v2229, %v2229
    %v2234 = vcombine.high %v282, %v282
    %v2236 = vunpack.c.l.s4 1966171168
    %v2237 = vunpack.c.0.s8 %v2236
    %v2238 = vlaneseq
    %v2239 = vshrl.u32 %v2238, 7
    %v2240 = vsub.s32 %v2237, %v2239
    %v2241 = vrot.slane %v282, %v2240
    %v2243 = vunpack.c.l.s4 1966171168
    %v2244 = vunpack.c.0.s8 %v2243
    %v2245 = vlaneseq
    %v2246 = vshrl.u32 %v2245, 7
    %v2247 = vsub.s32 %v2244, %v2246
    %v2248 = vrot.slane %v2234, %v2247
    %v2249 = vcombine.high %v2241, %v2241
    %v2250 = vcombine.high %v2248, %v2248
    %v2252 = vunpack.c.l.s4 1966171168
    %v2253 = vunpack.c.0.s8 %v2252
    %v2254 = vlaneseq
    %v2255 = vshrl.u32 %v2254, 7
    %v2256 = vsub.s32 %v2253, %v2255
    %v2257 = vrot.slane %v2241, %v2256
    %v2259 = vunpack.c.l.s4 1966171168
    %v2260 = vunpack.c.0.s8 %v2259
    %v2261 = vlaneseq
    %v2262 = vshrl.u32 %v2261, 7
    %v2263 = vsub.s32 %v2260, %v2262
    %v2264 = vrot.slane %v2248, %v2263
    %v2266 = vunpack.c.l.s4 1966171168
    %v2267 = vunpack.c.0.s8 %v2266
    %v2268 = vlaneseq
    %v2269 = vshrl.u32 %v2268, 7
    %v2270 = vsub.s32 %v2267, %v2269
    %v2271 = vrot.slane %v2249, %v2270
    %v2273 = vunpack.c.l.s4 1966171168
    %v2274 = vunpack.c.0.s8 %v2273
    %v2275 = vlaneseq
    %v2276 = vshrl.u32 %v2275, 7
    %v2277 = vsub.s32 %v2274, %v2276
    %v2278 = vrot.slane %v2250, %v2277
    %v2279 = vcombine.high %v2257, %v2257
    %v2280 = vcombine.high %v2264, %v2264
    %v2281 = vcombine.high %v2271, %v2271
    %v2282 = vcombine.high %v2278, %v2278
    %v2283 = vcombine.high %v291, %v291
    %v2285 = vunpack.c.l.s4 1966171168
    %v2286 = vunpack.c.0.s8 %v2285
    %v2287 = vlaneseq
    %v2288 = vshrl.u32 %v2287, 7
    %v2289 = vsub.s32 %v2286, %v2288
    %v2290 = vrot.slane %v291, %v2289
    %v2292 = vunpack.c.l.s4 1966171168
    %v2293 = vunpack.c.0.s8 %v2292
    %v2294 = vlaneseq
    %v2295 = vshrl.u32 %v2294, 7
    %v2296 = vsub.s32 %v2293, %v2295
    %v2297 = vrot.slane %v2283, %v2296
    %v2298 = vcombine.high %v2290, %v2290
    %v2299 = vcombine.high %v2297, %v2297
    %v2301 = vunpack.c.l.s4 1966171168
    %v2302 = vunpack.c.0.s8 %v2301
    %v2303 = vlaneseq
    %v2304 = vshrl.u32 %v2303, 7
    %v2305 = vsub.s32 %v2302, %v2304
    %v2306 = vrot.slane %v2290, %v2305
    %v2308 = vunpack.c.l.s4 1966171168
    %v2309 = vunpack.c.0.s8 %v2308
    %v2310 = vlaneseq
    %v2311 = vshrl.u32 %v2310, 7
    %v2312 = vsub.s32 %v2309, %v2311
    %v2313 = vrot.slane %v2297, %v2312
    %v2315 = vunpack.c.l.s4 1966171168
    %v2316 = vunpack.c.0.s8 %v2315
    %v2317 = vlaneseq
    %v2318 = vshrl.u32 %v2317, 7
    %v2319 = vsub.s32 %v2316, %v2318
    %v2320 = vrot.slane %v2298, %v2319
    %v2322 = vunpack.c.l.s4 1966171168
    %v2323 = vunpack.c.0.s8 %v2322
    %v2324 = vlaneseq
    %v2325 = vshrl.u32 %v2324, 7
    %v2326 = vsub.s32 %v2323, %v2325
    %v2327 = vrot.slane %v2299, %v2326
    %v2328 = vcombine.high %v2306, %v2306
    %v2329 = vcombine.high %v2313, %v2313
    %v2330 = vcombine.high %v2320, %v2320
    %v2331 = vcombine.high %v2327, %v2327
    %v2332 = vcombine.high %v300, %v300
    %v2334 = vunpack.c.l.s4 1966171168
    %v2335 = vunpack.c.0.s8 %v2334
    %v2336 = vlaneseq
    %v2337 = vshrl.u32 %v2336, 7
    %v2338 = vsub.s32 %v2335, %v2337
    %v2339 = vrot.slane %v300, %v2338
    %v2341 = vunpack.c.l.s4 1966171168
    %v2342 = vunpack.c.0.s8 %v2341
    %v2343 = vlaneseq
    %v2344 = vshrl.u32 %v2343, 7
    %v2345 = vsub.s32 %v2342, %v2344
    %v2346 = vrot.slane %v2332, %v2345
    %v2347 = vcombine.high %v2339, %v2339
    %v2348 = vcombine.high %v2346, %v2346
    %v2350 = vunpack.c.l.s4 1966171168
    %v2351 = vunpack.c.0.s8 %v2350
    %v2352 = vlaneseq
    %v2353 = vshrl.u32 %v2352, 7
    %v2354 = vsub.s32 %v2351, %v2353
    %v2355 = vrot.slane %v2339, %v2354
    %v2357 = vunpack.c.l.s4 1966171168
    %v2358 = vunpack.c.0.s8 %v2357
    %v2359 = vlaneseq
    %v2360 = vshrl.u32 %v2359, 7
    %v2361 = vsub.s32 %v2358, %v2360
    %v2362 = vrot.slane %v2346, %v2361
    %v2364 = vunpack.c.l.s4 1966171168
    %v2365 = vunpack.c.0.s8 %v2364
    %v2366 = vlaneseq
    %v2367 = vshrl.u32 %v2366, 7
    %v2368 = vsub.s32 %v2365, %v2367
    %v2369 = vrot.slane %v2347, %v2368
    %v2371 = vunpack.c.l.s4 1966171168
    %v2372 = vunpack.c.0.s8 %v2371
    %v2373 = vlaneseq
    %v2374 = vshrl.u32 %v2373, 7
    %v2375 = vsub.s32 %v2372, %v2374
    %v2376 = vrot.slane %v2348, %v2375
    %v2377 = vcombine.high %v2355, %v2355
    %v2378 = vcombine.high %v2362, %v2362
    %v2379 = vcombine.high %v2369, %v2369
    %v2380 = vcombine.high %v2376, %v2376
    %v2381 = vcombine.high %v309, %v309
    %v2383 = vunpack.c.l.s4 1966171168
    %v2384 = vunpack.c.0.s8 %v2383
    %v2385 = vlaneseq
    %v2386 = vshrl.u32 %v2385, 7
    %v2387 = vsub.s32 %v2384, %v2386
    %v2388 = vrot.slane %v309, %v2387
    %v2390 = vunpack.c.l.s4 1966171168
    %v2391 = vunpack.c.0.s8 %v2390
    %v2392 = vlaneseq
    %v2393 = vshrl.u32 %v2392, 7
    %v2394 = vsub.s32 %v2391, %v2393
    %v2395 = vrot.slane %v2381, %v2394
    %v2396 = vcombine.high %v2388, %v2388
    %v2397 = vcombine.high %v2395, %v2395
    %v2399 = vunpack.c.l.s4 1966171168
    %v2400 = vunpack.c.0.s8 %v2399
    %v2401 = vlaneseq
    %v2402 = vshrl.u32 %v2401, 7
    %v2403 = vsub.s32 %v2400, %v2402
    %v2404 = vrot.slane %v2388, %v2403
    %v2406 = vunpack.c.l.s4 1966171168
    %v2407 = vunpack.c.0.s8 %v2406
    %v2408 = vlaneseq
    %v2409 = vshrl.u32 %v2408, 7
    %v2410 = vsub.s32 %v2407, %v2409
    %v2411 = vrot.slane %v2395, %v2410
    %v2413 = vunpack.c.l.s4 1966171168
    %v2414 = vunpack.c.0.s8 %v2413
    %v2415 = vlaneseq
    %v2416 = vshrl.u32 %v2415, 7
    %v2417 = vsub.s32 %v2414, %v2416
    %v2418 = vrot.slane %v2396, %v2417
    %v2420 = vunpack.c.l.s4 1966171168
    %v2421 = vunpack.c.0.s8 %v2420
    %v2422 = vlaneseq
    %v2423 = vshrl.u32 %v2422, 7
    %v2424 = vsub.s32 %v2421, %v2423
    %v2425 = vrot.slane %v2397, %v2424
    %v2426 = vcombine.high %v2404, %v2404
    %v2427 = vcombine.high %v2411, %v2411
    %v2428 = vcombine.high %v2418, %v2418
    %v2429 = vcombine.high %v2425, %v2425
    %v2430 = vcombine.high %v318, %v318
    %v2432 = vunpack.c.l.s4 1966171168
    %v2433 = vunpack.c.0.s8 %v2432
    %v2434 = vlaneseq
    %v2435 = vshrl.u32 %v2434, 7
    %v2436 = vsub.s32 %v2433, %v2435
    %v2437 = vrot.slane %v318, %v2436
    %v2439 = vunpack.c.l.s4 1966171168
    %v2440 = vunpack.c.0.s8 %v2439
    %v2441 = vlaneseq
    %v2442 = vshrl.u32 %v2441, 7
    %v2443 = vsub.s32 %v2440, %v2442
    %v2444 = vrot.slane %v2430, %v2443
    %v2445 = vcombine.high %v2437, %v2437
    %v2446 = vcombine.high %v2444, %v2444
    %v2448 = vunpack.c.l.s4 1966171168
    %v2449 = vunpack.c.0.s8 %v2448
    %v2450 = vlaneseq
    %v2451 = vshrl.u32 %v2450, 7
    %v2452 = vsub.s32 %v2449, %v2451
    %v2453 = vrot.slane %v2437, %v2452
    %v2455 = vunpack.c.l.s4 1966171168
    %v2456 = vunpack.c.0.s8 %v2455
    %v2457 = vlaneseq
    %v2458 = vshrl.u32 %v2457, 7
    %v2459 = vsub.s32 %v2456, %v2458
    %v2460 = vrot.slane %v2444, %v2459
    %v2462 = vunpack.c.l.s4 1966171168
    %v2463 = vunpack.c.0.s8 %v2462
    %v2464 = vlaneseq
    %v2465 = vshrl.u32 %v2464, 7
    %v2466 = vsub.s32 %v2463, %v2465
    %v2467 = vrot.slane %v2445, %v2466
    %v2469 = vunpack.c.l.s4 1966171168
    %v2470 = vunpack.c.0.s8 %v2469
    %v2471 = vlaneseq
    %v2472 = vshrl.u32 %v2471, 7
    %v2473 = vsub.s32 %v2470, %v2472
    %v2474 = vrot.slane %v2446, %v2473
    %v2475 = vcombine.high %v2453, %v2453
    %v2476 = vcombine.high %v2460, %v2460
    %v2477 = vcombine.high %v2467, %v2467
    %v2478 = vcombine.high %v2474, %v2474
    %v2479 = vcombine.high %v327, %v327
    %v2481 = vunpack.c.l.s4 1966171168
    %v2482 = vunpack.c.0.s8 %v2481
    %v2483 = vlaneseq
    %v2484 = vshrl.u32 %v2483, 7
    %v2485 = vsub.s32 %v2482, %v2484
    %v2486 = vrot.slane %v327, %v2485
    %v2488 = vunpack.c.l.s4 1966171168
    %v2489 = vunpack.c.0.s8 %v2488
    %v2490 = vlaneseq
    %v2491 = vshrl.u32 %v2490, 7
    %v2492 = vsub.s32 %v2489, %v2491
    %v2493 = vrot.slane %v2479, %v2492
    %v2494 = vcombine.high %v2486, %v2486
    %v2495 = vcombine.high %v2493, %v2493
    %v2497 = vunpack.c.l.s4 1966171168
    %v2498 = vunpack.c.0.s8 %v2497
    %v2499 = vlaneseq
    %v2500 = vshrl.u32 %v2499, 7
    %v2501 = vsub.s32 %v2498, %v2500
    %v2502 = vrot.slane %v2486, %v2501
    %v2504 = vunpack.c.l.s4 1966171168
    %v2505 = vunpack.c.0.s8 %v2504
    %v2506 = vlaneseq
    %v2507 = vshrl.u32 %v2506, 7
    %v2508 = vsub.s32 %v2505, %v2507
    %v2509 = vrot.slane %v2493, %v2508
    %v2511 = vunpack.c.l.s4 1966171168
    %v2512 = vunpack.c.0.s8 %v2511
    %v2513 = vlaneseq
    %v2514 = vshrl.u32 %v2513, 7
    %v2515 = vsub.s32 %v2512, %v2514
    %v2516 = vrot.slane %v2494, %v2515
    %v2518 = vunpack.c.l.s4 1966171168
    %v2519 = vunpack.c.0.s8 %v2518
    %v2520 = vlaneseq
    %v2521 = vshrl.u32 %v2520, 7
    %v2522 = vsub.s32 %v2519, %v2521
    %v2523 = vrot.slane %v2495, %v2522
    %v2524 = vcombine.high %v2502, %v2502
    %v2525 = vcombine.high %v2509, %v2509
    %v2526 = vcombine.high %v2516, %v2516
    %v2527 = vcombine.high %v2523, %v2523
    %v2528 = vcombine.high %v336, %v336
    %v2530 = vunpack.c.l.s4 1966171168
    %v2531 = vunpack.c.0.s8 %v2530
    %v2532 = vlaneseq
    %v2533 = vshrl.u32 %v2532, 7
    %v2534 = vsub.s32 %v2531, %v2533
    %v2535 = vrot.slane %v336, %v2534
    %v2537 = vunpack.c.l.s4 1966171168
    %v2538 = vunpack.c.0.s8 %v2537
    %v2539 = vlaneseq
    %v2540 = vshrl.u32 %v2539, 7
    %v2541 = vsub.s32 %v2538, %v2540
    %v2542 = vrot.slane %v2528, %v2541
    %v2543 = vcombine.high %v2535, %v2535
    %v2544 = vcombine.high %v2542, %v2542
    %v2546 = vunpack.c.l.s4 1966171168
    %v2547 = vunpack.c.0.s8 %v2546
    %v2548 = vlaneseq
    %v2549 = vshrl.u32 %v2548, 7
    %v2550 = vsub.s32 %v2547, %v2549
    %v2551 = vrot.slane %v2535, %v2550
    %v2553 = vunpack.c.l.s4 1966171168
    %v2554 = vunpack.c.0.s8 %v2553
    %v2555 = vlaneseq
    %v2556 = vshrl.u32 %v2555, 7
    %v2557 = vsub.s32 %v2554, %v2556
    %v2558 = vrot.slane %v2542, %v2557
    %v2560 = vunpack.c.l.s4 1966171168
    %v2561 = vunpack.c.0.s8 %v2560
    %v2562 = vlaneseq
    %v2563 = vshrl.u32 %v2562, 7
    %v2564 = vsub.s32 %v2561, %v2563
    %v2565 = vrot.slane %v2543, %v2564
    %v2567 = vunpack.c.l.s4 1966171168
    %v2568 = vunpack.c.0.s8 %v2567
    %v2569 = vlaneseq
    %v2570 = vshrl.u32 %v2569, 7
    %v2571 = vsub.s32 %v2568, %v2570
    %v2572 = vrot.slane %v2544, %v2571
    %v2573 = vcombine.high %v2551, %v2551
    %v2574 = vcombine.high %v2558, %v2558
    %v2575 = vcombine.high %v2565, %v2565
    %v2576 = vcombine.high %v2572, %v2572
    %v2577 = vcombine.high %v345, %v345
    %v2579 = vunpack.c.l.s4 1966171168
    %v2580 = vunpack.c.0.s8 %v2579
    %v2581 = vlaneseq
    %v2582 = vshrl.u32 %v2581, 7
    %v2583 = vsub.s32 %v2580, %v2582
    %v2584 = vrot.slane %v345, %v2583
    %v2586 = vunpack.c.l.s4 1966171168
    %v2587 = vunpack.c.0.s8 %v2586
    %v2588 = vlaneseq
    %v2589 = vshrl.u32 %v2588, 7
    %v2590 = vsub.s32 %v2587, %v2589
    %v2591 = vrot.slane %v2577, %v2590
    %v2592 = vcombine.high %v2584, %v2584
    %v2593 = vcombine.high %v2591, %v2591
    %v2595 = vunpack.c.l.s4 1966171168
    %v2596 = vunpack.c.0.s8 %v2595
    %v2597 = vlaneseq
    %v2598 = vshrl.u32 %v2597, 7
    %v2599 = vsub.s32 %v2596, %v2598
    %v2600 = vrot.slane %v2584, %v2599
    %v2602 = vunpack.c.l.s4 1966171168
    %v2603 = vunpack.c.0.s8 %v2602
    %v2604 = vlaneseq
    %v2605 = vshrl.u32 %v2604, 7
    %v2606 = vsub.s32 %v2603, %v2605
    %v2607 = vrot.slane %v2591, %v2606
    %v2609 = vunpack.c.l.s4 1966171168
    %v2610 = vunpack.c.0.s8 %v2609
    %v2611 = vlaneseq
    %v2612 = vshrl.u32 %v2611, 7
    %v2613 = vsub.s32 %v2610, %v2612
    %v2614 = vrot.slane %v2592, %v2613
    %v2616 = vunpack.c.l.s4 1966171168
    %v2617 = vunpack.c.0.s8 %v2616
    %v2618 = vlaneseq
    %v2619 = vshrl.u32 %v2618, 7
    %v2620 = vsub.s32 %v2617, %v2619
    %v2621 = vrot.slane %v2593, %v2620
    %v2622 = vcombine.high %v2600, %v2600
    %v2623 = vcombine.high %v2607, %v2607
    %v2624 = vcombine.high %v2614, %v2614
    %v2625 = vcombine.high %v2621, %v2621
    %v2626 = vcombine.high %v354, %v354
    %v2628 = vunpack.c.l.s4 1966171168
    %v2629 = vunpack.c.0.s8 %v2628
    %v2630 = vlaneseq
    %v2631 = vshrl.u32 %v2630, 7
    %v2632 = vsub.s32 %v2629, %v2631
    %v2633 = vrot.slane %v354, %v2632
    %v2635 = vunpack.c.l.s4 1966171168
    %v2636 = vunpack.c.0.s8 %v2635
    %v2637 = vlaneseq
    %v2638 = vshrl.u32 %v2637, 7
    %v2639 = vsub.s32 %v2636, %v2638
    %v2640 = vrot.slane %v2626, %v2639
    %v2641 = vcombine.high %v2633, %v2633
    %v2642 = vcombine.high %v2640, %v2640
    %v2644 = vunpack.c.l.s4 1966171168
    %v2645 = vunpack.c.0.s8 %v2644
    %v2646 = vlaneseq
    %v2647 = vshrl.u32 %v2646, 7
    %v2648 = vsub.s32 %v2645, %v2647
    %v2649 = vrot.slane %v2633, %v2648
    %v2651 = vunpack.c.l.s4 1966171168
    %v2652 = vunpack.c.0.s8 %v2651
    %v2653 = vlaneseq
    %v2654 = vshrl.u32 %v2653, 7
    %v2655 = vsub.s32 %v2652, %v2654
    %v2656 = vrot.slane %v2640, %v2655
    %v2658 = vunpack.c.l.s4 1966171168
    %v2659 = vunpack.c.0.s8 %v2658
    %v2660 = vlaneseq
    %v2661 = vshrl.u32 %v2660, 7
    %v2662 = vsub.s32 %v2659, %v2661
    %v2663 = vrot.slane %v2641, %v2662
    %v2665 = vunpack.c.l.s4 1966171168
    %v2666 = vunpack.c.0.s8 %v2665
    %v2667 = vlaneseq
    %v2668 = vshrl.u32 %v2667, 7
    %v2669 = vsub.s32 %v2666, %v2668
    %v2670 = vrot.slane %v2642, %v2669
    %v2671 = vcombine.high %v2649, %v2649
    %v2672 = vcombine.high %v2656, %v2656
    %v2673 = vcombine.high %v2663, %v2663
    %v2674 = vcombine.high %v2670, %v2670
    %v2675 = vcombine.high %v363, %v363
    %v2677 = vunpack.c.l.s4 1966171168
    %v2678 = vunpack.c.0.s8 %v2677
    %v2679 = vlaneseq
    %v2680 = vshrl.u32 %v2679, 7
    %v2681 = vsub.s32 %v2678, %v2680
    %v2682 = vrot.slane %v363, %v2681
    %v2684 = vunpack.c.l.s4 1966171168
    %v2685 = vunpack.c.0.s8 %v2684
    %v2686 = vlaneseq
    %v2687 = vshrl.u32 %v2686, 7
    %v2688 = vsub.s32 %v2685, %v2687
    %v2689 = vrot.slane %v2675, %v2688
    %v2690 = vcombine.high %v2682, %v2682
    %v2691 = vcombine.high %v2689, %v2689
    %v2693 = vunpack.c.l.s4 1966171168
    %v2694 = vunpack.c.0.s8 %v2693
    %v2695 = vlaneseq
    %v2696 = vshrl.u32 %v2695, 7
    %v2697 = vsub.s32 %v2694, %v2696
    %v2698 = vrot.slane %v2682, %v2697
    %v2700 = vunpack.c.l.s4 1966171168
    %v2701 = vunpack.c.0.s8 %v2700
    %v2702 = vlaneseq
    %v2703 = vshrl.u32 %v2702, 7
    %v2704 = vsub.s32 %v2701, %v2703
    %v2705 = vrot.slane %v2689, %v2704
    %v2707 = vunpack.c.l.s4 1966171168
    %v2708 = vunpack.c.0.s8 %v2707
    %v2709 = vlaneseq
    %v2710 = vshrl.u32 %v2709, 7
    %v2711 = vsub.s32 %v2708, %v2710
    %v2712 = vrot.slane %v2690, %v2711
    %v2714 = vunpack.c.l.s4 1966171168
    %v2715 = vunpack.c.0.s8 %v2714
    %v2716 = vlaneseq
    %v2717 = vshrl.u32 %v2716, 7
    %v2718 = vsub.s32 %v2715, %v2717
    %v2719 = vrot.slane %v2691, %v2718
    %v2720 = vcombine.high %v2698, %v2698
    %v2721 = vcombine.high %v2705, %v2705
    %v2722 = vcombine.high %v2712, %v2712
    %v2723 = vcombine.high %v2719, %v2719
    %v2724 = vcombine.high %v372, %v372
    %v2726 = vunpack.c.l.s4 1966171168
    %v2727 = vunpack.c.0.s8 %v2726
    %v2728 = vlaneseq
    %v2729 = vshrl.u32 %v2728, 7
    %v2730 = vsub.s32 %v2727, %v2729
    %v2731 = vrot.slane %v372, %v2730
    %v2733 = vunpack.c.l.s4 1966171168
    %v2734 = vunpack.c.0.s8 %v2733
    %v2735 = vlaneseq
    %v2736 = vshrl.u32 %v2735, 7
    %v2737 = vsub.s32 %v2734, %v2736
    %v2738 = vrot.slane %v2724, %v2737
    %v2739 = vcombine.high %v2731, %v2731
    %v2740 = vcombine.high %v2738, %v2738
    %v2742 = vunpack.c.l.s4 1966171168
    %v2743 = vunpack.c.0.s8 %v2742
    %v2744 = vlaneseq
    %v2745 = vshrl.u32 %v2744, 7
    %v2746 = vsub.s32 %v2743, %v2745
    %v2747 = vrot.slane %v2731, %v2746
    %v2749 = vunpack.c.l.s4 1966171168
    %v2750 = vunpack.c.0.s8 %v2749
    %v2751 = vlaneseq
    %v2752 = vshrl.u32 %v2751, 7
    %v2753 = vsub.s32 %v2750, %v2752
    %v2754 = vrot.slane %v2738, %v2753
    %v2756 = vunpack.c.l.s4 1966171168
    %v2757 = vunpack.c.0.s8 %v2756
    %v2758 = vlaneseq
    %v2759 = vshrl.u32 %v2758, 7
    %v2760 = vsub.s32 %v2757, %v2759
    %v2761 = vrot.slane %v2739, %v2760
    %v2763 = vunpack.c.l.s4 1966171168
    %v2764 = vunpack.c.0.s8 %v2763
    %v2765 = vlaneseq
    %v2766 = vshrl.u32 %v2765, 7
    %v2767 = vsub.s32 %v2764, %v2766
    %v2768 = vrot.slane %v2740, %v2767
    %v2769 = vcombine.high %v2747, %v2747
    %v2770 = vcombine.high %v2754, %v2754
    %v2771 = vcombine.high %v2761, %v2761
    %v2772 = vcombine.high %v2768, %v2768
    %v2773 = vcombine.high %v381, %v381
    %v2775 = vunpack.c.l.s4 1966171168
    %v2776 = vunpack.c.0.s8 %v2775
    %v2777 = vlaneseq
    %v2778 = vshrl.u32 %v2777, 7
    %v2779 = vsub.s32 %v2776, %v2778
    %v2780 = vrot.slane %v381, %v2779
    %v2782 = vunpack.c.l.s4 1966171168
    %v2783 = vunpack.c.0.s8 %v2782
    %v2784 = vlaneseq
    %v2785 = vshrl.u32 %v2784, 7
    %v2786 = vsub.s32 %v2783, %v2785
    %v2787 = vrot.slane %v2773, %v2786
    %v2788 = vcombine.high %v2780, %v2780
    %v2789 = vcombine.high %v2787, %v2787
    %v2791 = vunpack.c.l.s4 1966171168
    %v2792 = vunpack.c.0.s8 %v2791
    %v2793 = vlaneseq
    %v2794 = vshrl.u32 %v2793, 7
    %v2795 = vsub.s32 %v2792, %v2794
    %v2796 = vrot.slane %v2780, %v2795
    %v2798 = vunpack.c.l.s4 1966171168
    %v2799 = vunpack.c.0.s8 %v2798
    %v2800 = vlaneseq
    %v2801 = vshrl.u32 %v2800, 7
    %v2802 = vsub.s32 %v2799, %v2801
    %v2803 = vrot.slane %v2787, %v2802
    %v2805 = vunpack.c.l.s4 1966171168
    %v2806 = vunpack.c.0.s8 %v2805
    %v2807 = vlaneseq
    %v2808 = vshrl.u32 %v2807, 7
    %v2809 = vsub.s32 %v2806, %v2808
    %v2810 = vrot.slane %v2788, %v2809
    %v2812 = vunpack.c.l.s4 1966171168
    %v2813 = vunpack.c.0.s8 %v2812
    %v2814 = vlaneseq
    %v2815 = vshrl.u32 %v2814, 7
    %v2816 = vsub.s32 %v2813, %v2815
    %v2817 = vrot.slane %v2789, %v2816
    %v2818 = vcombine.high %v2796, %v2796
    %v2819 = vcombine.high %v2803, %v2803
    %v2820 = vcombine.high %v2810, %v2810
    %v2821 = vcombine.high %v2817, %v2817
    %v2822 = vcombine.high %v390, %v390
    %v2824 = vunpack.c.l.s4 1966171168
    %v2825 = vunpack.c.0.s8 %v2824
    %v2826 = vlaneseq
    %v2827 = vshrl.u32 %v2826, 7
    %v2828 = vsub.s32 %v2825, %v2827
    %v2829 = vrot.slane %v390, %v2828
    %v2831 = vunpack.c.l.s4 1966171168
    %v2832 = vunpack.c.0.s8 %v2831
    %v2833 = vlaneseq
    %v2834 = vshrl.u32 %v2833, 7
    %v2835 = vsub.s32 %v2832, %v2834
    %v2836 = vrot.slane %v2822, %v2835
    %v2837 = vcombine.high %v2829, %v2829
    %v2838 = vcombine.high %v2836, %v2836
    %v2840 = vunpack.c.l.s4 1966171168
    %v2841 = vunpack.c.0.s8 %v2840
    %v2842 = vlaneseq
    %v2843 = vshrl.u32 %v2842, 7
    %v2844 = vsub.s32 %v2841, %v2843
    %v2845 = vrot.slane %v2829, %v2844
    %v2847 = vunpack.c.l.s4 1966171168
    %v2848 = vunpack.c.0.s8 %v2847
    %v2849 = vlaneseq
    %v2850 = vshrl.u32 %v2849, 7
    %v2851 = vsub.s32 %v2848, %v2850
    %v2852 = vrot.slane %v2836, %v2851
    %v2854 = vunpack.c.l.s4 1966171168
    %v2855 = vunpack.c.0.s8 %v2854
    %v2856 = vlaneseq
    %v2857 = vshrl.u32 %v2856, 7
    %v2858 = vsub.s32 %v2855, %v2857
    %v2859 = vrot.slane %v2837, %v2858
    %v2861 = vunpack.c.l.s4 1966171168
    %v2862 = vunpack.c.0.s8 %v2861
    %v2863 = vlaneseq
    %v2864 = vshrl.u32 %v2863, 7
    %v2865 = vsub.s32 %v2862, %v2864
    %v2866 = vrot.slane %v2838, %v2865
    %v2867 = vcombine.high %v2845, %v2845
    %v2868 = vcombine.high %v2852, %v2852
    %v2869 = vcombine.high %v2859, %v2859
    %v2870 = vcombine.high %v2866, %v2866
    %v2871 = vcombine.high %v399, %v399
    %v2873 = vunpack.c.l.s4 1966171168
    %v2874 = vunpack.c.0.s8 %v2873
    %v2875 = vlaneseq
    %v2876 = vshrl.u32 %v2875, 7
    %v2877 = vsub.s32 %v2874, %v2876
    %v2878 = vrot.slane %v399, %v2877
    %v2880 = vunpack.c.l.s4 1966171168
    %v2881 = vunpack.c.0.s8 %v2880
    %v2882 = vlaneseq
    %v2883 = vshrl.u32 %v2882, 7
    %v2884 = vsub.s32 %v2881, %v2883
    %v2885 = vrot.slane %v2871, %v2884
    %v2886 = vcombine.high %v2878, %v2878
    %v2887 = vcombine.high %v2885, %v2885
    %v2889 = vunpack.c.l.s4 1966171168
    %v2890 = vunpack.c.0.s8 %v2889
    %v2891 = vlaneseq
    %v2892 = vshrl.u32 %v2891, 7
    %v2893 = vsub.s32 %v2890, %v2892
    %v2894 = vrot.slane %v2878, %v2893
    %v2896 = vunpack.c.l.s4 1966171168
    %v2897 = vunpack.c.0.s8 %v2896
    %v2898 = vlaneseq
    %v2899 = vshrl.u32 %v2898, 7
    %v2900 = vsub.s32 %v2897, %v2899
    %v2901 = vrot.slane %v2885, %v2900
    %v2903 = vunpack.c.l.s4 1966171168
    %v2904 = vunpack.c.0.s8 %v2903
    %v2905 = vlaneseq
    %v2906 = vshrl.u32 %v2905, 7
    %v2907 = vsub.s32 %v2904, %v2906
    %v2908 = vrot.slane %v2886, %v2907
    %v2910 = vunpack.c.l.s4 1966171168
    %v2911 = vunpack.c.0.s8 %v2910
    %v2912 = vlaneseq
    %v2913 = vshrl.u32 %v2912, 7
    %v2914 = vsub.s32 %v2911, %v2913
    %v2915 = vrot.slane %v2887, %v2914
    %v2916 = vcombine.high %v2894, %v2894
    %v2917 = vcombine.high %v2901, %v2901
    %v2918 = vcombine.high %v2908, %v2908
    %v2919 = vcombine.high %v2915, %v2915
    %v2920 = vcombine.high %v408, %v408
    %v2922 = vunpack.c.l.s4 1966171168
    %v2923 = vunpack.c.0.s8 %v2922
    %v2924 = vlaneseq
    %v2925 = vshrl.u32 %v2924, 7
    %v2926 = vsub.s32 %v2923, %v2925
    %v2927 = vrot.slane %v408, %v2926
    %v2929 = vunpack.c.l.s4 1966171168
    %v2930 = vunpack.c.0.s8 %v2929
    %v2931 = vlaneseq
    %v2932 = vshrl.u32 %v2931, 7
    %v2933 = vsub.s32 %v2930, %v2932
    %v2934 = vrot.slane %v2920, %v2933
    %v2935 = vcombine.high %v2927, %v2927
    %v2936 = vcombine.high %v2934, %v2934
    %v2938 = vunpack.c.l.s4 1966171168
    %v2939 = vunpack.c.0.s8 %v2938
    %v2940 = vlaneseq
    %v2941 = vshrl.u32 %v2940, 7
    %v2942 = vsub.s32 %v2939, %v2941
    %v2943 = vrot.slane %v2927, %v2942
    %v2945 = vunpack.c.l.s4 1966171168
    %v2946 = vunpack.c.0.s8 %v2945
    %v2947 = vlaneseq
    %v2948 = vshrl.u32 %v2947, 7
    %v2949 = vsub.s32 %v2946, %v2948
    %v2950 = vrot.slane %v2934, %v2949
    %v2952 = vunpack.c.l.s4 1966171168
    %v2953 = vunpack.c.0.s8 %v2952
    %v2954 = vlaneseq
    %v2955 = vshrl.u32 %v2954, 7
    %v2956 = vsub.s32 %v2953, %v2955
    %v2957 = vrot.slane %v2935, %v2956
    %v2959 = vunpack.c.l.s4 1966171168
    %v2960 = vunpack.c.0.s8 %v2959
    %v2961 = vlaneseq
    %v2962 = vshrl.u32 %v2961, 7
    %v2963 = vsub.s32 %v2960, %v2962
    %v2964 = vrot.slane %v2936, %v2963
    %v2965 = vcombine.high %v2943, %v2943
    %v2966 = vcombine.high %v2950, %v2950
    %v2967 = vcombine.high %v2957, %v2957
    %v2968 = vcombine.high %v2964, %v2964
    %v2969 = vcombine.low %v2208, %v2222
    %v2970 = vcombine.low %v2230, %v2232
    %v2971 = vcombine.low %v2215, %v2229
    %v2972 = vcombine.low %v2231, %v2233
    %v2974 = vunpack.c.l.s4 1966171168
    %v2975 = vunpack.c.0.s8 %v2974
    %v2976 = vlaneseq
    %v2977 = vshrl.u32 %v2976, 7
    %v2978 = vsub.s32 %v2975, %v2977
    %v2979 = vrot.slane %v2969, %v2978
    %v2981 = vunpack.c.l.s4 1966171168
    %v2982 = vunpack.c.0.s8 %v2981
    %v2983 = vlaneseq
    %v2984 = vshrl.u32 %v2983, 7
    %v2985 = vsub.s32 %v2982, %v2984
    %v2986 = vrot.slane %v2970, %v2985
    %v2988 = vunpack.c.l.s4 1966171168
    %v2989 = vunpack.c.0.s8 %v2988
    %v2990 = vlaneseq
    %v2991 = vshrl.u32 %v2990, 7
    %v2992 = vsub.s32 %v2989, %v2991
    %v2993 = vrot.slane %v2971, %v2992
    %v2995 = vunpack.c.l.s4 1966171168
    %v2996 = vunpack.c.0.s8 %v2995
    %v2997 = vlaneseq
    %v2998 = vshrl.u32 %v2997, 7
    %v2999 = vsub.s32 %v2996, %v2998
    %v3000 = vrot.slane %v2972, %v2999
    %v3001 = vcombine.low %v2979, %v2986
    %v3002 = vcombine.low %v2993, %v3000
    %v3004 = vunpack.c.l.s4 1966171168
    %v3005 = vunpack.c.0.s8 %v3004
    %v3006 = vlaneseq
    %v3007 = vshrl.u32 %v3006, 7
    %v3008 = vsub.s32 %v3005, %v3007
    %v3009 = vrot.slane %v3001, %v3008
    %v3011 = vunpack.c.l.s4 1966171168
    %v3012 = vunpack.c.0.s8 %v3011
    %v3013 = vlaneseq
    %v3014 = vshrl.u32 %v3013, 7
    %v3015 = vsub.s32 %v3012, %v3014
    %v3016 = vrot.slane %v3002, %v3015
    %v3017 = vcombine.low %v3009, %v3016
    %v3018 = vcombine.low %v2257, %v2271
    %v3019 = vcombine.low %v2279, %v2281
    %v3020 = vcombine.low %v2264, %v2278
    %v3021 = vcombine.low %v2280, %v2282
    %v3023 = vunpack.c.l.s4 1966171168
    %v3024 = vunpack.c.0.s8 %v3023
    %v3025 = vlaneseq
    %v3026 = vshrl.u32 %v3025, 7
    %v3027 = vsub.s32 %v3024, %v3026
    %v3028 = vrot.slane %v3018, %v3027
    %v3030 = vunpack.c.l.s4 1966171168
    %v3031 = vunpack.c.0.s8 %v3030
    %v3032 = vlaneseq
    %v3033 = vshrl.u32 %v3032, 7
    %v3034 = vsub.s32 %v3031, %v3033
    %v3035 = vrot.slane %v3019, %v3034
    %v3037 = vunpack.c.l.s4 1966171168
    %v3038 = vunpack.c.0.s8 %v3037
    %v3039 = vlaneseq
    %v3040 = vshrl.u32 %v3039, 7
    %v3041 = vsub.s32 %v3038, %v3040
    %v3042 = vrot.slane %v3020, %v3041
    %v3044 = vunpack.c.l.s4 1966171168
    %v3045 = vunpack.c.0.s8 %v3044
    %v3046 = vlaneseq
    %v3047 = vshrl.u32 %v3046, 7
    %v3048 = vsub.s32 %v3045, %v3047
    %v3049 = vrot.slane %v3021, %v3048
    %v3050 = vcombine.low %v3028, %v3035
    %v3051 = vcombine.low %v3042, %v3049
    %v3053 = vunpack.c.l.s4 1966171168
    %v3054 = vunpack.c.0.s8 %v3053
    %v3055 = vlaneseq
    %v3056 = vshrl.u32 %v3055, 7
    %v3057 = vsub.s32 %v3054, %v3056
    %v3058 = vrot.slane %v3050, %v3057
    %v3060 = vunpack.c.l.s4 1966171168
    %v3061 = vunpack.c.0.s8 %v3060
    %v3062 = vlaneseq
    %v3063 = vshrl.u32 %v3062, 7
    %v3064 = vsub.s32 %v3061, %v3063
    %v3065 = vrot.slane %v3051, %v3064
    %v3066 = vcombine.low %v3058, %v3065
    %v3067 = vcombine.low %v2306, %v2320
    %v3068 = vcombine.low %v2328, %v2330
    %v3069 = vcombine.low %v2313, %v2327
    %v3070 = vcombine.low %v2329, %v2331
    %v3072 = vunpack.c.l.s4 1966171168
    %v3073 = vunpack.c.0.s8 %v3072
    %v3074 = vlaneseq
    %v3075 = vshrl.u32 %v3074, 7
    %v3076 = vsub.s32 %v3073, %v3075
    %v3077 = vrot.slane %v3067, %v3076
    %v3079 = vunpack.c.l.s4 1966171168
    %v3080 = vunpack.c.0.s8 %v3079
    %v3081 = vlaneseq
    %v3082 = vshrl.u32 %v3081, 7
    %v3083 = vsub.s32 %v3080, %v3082
    %v3084 = vrot.slane %v3068, %v3083
    %v3086 = vunpack.c.l.s4 1966171168
    %v3087 = vunpack.c.0.s8 %v3086
    %v3088 = vlaneseq
    %v3089 = vshrl.u32 %v3088, 7
    %v3090 = vsub.s32 %v3087, %v3089
    %v3091 = vrot.slane %v3069, %v3090
    %v3093 = vunpack.c.l.s4 1966171168
    %v3094 = vunpack.c.0.s8 %v3093
    %v3095 = vlaneseq
    %v3096 = vshrl.u32 %v3095, 7
    %v3097 = vsub.s32 %v3094, %v3096
    %v3098 = vrot.slane %v3070, %v3097
    %v3099 = vcombine.low %v3077, %v3084
    %v3100 = vcombine.low %v3091, %v3098
    %v3102 = vunpack.c.l.s4 1966171168
    %v3103 = vunpack.c.0.s8 %v3102
    %v3104 = vlaneseq
    %v3105 = vshrl.u32 %v3104, 7
    %v3106 = vsub.s32 %v3103, %v3105
    %v3107 = vrot.slane %v3099, %v3106
    %v3109 = vunpack.c.l.s4 1966171168
    %v3110 = vunpack.c.0.s8 %v3109
    %v3111 = vlaneseq
    %v3112 = vshrl.u32 %v3111, 7
    %v3113 = vsub.s32 %v3110, %v3112
    %v3114 = vrot.slane %v3100, %v3113
    %v3115 = vcombine.low %v3107, %v3114
    %v3116 = vcombine.low %v2355, %v2369
    %v3117 = vcombine.low %v2377, %v2379
    %v3118 = vcombine.low %v2362, %v2376
    %v3119 = vcombine.low %v2378, %v2380
    %v3121 = vunpack.c.l.s4 1966171168
    %v3122 = vunpack.c.0.s8 %v3121
    %v3123 = vlaneseq
    %v3124 = vshrl.u32 %v3123, 7
    %v3125 = vsub.s32 %v3122, %v3124
    %v3126 = vrot.slane %v3116, %v3125
    %v3128 = vunpack.c.l.s4 1966171168
    %v3129 = vunpack.c.0.s8 %v3128
    %v3130 = vlaneseq
    %v3131 = vshrl.u32 %v3130, 7
    %v3132 = vsub.s32 %v3129, %v3131
    %v3133 = vrot.slane %v3117, %v3132
    %v3135 = vunpack.c.l.s4 1966171168
    %v3136 = vunpack.c.0.s8 %v3135
    %v3137 = vlaneseq
    %v3138 = vshrl.u32 %v3137, 7
    %v3139 = vsub.s32 %v3136, %v3138
    %v3140 = vrot.slane %v3118, %v3139
    %v3142 = vunpack.c.l.s4 1966171168
    %v3143 = vunpack.c.0.s8 %v3142
    %v3144 = vlaneseq
    %v3145 = vshrl.u32 %v3144, 7
    %v3146 = vsub.s32 %v3143, %v3145
    %v3147 = vrot.slane %v3119, %v3146
    %v3148 = vcombine.low %v3126, %v3133
    %v3149 = vcombine.low %v3140, %v3147
    %v3151 = vunpack.c.l.s4 1966171168
    %v3152 = vunpack.c.0.s8 %v3151
    %v3153 = vlaneseq
    %v3154 = vshrl.u32 %v3153, 7
    %v3155 = vsub.s32 %v3152, %v3154
    %v3156 = vrot.slane %v3148, %v3155
    %v3158 = vunpack.c.l.s4 1966171168
    %v3159 = vunpack.c.0.s8 %v3158
    %v3160 = vlaneseq
    %v3161 = vshrl.u32 %v3160, 7
    %v3162 = vsub.s32 %v3159, %v3161
    %v3163 = vrot.slane %v3149, %v3162
    %v3164 = vcombine.low %v3156, %v3163
    %v3165 = vcombine.low %v2404, %v2418
    %v3166 = vcombine.low %v2426, %v2428
    %v3167 = vcombine.low %v2411, %v2425
    %v3168 = vcombine.low %v2427, %v2429
    %v3170 = vunpack.c.l.s4 1966171168
    %v3171 = vunpack.c.0.s8 %v3170
    %v3172 = vlaneseq
    %v3173 = vshrl.u32 %v3172, 7
    %v3174 = vsub.s32 %v3171, %v3173
    %v3175 = vrot.slane %v3165, %v3174
    %v3177 = vunpack.c.l.s4 1966171168
    %v3178 = vunpack.c.0.s8 %v3177
    %v3179 = vlaneseq
    %v3180 = vshrl.u32 %v3179, 7
    %v3181 = vsub.s32 %v3178, %v3180
    %v3182 = vrot.slane %v3166, %v3181
    %v3184 = vunpack.c.l.s4 1966171168
    %v3185 = vunpack.c.0.s8 %v3184
    %v3186 = vlaneseq
    %v3187 = vshrl.u32 %v3186, 7
    %v3188 = vsub.s32 %v3185, %v3187
    %v3189 = vrot.slane %v3167, %v3188
    %v3191 = vunpack.c.l.s4 1966171168
    %v3192 = vunpack.c.0.s8 %v3191
    %v3193 = vlaneseq
    %v3194 = vshrl.u32 %v3193, 7
    %v3195 = vsub.s32 %v3192, %v3194
    %v3196 = vrot.slane %v3168, %v3195
    %v3197 = vcombine.low %v3175, %v3182
    %v3198 = vcombine.low %v3189, %v3196
    %v3200 = vunpack.c.l.s4 1966171168
    %v3201 = vunpack.c.0.s8 %v3200
    %v3202 = vlaneseq
    %v3203 = vshrl.u32 %v3202, 7
    %v3204 = vsub.s32 %v3201, %v3203
    %v3205 = vrot.slane %v3197, %v3204
    %v3207 = vunpack.c.l.s4 1966171168
    %v3208 = vunpack.c.0.s8 %v3207
    %v3209 = vlaneseq
    %v3210 = vshrl.u32 %v3209, 7
    %v3211 = vsub.s32 %v3208, %v3210
    %v3212 = vrot.slane %v3198, %v3211
    %v3213 = vcombine.low %v3205, %v3212
    %v3214 = vcombine.low %v2453, %v2467
    %v3215 = vcombine.low %v2475, %v2477
    %v3216 = vcombine.low %v2460, %v2474
    %v3217 = vcombine.low %v2476, %v2478
    %v3219 = vunpack.c.l.s4 1966171168
    %v3220 = vunpack.c.0.s8 %v3219
    %v3221 = vlaneseq
    %v3222 = vshrl.u32 %v3221, 7
    %v3223 = vsub.s32 %v3220, %v3222
    %v3224 = vrot.slane %v3214, %v3223
    %v3226 = vunpack.c.l.s4 1966171168
    %v3227 = vunpack.c.0.s8 %v3226
    %v3228 = vlaneseq
    %v3229 = vshrl.u32 %v3228, 7
    %v3230 = vsub.s32 %v3227, %v3229
    %v3231 = vrot.slane %v3215, %v3230
    %v3233 = vunpack.c.l.s4 1966171168
    %v3234 = vunpack.c.0.s8 %v3233
    %v3235 = vlaneseq
    %v3236 = vshrl.u32 %v3235, 7
    %v3237 = vsub.s32 %v3234, %v3236
    %v3238 = vrot.slane %v3216, %v3237
    %v3240 = vunpack.c.l.s4 1966171168
    %v3241 = vunpack.c.0.s8 %v3240
    %v3242 = vlaneseq
    %v3243 = vshrl.u32 %v3242, 7
    %v3244 = vsub.s32 %v3241, %v3243
    %v3245 = vrot.slane %v3217, %v3244
    %v3246 = vcombine.low %v3224, %v3231
    %v3247 = vcombine.low %v3238, %v3245
    %v3249 = vunpack.c.l.s4 1966171168
    %v3250 = vunpack.c.0.s8 %v3249
    %v3251 = vlaneseq
    %v3252 = vshrl.u32 %v3251, 7
    %v3253 = vsub.s32 %v3250, %v3252
    %v3254 = vrot.slane %v3246, %v3253
    %v3256 = vunpack.c.l.s4 1966171168
    %v3257 = vunpack.c.0.s8 %v3256
    %v3258 = vlaneseq
    %v3259 = vshrl.u32 %v3258, 7
    %v3260 = vsub.s32 %v3257, %v3259
    %v3261 = vrot.slane %v3247, %v3260
    %v3262 = vcombine.low %v3254, %v3261
    %v3263 = vcombine.low %v2502, %v2516
    %v3264 = vcombine.low %v2524, %v2526
    %v3265 = vcombine.low %v2509, %v2523
    %v3266 = vcombine.low %v2525, %v2527
    %v3268 = vunpack.c.l.s4 1966171168
    %v3269 = vunpack.c.0.s8 %v3268
    %v3270 = vlaneseq
    %v3271 = vshrl.u32 %v3270, 7
    %v3272 = vsub.s32 %v3269, %v3271
    %v3273 = vrot.slane %v3263, %v3272
    %v3275 = vunpack.c.l.s4 1966171168
    %v3276 = vunpack.c.0.s8 %v3275
    %v3277 = vlaneseq
    %v3278 = vshrl.u32 %v3277, 7
    %v3279 = vsub.s32 %v3276, %v3278
    %v3280 = vrot.slane %v3264, %v3279
    %v3282 = vunpack.c.l.s4 1966171168
    %v3283 = vunpack.c.0.s8 %v3282
    %v3284 = vlaneseq
    %v3285 = vshrl.u32 %v3284, 7
    %v3286 = vsub.s32 %v3283, %v3285
    %v3287 = vrot.slane %v3265, %v3286
    %v3289 = vunpack.c.l.s4 1966171168
    %v3290 = vunpack.c.0.s8 %v3289
    %v3291 = vlaneseq
    %v3292 = vshrl.u32 %v3291, 7
    %v3293 = vsub.s32 %v3290, %v3292
    %v3294 = vrot.slane %v3266, %v3293
    %v3295 = vcombine.low %v3273, %v3280
    %v3296 = vcombine.low %v3287, %v3294
    %v3298 = vunpack.c.l.s4 1966171168
    %v3299 = vunpack.c.0.s8 %v3298
    %v3300 = vlaneseq
    %v3301 = vshrl.u32 %v3300, 7
    %v3302 = vsub.s32 %v3299, %v3301
    %v3303 = vrot.slane %v3295, %v3302
    %v3305 = vunpack.c.l.s4 1966171168
    %v3306 = vunpack.c.0.s8 %v3305
    %v3307 = vlaneseq
    %v3308 = vshrl.u32 %v3307, 7
    %v3309 = vsub.s32 %v3306, %v3308
    %v3310 = vrot.slane %v3296, %v3309
    %v3311 = vcombine.low %v3303, %v3310
    %v3312 = vcombine.low %v2551, %v2565
    %v3313 = vcombine.low %v2573, %v2575
    %v3314 = vcombine.low %v2558, %v2572
    %v3315 = vcombine.low %v2574, %v2576
    %v3317 = vunpack.c.l.s4 1966171168
    %v3318 = vunpack.c.0.s8 %v3317
    %v3319 = vlaneseq
    %v3320 = vshrl.u32 %v3319, 7
    %v3321 = vsub.s32 %v3318, %v3320
    %v3322 = vrot.slane %v3312, %v3321
    %v3324 = vunpack.c.l.s4 1966171168
    %v3325 = vunpack.c.0.s8 %v3324
    %v3326 = vlaneseq
    %v3327 = vshrl.u32 %v3326, 7
    %v3328 = vsub.s32 %v3325, %v3327
    %v3329 = vrot.slane %v3313, %v3328
    %v3331 = vunpack.c.l.s4 1966171168
    %v3332 = vunpack.c.0.s8 %v3331
    %v3333 = vlaneseq
    %v3334 = vshrl.u32 %v3333, 7
    %v3335 = vsub.s32 %v3332, %v3334
    %v3336 = vrot.slane %v3314, %v3335
    %v3338 = vunpack.c.l.s4 1966171168
    %v3339 = vunpack.c.0.s8 %v3338
    %v3340 = vlaneseq
    %v3341 = vshrl.u32 %v3340, 7
    %v3342 = vsub.s32 %v3339, %v3341
    %v3343 = vrot.slane %v3315, %v3342
    %v3344 = vcombine.low %v3322, %v3329
    %v3345 = vcombine.low %v3336, %v3343
    %v3347 = vunpack.c.l.s4 1966171168
    %v3348 = vunpack.c.0.s8 %v3347
    %v3349 = vlaneseq
    %v3350 = vshrl.u32 %v3349, 7
    %v3351 = vsub.s32 %v3348, %v3350
    %v3352 = vrot.slane %v3344, %v3351
    %v3354 = vunpack.c.l.s4 1966171168
    %v3355 = vunpack.c.0.s8 %v3354
    %v3356 = vlaneseq
    %v3357 = vshrl.u32 %v3356, 7
    %v3358 = vsub.s32 %v3355, %v3357
    %v3359 = vrot.slane %v3345, %v3358
    %v3360 = vcombine.low %v3352, %v3359
    %v3361 = vcombine.low %v2600, %v2614
    %v3362 = vcombine.low %v2622, %v2624
    %v3363 = vcombine.low %v2607, %v2621
    %v3364 = vcombine.low %v2623, %v2625
    %v3366 = vunpack.c.l.s4 1966171168
    %v3367 = vunpack.c.0.s8 %v3366
    %v3368 = vlaneseq
    %v3369 = vshrl.u32 %v3368, 7
    %v3370 = vsub.s32 %v3367, %v3369
    %v3371 = vrot.slane %v3361, %v3370
    %v3373 = vunpack.c.l.s4 1966171168
    %v3374 = vunpack.c.0.s8 %v3373
    %v3375 = vlaneseq
    %v3376 = vshrl.u32 %v3375, 7
    %v3377 = vsub.s32 %v3374, %v3376
    %v3378 = vrot.slane %v3362, %v3377
    %v3380 = vunpack.c.l.s4 1966171168
    %v3381 = vunpack.c.0.s8 %v3380
    %v3382 = vlaneseq
    %v3383 = vshrl.u32 %v3382, 7
    %v3384 = vsub.s32 %v3381, %v3383
    %v3385 = vrot.slane %v3363, %v3384
    %v3387 = vunpack.c.l.s4 1966171168
    %v3388 = vunpack.c.0.s8 %v3387
    %v3389 = vlaneseq
    %v3390 = vshrl.u32 %v3389, 7
    %v3391 = vsub.s32 %v3388, %v3390
    %v3392 = vrot.slane %v3364, %v3391
    %v3393 = vcombine.low %v3371, %v3378
    %v3394 = vcombine.low %v3385, %v3392
    %v3396 = vunpack.c.l.s4 1966171168
    %v3397 = vunpack.c.0.s8 %v3396
    %v3398 = vlaneseq
    %v3399 = vshrl.u32 %v3398, 7
    %v3400 = vsub.s32 %v3397, %v3399
    %v3401 = vrot.slane %v3393, %v3400
    %v3403 = vunpack.c.l.s4 1966171168
    %v3404 = vunpack.c.0.s8 %v3403
    %v3405 = vlaneseq
    %v3406 = vshrl.u32 %v3405, 7
    %v3407 = vsub.s32 %v3404, %v3406
    %v3408 = vrot.slane %v3394, %v3407
    %v3409 = vcombine.low %v3401, %v3408
    %v3410 = vcombine.low %v2649, %v2663
    %v3411 = vcombine.low %v2671, %v2673
    %v3412 = vcombine.low %v2656, %v2670
    %v3413 = vcombine.low %v2672, %v2674
    %v3415 = vunpack.c.l.s4 1966171168
    %v3416 = vunpack.c.0.s8 %v3415
    %v3417 = vlaneseq
    %v3418 = vshrl.u32 %v3417, 7
    %v3419 = vsub.s32 %v3416, %v3418
    %v3420 = vrot.slane %v3410, %v3419
    %v3422 = vunpack.c.l.s4 1966171168
    %v3423 = vunpack.c.0.s8 %v3422
    %v3424 = vlaneseq
    %v3425 = vshrl.u32 %v3424, 7
    %v3426 = vsub.s32 %v3423, %v3425
    %v3427 = vrot.slane %v3411, %v3426
    %v3429 = vunpack.c.l.s4 1966171168
    %v3430 = vunpack.c.0.s8 %v3429
    %v3431 = vlaneseq
    %v3432 = vshrl.u32 %v3431, 7
    %v3433 = vsub.s32 %v3430, %v3432
    %v3434 = vrot.slane %v3412, %v3433
    %v3436 = vunpack.c.l.s4 1966171168
    %v3437 = vunpack.c.0.s8 %v3436
    %v3438 = vlaneseq
    %v3439 = vshrl.u32 %v3438, 7
    %v3440 = vsub.s32 %v3437, %v3439
    %v3441 = vrot.slane %v3413, %v3440
    %v3442 = vcombine.low %v3420, %v3427
    %v3443 = vcombine.low %v3434, %v3441
    %v3445 = vunpack.c.l.s4 1966171168
    %v3446 = vunpack.c.0.s8 %v3445
    %v3447 = vlaneseq
    %v3448 = vshrl.u32 %v3447, 7
    %v3449 = vsub.s32 %v3446, %v3448
    %v3450 = vrot.slane %v3442, %v3449
    %v3452 = vunpack.c.l.s4 1966171168
    %v3453 = vunpack.c.0.s8 %v3452
    %v3454 = vlaneseq
    %v3455 = vshrl.u32 %v3454, 7
    %v3456 = vsub.s32 %v3453, %v3455
    %v3457 = vrot.slane %v3443, %v3456
    %v3458 = vcombine.low %v3450, %v3457
    %v3459 = vcombine.low %v2698, %v2712
    %v3460 = vcombine.low %v2720, %v2722
    %v3461 = vcombine.low %v2705, %v2719
    %v3462 = vcombine.low %v2721, %v2723
    %v3464 = vunpack.c.l.s4 1966171168
    %v3465 = vunpack.c.0.s8 %v3464
    %v3466 = vlaneseq
    %v3467 = vshrl.u32 %v3466, 7
    %v3468 = vsub.s32 %v3465, %v3467
    %v3469 = vrot.slane %v3459, %v3468
    %v3471 = vunpack.c.l.s4 1966171168
    %v3472 = vunpack.c.0.s8 %v3471
    %v3473 = vlaneseq
    %v3474 = vshrl.u32 %v3473, 7
    %v3475 = vsub.s32 %v3472, %v3474
    %v3476 = vrot.slane %v3460, %v3475
    %v3478 = vunpack.c.l.s4 1966171168
    %v3479 = vunpack.c.0.s8 %v3478
    %v3480 = vlaneseq
    %v3481 = vshrl.u32 %v3480, 7
    %v3482 = vsub.s32 %v3479, %v3481
    %v3483 = vrot.slane %v3461, %v3482
    %v3485 = vunpack.c.l.s4 1966171168
    %v3486 = vunpack.c.0.s8 %v3485
    %v3487 = vlaneseq
    %v3488 = vshrl.u32 %v3487, 7
    %v3489 = vsub.s32 %v3486, %v3488
    %v3490 = vrot.slane %v3462, %v3489
    %v3491 = vcombine.low %v3469, %v3476
    %v3492 = vcombine.low %v3483, %v3490
    %v3494 = vunpack.c.l.s4 1966171168
    %v3495 = vunpack.c.0.s8 %v3494
    %v3496 = vlaneseq
    %v3497 = vshrl.u32 %v3496, 7
    %v3498 = vsub.s32 %v3495, %v3497
    %v3499 = vrot.slane %v3491, %v3498
    %v3501 = vunpack.c.l.s4 1966171168
    %v3502 = vunpack.c.0.s8 %v3501
    %v3503 = vlaneseq
    %v3504 = vshrl.u32 %v3503, 7
    %v3505 = vsub.s32 %v3502, %v3504
    %v3506 = vrot.slane %v3492, %v3505
    %v3507 = vcombine.low %v3499, %v3506
    %v3508 = vcombine.low %v2747, %v2761
    %v3509 = vcombine.low %v2769, %v2771
    %v3510 = vcombine.low %v2754, %v2768
    %v3511 = vcombine.low %v2770, %v2772
    %v3513 = vunpack.c.l.s4 1966171168
    %v3514 = vunpack.c.0.s8 %v3513
    %v3515 = vlaneseq
    %v3516 = vshrl.u32 %v3515, 7
    %v3517 = vsub.s32 %v3514, %v3516
    %v3518 = vrot.slane %v3508, %v3517
    %v3520 = vunpack.c.l.s4 1966171168
    %v3521 = vunpack.c.0.s8 %v3520
    %v3522 = vlaneseq
    %v3523 = vshrl.u32 %v3522, 7
    %v3524 = vsub.s32 %v3521, %v3523
    %v3525 = vrot.slane %v3509, %v3524
    %v3527 = vunpack.c.l.s4 1966171168
    %v3528 = vunpack.c.0.s8 %v3527
    %v3529 = vlaneseq
    %v3530 = vshrl.u32 %v3529, 7
    %v3531 = vsub.s32 %v3528, %v3530
    %v3532 = vrot.slane %v3510, %v3531
    %v3534 = vunpack.c.l.s4 1966171168
    %v3535 = vunpack.c.0.s8 %v3534
    %v3536 = vlaneseq
    %v3537 = vshrl.u32 %v3536, 7
    %v3538 = vsub.s32 %v3535, %v3537
    %v3539 = vrot.slane %v3511, %v3538
    %v3540 = vcombine.low %v3518, %v3525
    %v3541 = vcombine.low %v3532, %v3539
    %v3543 = vunpack.c.l.s4 1966171168
    %v3544 = vunpack.c.0.s8 %v3543
    %v3545 = vlaneseq
    %v3546 = vshrl.u32 %v3545, 7
    %v3547 = vsub.s32 %v3544, %v3546
    %v3548 = vrot.slane %v3540, %v3547
    %v3550 = vunpack.c.l.s4 1966171168
    %v3551 = vunpack.c.0.s8 %v3550
    %v3552 = vlaneseq
    %v3553 = vshrl.u32 %v3552, 7
    %v3554 = vsub.s32 %v3551, %v3553
    %v3555 = vrot.slane %v3541, %v3554
    %v3556 = vcombine.low %v3548, %v3555
    %v3557 = vcombine.low %v2796, %v2810
    %v3558 = vcombine.low %v2818, %v2820
    %v3559 = vcombine.low %v2803, %v2817
    %v3560 = vcombine.low %v2819, %v2821
    %v3562 = vunpack.c.l.s4 1966171168
    %v3563 = vunpack.c.0.s8 %v3562
    %v3564 = vlaneseq
    %v3565 = vshrl.u32 %v3564, 7
    %v3566 = vsub.s32 %v3563, %v3565
    %v3567 = vrot.slane %v3557, %v3566
    %v3569 = vunpack.c.l.s4 1966171168
    %v3570 = vunpack.c.0.s8 %v3569
    %v3571 = vlaneseq
    %v3572 = vshrl.u32 %v3571, 7
    %v3573 = vsub.s32 %v3570, %v3572
    %v3574 = vrot.slane %v3558, %v3573
    %v3576 = vunpack.c.l.s4 1966171168
    %v3577 = vunpack.c.0.s8 %v3576
    %v3578 = vlaneseq
    %v3579 = vshrl.u32 %v3578, 7
    %v3580 = vsub.s32 %v3577, %v3579
    %v3581 = vrot.slane %v3559, %v3580
    %v3583 = vunpack.c.l.s4 1966171168
    %v3584 = vunpack.c.0.s8 %v3583
    %v3585 = vlaneseq
    %v3586 = vshrl.u32 %v3585, 7
    %v3587 = vsub.s32 %v3584, %v3586
    %v3588 = vrot.slane %v3560, %v3587
    %v3589 = vcombine.low %v3567, %v3574
    %v3590 = vcombine.low %v3581, %v3588
    %v3592 = vunpack.c.l.s4 1966171168
    %v3593 = vunpack.c.0.s8 %v3592
    %v3594 = vlaneseq
    %v3595 = vshrl.u32 %v3594, 7
    %v3596 = vsub.s32 %v3593, %v3595
    %v3597 = vrot.slane %v3589, %v3596
    %v3599 = vunpack.c.l.s4 1966171168
    %v3600 = vunpack.c.0.s8 %v3599
    %v3601 = vlaneseq
    %v3602 = vshrl.u32 %v3601, 7
    %v3603 = vsub.s32 %v3600, %v3602
    %v3604 = vrot.slane %v3590, %v3603
    %v3605 = vcombine.low %v3597, %v3604
    %v3606 = vcombine.low %v2845, %v2859
    %v3607 = vcombine.low %v2867, %v2869
    %v3608 = vcombine.low %v2852, %v2866
    %v3609 = vcombine.low %v2868, %v2870
    %v3611 = vunpack.c.l.s4 1966171168
    %v3612 = vunpack.c.0.s8 %v3611
    %v3613 = vlaneseq
    %v3614 = vshrl.u32 %v3613, 7
    %v3615 = vsub.s32 %v3612, %v3614
    %v3616 = vrot.slane %v3606, %v3615
    %v3618 = vunpack.c.l.s4 1966171168
    %v3619 = vunpack.c.0.s8 %v3618
    %v3620 = vlaneseq
    %v3621 = vshrl.u32 %v3620, 7
    %v3622 = vsub.s32 %v3619, %v3621
    %v3623 = vrot.slane %v3607, %v3622
    %v3625 = vunpack.c.l.s4 1966171168
    %v3626 = vunpack.c.0.s8 %v3625
    %v3627 = vlaneseq
    %v3628 = vshrl.u32 %v3627, 7
    %v3629 = vsub.s32 %v3626, %v3628
    %v3630 = vrot.slane %v3608, %v3629
    %v3632 = vunpack.c.l.s4 1966171168
    %v3633 = vunpack.c.0.s8 %v3632
    %v3634 = vlaneseq
    %v3635 = vshrl.u32 %v3634, 7
    %v3636 = vsub.s32 %v3633, %v3635
    %v3637 = vrot.slane %v3609, %v3636
    %v3638 = vcombine.low %v3616, %v3623
    %v3639 = vcombine.low %v3630, %v3637
    %v3641 = vunpack.c.l.s4 1966171168
    %v3642 = vunpack.c.0.s8 %v3641
    %v3643 = vlaneseq
    %v3644 = vshrl.u32 %v3643, 7
    %v3645 = vsub.s32 %v3642, %v3644
    %v3646 = vrot.slane %v3638, %v3645
    %v3648 = vunpack.c.l.s4 1966171168
    %v3649 = vunpack.c.0.s8 %v3648
    %v3650 = vlaneseq
    %v3651 = vshrl.u32 %v3650, 7
    %v3652 = vsub.s32 %v3649, %v3651
    %v3653 = vrot.slane %v3639, %v3652
    %v3654 = vcombine.low %v3646, %v3653
    %v3655 = vcombine.low %v2894, %v2908
    %v3656 = vcombine.low %v2916, %v2918
    %v3657 = vcombine.low %v2901, %v2915
    %v3658 = vcombine.low %v2917, %v2919
    %v3660 = vunpack.c.l.s4 1966171168
    %v3661 = vunpack.c.0.s8 %v3660
    %v3662 = vlaneseq
    %v3663 = vshrl.u32 %v3662, 7
    %v3664 = vsub.s32 %v3661, %v3663
    %v3665 = vrot.slane %v3655, %v3664
    %v3667 = vunpack.c.l.s4 1966171168
    %v3668 = vunpack.c.0.s8 %v3667
    %v3669 = vlaneseq
    %v3670 = vshrl.u32 %v3669, 7
    %v3671 = vsub.s32 %v3668, %v3670
    %v3672 = vrot.slane %v3656, %v3671
    %v3674 = vunpack.c.l.s4 1966171168
    %v3675 = vunpack.c.0.s8 %v3674
    %v3676 = vlaneseq
    %v3677 = vshrl.u32 %v3676, 7
    %v3678 = vsub.s32 %v3675, %v3677
    %v3679 = vrot.slane %v3657, %v3678
    %v3681 = vunpack.c.l.s4 1966171168
    %v3682 = vunpack.c.0.s8 %v3681
    %v3683 = vlaneseq
    %v3684 = vshrl.u32 %v3683, 7
    %v3685 = vsub.s32 %v3682, %v3684
    %v3686 = vrot.slane %v3658, %v3685
    %v3687 = vcombine.low %v3665, %v3672
    %v3688 = vcombine.low %v3679, %v3686
    %v3690 = vunpack.c.l.s4 1966171168
    %v3691 = vunpack.c.0.s8 %v3690
    %v3692 = vlaneseq
    %v3693 = vshrl.u32 %v3692, 7
    %v3694 = vsub.s32 %v3691, %v3693
    %v3695 = vrot.slane %v3687, %v3694
    %v3697 = vunpack.c.l.s4 1966171168
    %v3698 = vunpack.c.0.s8 %v3697
    %v3699 = vlaneseq
    %v3700 = vshrl.u32 %v3699, 7
    %v3701 = vsub.s32 %v3698, %v3700
    %v3702 = vrot.slane %v3688, %v3701
    %v3703 = vcombine.low %v3695, %v3702
    %v3704 = vcombine.low %v2943, %v2957
    %v3705 = vcombine.low %v2965, %v2967
    %v3706 = vcombine.low %v2950, %v2964
    %v3707 = vcombine.low %v2966, %v2968
    %v3709 = vunpack.c.l.s4 1966171168
    %v3710 = vunpack.c.0.s8 %v3709
    %v3711 = vlaneseq
    %v3712 = vshrl.u32 %v3711, 7
    %v3713 = vsub.s32 %v3710, %v3712
    %v3714 = vrot.slane %v3704, %v3713
    %v3716 = vunpack.c.l.s4 1966171168
    %v3717 = vunpack.c.0.s8 %v3716
    %v3718 = vlaneseq
    %v3719 = vshrl.u32 %v3718, 7
    %v3720 = vsub.s32 %v3717, %v3719
    %v3721 = vrot.slane %v3705, %v3720
    %v3723 = vunpack.c.l.s4 1966171168
    %v3724 = vunpack.c.0.s8 %v3723
    %v3725 = vlaneseq
    %v3726 = vshrl.u32 %v3725, 7
    %v3727 = vsub.s32 %v3724, %v3726
    %v3728 = vrot.slane %v3706, %v3727
    %v3730 = vunpack.c.l.s4 1966171168
    %v3731 = vunpack.c.0.s8 %v3730
    %v3732 = vlaneseq
    %v3733 = vshrl.u32 %v3732, 7
    %v3734 = vsub.s32 %v3731, %v3733
    %v3735 = vrot.slane %v3707, %v3734
    %v3736 = vcombine.low %v3714, %v3721
    %v3737 = vcombine.low %v3728, %v3735
    %v3739 = vunpack.c.l.s4 1966171168
    %v3740 = vunpack.c.0.s8 %v3739
    %v3741 = vlaneseq
    %v3742 = vshrl.u32 %v3741, 7
    %v3743 = vsub.s32 %v3740, %v3742
    %v3744 = vrot.slane %v3736, %v3743
    %v3746 = vunpack.c.l.s4 1966171168
    %v3747 = vunpack.c.0.s8 %v3746
    %v3748 = vlaneseq
    %v3749 = vshrl.u32 %v3748, 7
    %v3750 = vsub.s32 %v3747, %v3749
    %v3751 = vrot.slane %v3737, %v3750
    %v3752 = vcombine.low %v3744, %v3751
    %3753 = vset.pattern.permute.xlu0 0
    %3754 = vperm.xlu0 %3753, %v3017
    %v3755 = vpop.permute.xlu0 %3754
    %3756 = vset.pattern.permute.xlu0 0
    %3757 = vperm.xlu0 %3756, %v3066
    %v3758 = vpop.permute.xlu0 %3757
    %3759 = vset.pattern.permute.xlu0 0
    %3760 = vperm.xlu0 %3759, %v3115
    %v3761 = vpop.permute.xlu0 %3760
    %3762 = vset.pattern.permute.xlu0 0
    %3763 = vperm.xlu0 %3762, %v3164
    %v3764 = vpop.permute.xlu0 %3763
    %3765 = vset.pattern.permute.xlu0 0
    %3766 = vperm.xlu0 %3765, %v3213
    %v3767 = vpop.permute.xlu0 %3766
    %3768 = vset.pattern.permute.xlu0 0
    %3769 = vperm.xlu0 %3768, %v3262
    %v3770 = vpop.permute.xlu0 %3769
    %3771 = vset.pattern.permute.xlu0 0
    %3772 = vperm.xlu0 %3771, %v3311
    %v3773 = vpop.permute.xlu0 %3772
    %3774 = vset.pattern.permute.xlu0 0
    %3775 = vperm.xlu0 %3774, %v3360
    %v3776 = vpop.permute.xlu0 %3775
    %3777 = vset.pattern.permute.xlu0 0
    %3778 = vperm.xlu0 %3777, %v3409
    %v3779 = vpop.permute.xlu0 %3778
    %3780 = vset.pattern.permute.xlu0 0
    %3781 = vperm.xlu0 %3780, %v3458
    %v3782 = vpop.permute.xlu0 %3781
    %3783 = vset.pattern.permute.xlu0 0
    %3784 = vperm.xlu0 %3783, %v3507
    %v3785 = vpop.permute.xlu0 %3784
    %3786 = vset.pattern.permute.xlu0 0
    %3787 = vperm.xlu0 %3786, %v3556
    %v3788 = vpop.permute.xlu0 %3787
    %3789 = vset.pattern.permute.xlu0 0
    %3790 = vperm.xlu0 %3789, %v3605
    %v3791 = vpop.permute.xlu0 %3790
    %3792 = vset.pattern.permute.xlu0 0
    %3793 = vperm.xlu0 %3792, %v3654
    %v3794 = vpop.permute.xlu0 %3793
    %3795 = vset.pattern.permute.xlu0 0
    %3796 = vperm.xlu0 %3795, %v3703
    %v3797 = vpop.permute.xlu0 %3796
    %3798 = vset.pattern.permute.xlu0 0
    %3799 = vperm.xlu0 %3798, %v3752
    %v3800 = vpop.permute.xlu0 %3799
    %v3801 = vlaneseq
    %v3802 = vshrl.u32 %v3801, 7
    %v3803 = vsub.s32 %v2042, %v3802
    %v3804 = vrot.slane %v3755, %v3803
    %v3805 = vlaneseq
    %v3806 = vshrl.u32 %v3805, 7
    %v3807 = vsub.s32 %v2047, %v3806
    %v3808 = vrot.slane %v3758, %v3807
    %v3809 = vsel %vm2052, %v3808, %v3804
    %v3810 = vlaneseq
    %v3811 = vshrl.u32 %v3810, 7
    %v3812 = vsub.s32 %v2054, %v3811
    %v3813 = vrot.slane %v3761, %v3812
    %v3814 = vsel %vm2059, %v3813, %v3809
    %v3815 = vlaneseq
    %v3816 = vshrl.u32 %v3815, 7
    %v3817 = vsub.s32 %v2061, %v3816
    %v3818 = vrot.slane %v3764, %v3817
    %v3819 = vsel %vm2066, %v3818, %v3814
    %v3820 = vlaneseq
    %v3821 = vshrl.u32 %v3820, 7
    %v3822 = vsub.s32 %v2068, %v3821
    %v3823 = vrot.slane %v3767, %v3822
    %v3824 = vsel %vm2073, %v3823, %v3819
    %v3825 = vlaneseq
    %v3826 = vshrl.u32 %v3825, 7
    %v3827 = vsub.s32 %v2075, %v3826
    %v3828 = vrot.slane %v3770, %v3827
    %v3829 = vsel %vm2080, %v3828, %v3824
    %v3830 = vlaneseq
    %v3831 = vshrl.u32 %v3830, 7
    %v3832 = vsub.s32 %v2082, %v3831
    %v3833 = vrot.slane %v3773, %v3832
    %v3834 = vsel %vm2087, %v3833, %v3829
    %v3835 = vlaneseq
    %v3836 = vshrl.u32 %v3835, 7
    %v3837 = vsub.s32 %v2089, %v3836
    %v3838 = vrot.slane %v3776, %v3837
    %v3839 = vsel %vm2094, %v3838, %v3834
    %v3840 = vlaneseq
    %v3841 = vshrl.u32 %v3840, 7
    %v3842 = vsub.s32 %v2096, %v3841
    %v3843 = vrot.slane %v3779, %v3842
    %v3844 = vsel %vm2101, %v3843, %v3839
    %v3845 = vlaneseq
    %v3846 = vshrl.u32 %v3845, 7
    %v3847 = vsub.s32 %v2103, %v3846
    %v3848 = vrot.slane %v3782, %v3847
    %v3849 = vsel %vm2108, %v3848, %v3844
    %v3850 = vlaneseq
    %v3851 = vshrl.u32 %v3850, 7
    %v3852 = vsub.s32 %v2110, %v3851
    %v3853 = vrot.slane %v3785, %v3852
    %v3854 = vsel %vm2115, %v3853, %v3849
    %v3855 = vlaneseq
    %v3856 = vshrl.u32 %v3855, 7
    %v3857 = vsub.s32 %v2117, %v3856
    %v3858 = vrot.slane %v3788, %v3857
    %v3859 = vsel %vm2122, %v3858, %v3854
    %v3860 = vlaneseq
    %v3861 = vshrl.u32 %v3860, 7
    %v3862 = vsub.s32 %v2124, %v3861
    %v3863 = vrot.slane %v3791, %v3862
    %v3864 = vsel %vm2129, %v3863, %v3859
    %v3865 = vlaneseq
    %v3866 = vshrl.u32 %v3865, 7
    %v3867 = vsub.s32 %v2131, %v3866
    %v3868 = vrot.slane %v3794, %v3867
    %v3869 = vsel %vm2136, %v3868, %v3864
    %v3870 = vlaneseq
    %v3871 = vshrl.u32 %v3870, 7
    %v3872 = vsub.s32 %v2138, %v3871
    %v3873 = vrot.slane %v3797, %v3872
    %v3874 = vsel %vm2143, %v3873, %v3869
    %v3875 = vlaneseq
    %v3876 = vshrl.u32 %v3875, 7
    %v3877 = vsub.s32 %v2145, %v3876
    %v3878 = vrot.slane %v3800, %v3877
    %v3879 = vsel %vm2150, %v3878, %v3874
    %v3881 = vunpack.c.l.s4 1966171168
    %v3882 = vunpack.c.0.s8 %v3881
    %v3883 = vlaneseq
    %v3884 = vshrl.u32 %v3883, 7
    %v3885 = vsub.s32 %v3882, %v3884
    %v3886 = vrot.slane %v3879, %v3885
    %v3888 = vunpack.c.l.s4 1966171168
    %v3889 = vunpack.c.0.s8 %v3888
    %v3890 = vlaneseq
    %v3891 = vshrl.u32 %v3890, 7
    %v3892 = vsub.s32 %v3889, %v3891
    %v3893 = vrot.slane %v3886, %v3892
    %v3895 = vadd.f32 %v2168, %v3893
    %v3896 = vmin.f32 %v3895, 100.0
    %p3897 = scmp.eq.s32.totalorder 0, 0
    // Predicated region
    $region18: #{tpu_custom_call.1} parent=1 // pred_check
      %p3898 = pneg %p3897
    $region19: #{tpu_custom_call.1} parent=1 // pred_check_branch
      %3900 = sbr.rel (%p3898) target = $region21
    $region20: #{tpu_custom_call.1} parent=1 // pred_region
      %v3901 = vlaneseq
      %v3902 = vshrl.u32 %v3901, 7
      %s3903 = smul.u32 0, 128
      %v3904 = vmul.u32 %v3902, 128
      %v3905 = vstv %s3903
      %v3906 = vadd.s32 %v3905, %v3904
      %v3907 = vadd.s32 %v3906, %v2042
      %vm3908 = vcmp.lt.s32.totalorder %v3907, 8
      %v3909 = vsel %vm3908, %v3896, 0.0
      %v3910 = vadd.f32 %v3909, 0.0
      %3911 = vst [vmem:[#allocation3] sm:$0x1] %v3910
    $region21: #{tpu_custom_call.1} parent=1 // pred_fallthru
      _
    %p3912 = scmp.ne.s32.totalorder 0, 0
    // Predicated region
    $region22: #{tpu_custom_call.1} parent=1 // pred_check
      %p3913 = pneg %p3912
    $region23: #{tpu_custom_call.1} parent=1 // pred_check_branch
      %3915 = sbr.rel (%p3913) target = $region25
    $region24: #{tpu_custom_call.1} parent=1 // pred_region
      %v3916 = vadd.f32 %v3896, 0.0
      %3917 = vst [vmem:[#allocation3] sm:$0x1] %v3916
    $region25: #{tpu_custom_call.1} parent=1 // pred_fallthru
      _
    // Predicated region
    $region26: #{tpu_custom_call.1} parent=1 // pred_check
      _
    $region27: #{tpu_custom_call.1} parent=1 // pred_check_branch
      %3919 = sbr.rel (0) target = $region29
    $region28: #{tpu_custom_call.1} parent=1 // pred_region
      %s3921 = ssub.s32 16, 16
      %3922 = vsyncadd [#allocation4], %s3921
      %s3924 = sshll.u32 [#allocation3], 4
      %s3925 = int_to_ptr.vmem [resolvable:$true] %s3924
      %3927 = dma.vmem_to_hbm [thread:$0]  %s3925, 16, %s4, [#allocation4]
    $region29: #{tpu_custom_call.1} parent=1 // pred_fallthru
      _
    // Predicated region
    $region30: #{tpu_custom_call.1} parent=1 // pred_check
      _
    $region31: #{tpu_custom_call.1} parent=1 // pred_check_branch
      %3929 = sbr.rel (0) target = $region33
    $region32: #{tpu_custom_call.1} parent=1 // pred_region
      %3930 = dma.done [#allocation4], 16
    $region33: #{tpu_custom_call.1} parent=1 // pred_fallthru
      _
    %3931 = vsyncpa [#allocation4], 1

</llo_original>
